<compile_context>
chip_gen: v7x
topology: tpu7x:2x2x1
jax: 0.10.0
libtpu: 0.0.40
codegen_flags: <defaults>
</compile_context>

<pallas_src>
import math

import jax
import jax.numpy as jnp
from jax.experimental import pallas as pl
from jax.experimental.pallas import tpu as pltpu

# ---------------- model hyper-parameters (small, CLIP-like) -----------------
B = 2            # batch (number of prompts)
S = 8            # context length
D = 32           # transformer width
H = 4            # attention heads
HD = D // H      # head dim
LAYERS = 2       # transformer depth
P = 32           # text_projection output dim
EPS = 1e-5
DTYPE = jnp.float32   # clip_model.dtype (synthetic: float32)

BS = B * S       # folded batch*seq rows


# ============================== Pallas kernel ===============================

def _ln_rows(x, g, b):
    """Single-pass LayerNorm over the last dim of a (rows, D) f32 tile."""
    n = x.shape[-1]
    s1 = jnp.sum(x, axis=-1, keepdims=True)
    s2 = jnp.sum(x * x, axis=-1, keepdims=True)
    mu = s1 * (1.0 / n)
    var = jnp.maximum(s2 * (1.0 / n) - mu * mu, 0.0)
    return (x - mu) * jax.lax.rsqrt(var + EPS) * g + b


def text_encoder_kernel(x_ref, pos_ref, mask_ref, onehot_ref, hdsel_ref,
                        ln1g_ref, ln1b_ref, wqkv_ref, bqkv_ref,
                        wout_ref, bout_ref, ln2g_ref, ln2b_ref,
                        wfc_ref, bfc_ref, wpr_ref, bpr_ref,
                        lnfg_ref, lnfb_ref, wproj_ref,
                        o_ref):
    """Entire TextEncoder forward, whole batch folded into (B*S, D) rows.

    Inputs:
      x        (B*S, D)          prompts flattened batch-major
      pos      (B*S, D)          positional embedding tiled over the batch
      mask     (B*S, B*S)        block-diagonal causal mask (0 / -1e30)
      onehot   (B, B*S)          EOT row selector
      hdsel    (H*BS, H)         block-diagonal ones for per-head denominators
      stacked weights, matmul-ready:
        wqkv (L, D, 3D), wout (L, D, D), wfc (L, D, 4D), wpr (L, 4D, D);
        biases / LN params (L, 1, n); ln_final (1, D); proj (D, P).
    """
    x = x_ref[...].astype(jnp.float32) + pos_ref[...]          # (BS, D)
    mask = mask_ref[...]                                        # (BS, BS)
    hdsel = hdsel_ref[...]                                      # (H*BS, H)
    scale = 1.0 / math.sqrt(HD)

    for l in range(LAYERS):                                     # static unroll
        # ---- ln_1 ----
        xn = _ln_rows(x, ln1g_ref[l], ln1b_ref[l])

        # ---- multi-head self-attention (block-diag causal over prompts) ----
        qkv = jnp.dot(xn, wqkv_ref[l],
                      preferred_element_type=jnp.float32) + bqkv_ref[l]
        q = qkv[:, 0 * D:1 * D] * scale
        k = qkv[:, 1 * D:2 * D]
        v = qkv[:, 2 * D:3 * D]

        # per-head scores (q . k^T without materializing k^T), then batch the
        # softmax of all heads in one (BS, H*BS) tile
        scores = []
        for h in range(H):
            qh = q[:, h * HD:(h + 1) * HD]
            kh = k[:, h * HD:(h + 1) * HD]
            scores.append(jax.lax.dot_general(
                qh, kh, dimension_numbers=(((1,), (1,)), ((), ())),
                preferred_element_type=jnp.float32) + mask)
        s_all = jnp.concatenate(scores, axis=-1)                # (BS, H*BS)
        # one shared per-row max is valid for every head's softmax
        s_all = s_all - jnp.max(s_all, axis=-1, keepdims=True)
        p_all = jnp.exp(s_all)                                  # one EUP launch
        denom = jnp.dot(p_all, hdsel,
                        preferred_element_type=jnp.float32)     # (BS, H)
        dinv = pl.reciprocal(denom, approx=True)

        # per-head PV and per-head out-projection accumulation (no concat)
        wout_l = wout_ref[l]                                    # (D, D)
        acc = None
        for h in range(H):
            ph = p_all[:, h * BS:(h + 1) * BS]                  # (BS, BS)
            vh = v[:, h * HD:(h + 1) * HD]                      # (BS, HD)
            oh = jnp.dot(ph, vh,
                         preferred_element_type=jnp.float32) * dinv[:, h:h + 1]
            term = jnp.dot(oh, wout_l[h * HD:(h + 1) * HD, :],
                           preferred_element_type=jnp.float32)  # (BS, D)
            acc = term if acc is None else acc + term
        x = x + acc + bout_ref[l]

        # ---- ln_2 + MLP (Linear -> QuickGELU -> Linear) ----
        xn2 = _ln_rows(x, ln2g_ref[l], ln2b_ref[l])
        h1 = jnp.dot(xn2, wfc_ref[l],
                     preferred_element_type=jnp.float32) + bfc_ref[l]
        h1 = h1 * jax.nn.sigmoid(1.702 * h1)                    # QuickGELU
        x = x + jnp.dot(h1, wpr_ref[l],
                        preferred_element_type=jnp.float32) + bpr_ref[l]

    # ---- ln_final + EOT row gather (one-hot matmul) + text_projection ----
    xn = _ln_rows(x, lnfg_ref[...], lnfb_ref[...])
    rows = jnp.dot(onehot_ref[...], xn,
                   preferred_element_type=jnp.float32)          # (B, D)
    out = jnp.dot(rows, wproj_ref[...],
                  preferred_element_type=jnp.float32)           # (B, P)
    o_ref[...] = out.astype(o_ref.dtype)


# ============================ pallas_call wrapper ============================

def text_encoder_forward(prompts, tokenized_prompts, params):
    # fold batch into rows
    x2d = prompts.astype(DTYPE).reshape(BS, D)
    pos2d = jnp.tile(params["pos"], (B, 1))                     # (BS, D)

    # block-diagonal causal mask: within a prompt, col <= row -> 0, else -1e30
    r = jnp.arange(BS)
    allowed = ((r[:, None] // S) == (r[None, :] // S)) & (r[None, :] <= r[:, None])
    mask = jnp.where(allowed, 0.0, -1e30).astype(DTYPE)         # (BS, BS)

    # EOT row selector (argmax / one_hot are XLA glue outside the kernel)
    eot = jnp.argmax(tokenized_prompts, axis=-1)
    onehot = jax.nn.one_hot(jnp.arange(B) * S + eot, BS, dtype=DTYPE)  # (B, BS)

    # block-diagonal ones: column h sums the h-th head's BS score columns
    hdsel = (jnp.arange(H * BS)[:, None] // BS
             == jnp.arange(H)[None, :]).astype(DTYPE)           # (H*BS, H)

    inputs = (x2d, pos2d, mask, onehot, hdsel,
              params["ln1_g"], params["ln1_b"],
              params["w_qkv"], params["b_qkv"],
              params["w_out"], params["b_out"],
              params["ln2_g"], params["ln2_b"],
              params["w_fc"], params["b_fc"],
              params["w_pr"], params["b_pr"],
              params["lnf_g"], params["lnf_b"],
              params["text_proj"])

    out = pl.pallas_call(
        text_encoder_kernel,
        out_shape=jax.ShapeDtypeStruct((B, P), DTYPE),
        in_specs=[pl.BlockSpec(memory_space=pltpu.MemorySpace.VMEM)
                  for _ in inputs],
        out_specs=pl.BlockSpec(memory_space=pltpu.MemorySpace.VMEM),
    )(*inputs)
    return out                                                   # (B, P)


# ============================= parameter init ===============================
# Weights are stored stacked over layers and matmul-ready (in, out) so the
# forward path never transposes/reshapes them.

def init_params(key):
    keys = jax.random.split(key, 2 + LAYERS)
    pos = 0.01 * jax.random.normal(keys[0], (S, D), DTYPE)
    text_proj = 0.02 * jax.random.normal(keys[1], (D, P), DTYPE)
    lnf_g = jnp.ones((1, D), DTYPE)
    lnf_b = jnp.zeros((1, D), DTYPE)
    layers = []
    for l in range(LAYERS):
        ks = jax.random.split(keys[2 + l], 10)
        layers.append(dict(
            ln1_g=1.0 + 0.1 * jax.random.normal(ks[0], (1, D), DTYPE),
            ln1_b=0.05 * jax.random.normal(ks[1], (1, D), DTYPE),
            w_qkv=0.02 * jax.random.normal(ks[2], (D, 3 * D), DTYPE),
            b_qkv=0.02 * jax.random.normal(ks[3], (1, 3 * D), DTYPE),
            w_out=0.02 * jax.random.normal(ks[4], (D, D), DTYPE),
            b_out=jnp.zeros((1, D), DTYPE),
            ln2_g=1.0 + 0.1 * jax.random.normal(ks[5], (1, D), DTYPE),
            ln2_b=0.05 * jax.random.normal(ks[6], (1, D), DTYPE),
            w_fc=0.02 * jax.random.normal(ks[7], (D, 4 * D), DTYPE),
            b_fc=0.02 * jax.random.normal(ks[8], (1, 4 * D), DTYPE),
            w_pr=0.02 * jax.random.normal(ks[9], (4 * D, D), DTYPE),
            b_pr=jnp.zeros((1, D), DTYPE),
        ))
    stacked = {k: jnp.stack([layers[l][k] for l in range(LAYERS)], axis=0)
               for k in layers[0]}
    return dict(pos=pos, text_proj=text_proj, lnf_g=lnf_g, lnf_b=lnf_b,
                **stacked)


# ======================== pure-JAX reference (sanity) ========================

def _ln(x, g, b):
    mu = jnp.mean(x, axis=-1, keepdims=True)
    var = jnp.mean(jnp.square(x - mu), axis=-1, keepdims=True)
    return (x - mu) * jax.lax.rsqrt(var + EPS) * g + b


def reference_forward(prompts, tokenized_prompts, params):
    mask = jnp.where(jnp.tril(jnp.ones((S, S), dtype=bool)), 0.0, -1e30)
    x = prompts + params["pos"]
    for l in range(LAYERS):
        xn = _ln(x, params["ln1_g"][l], params["ln1_b"][l])
        qkv = xn @ params["w_qkv"][l] + params["b_qkv"][l]
        q, k, v = jnp.split(qkv, 3, axis=-1)
        sh = lambda t: t.reshape(B, S, H, HD).transpose(0, 2, 1, 3)
        qh, kh, vh = sh(q), sh(k), sh(v)
        s = jnp.einsum("bhqd,bhkd->bhqk", qh, kh) / math.sqrt(HD) + mask
        a = jax.nn.softmax(s, axis=-1)
        o = jnp.einsum("bhqk,bhkd->bhqd", a, vh
                       ).transpose(0, 2, 1, 3).reshape(B, S, D)
        x = x + o @ params["w_out"][l] + params["b_out"][l]
        xn2 = _ln(x, params["ln2_g"][l], params["ln2_b"][l])
        h1 = xn2 @ params["w_fc"][l] + params["b_fc"][l]
        h1 = h1 * jax.nn.sigmoid(1.702 * h1)
        x = x + h1 @ params["w_pr"][l] + params["b_pr"][l]
    xn = _ln(x, params["lnf_g"], params["lnf_b"])
    eot = jnp.argmax(tokenized_prompts, axis=-1)
    return xn[jnp.arange(B), eot] @ params["text_proj"]


# =================================== main ====================================

if __name__ == "__main__":
    key = jax.random.PRNGKey(0)
    k_param, k_prompt, k_tok = jax.random.split(key, 3)

    params = init_params(k_param)

    # prompts: learned context embeddings, shape (B, S, D)
    prompts = 0.05 * jax.random.normal(k_prompt, (B, S, D), DTYPE)
    # tokenized_prompts: int tokens; a large "EOT" id marks the argmax position
    tokenized_prompts = jax.random.randint(k_tok, (B, S), 1, 100, dtype=jnp.int32)
    eot_pos = jnp.array([5, 6], dtype=jnp.int32)
    tokenized_prompts = tokenized_prompts.at[jnp.arange(B), eot_pos].set(999)

    fwd = jax.jit(text_encoder_forward)
    out = fwd(prompts, tokenized_prompts, params)
    out = jax.block_until_ready(out)

    ref = reference_forward(prompts, tokenized_prompts, params)
    assert out.shape == (B, P), out.shape
    assert jnp.allclose(out, ref, atol=1e-3, rtol=1e-3), (
        float(jnp.max(jnp.abs(out - ref))))

    print("KERNEL_OK")
</pallas_src>

<mosaic_0001>
module attributes {stable_mosaic.version = 11 : i64} {
  func.func @text_encoder_kernel(%arg0: memref<16x32xf32, #tpu.memory_space<vmem>>, %arg1: memref<16x32xf32, #tpu.memory_space<vmem>>, %arg2: memref<16x16xf32, #tpu.memory_space<vmem>>, %arg3: memref<2x16xf32, #tpu.memory_space<vmem>>, %arg4: memref<64x4xf32, #tpu.memory_space<vmem>>, %arg5: memref<2x1x32xf32, #tpu.memory_space<vmem>>, %arg6: memref<2x1x32xf32, #tpu.memory_space<vmem>>, %arg7: memref<2x32x96xf32, #tpu.memory_space<vmem>>, %arg8: memref<2x1x96xf32, #tpu.memory_space<vmem>>, %arg9: memref<2x32x32xf32, #tpu.memory_space<vmem>>, %arg10: memref<2x1x32xf32, #tpu.memory_space<vmem>>, %arg11: memref<2x1x32xf32, #tpu.memory_space<vmem>>, %arg12: memref<2x1x32xf32, #tpu.memory_space<vmem>>, %arg13: memref<2x32x128xf32, #tpu.memory_space<vmem>>, %arg14: memref<2x1x128xf32, #tpu.memory_space<vmem>>, %arg15: memref<2x128x32xf32, #tpu.memory_space<vmem>>, %arg16: memref<2x1x32xf32, #tpu.memory_space<vmem>>, %arg17: memref<1x32xf32, #tpu.memory_space<vmem>>, %arg18: memref<1x32xf32, #tpu.memory_space<vmem>>, %arg19: memref<32x32xf32, #tpu.memory_space<vmem>>, %arg20: memref<2x32xf32, #tpu.memory_space<vmem>>) attributes {dimension_semantics = [], scalar_prefetch = 0 : i64, scratch_operands = 0 : i64, tpu.core_type = #tpu.core_type<tc>} {
    %c0 = arith.constant 0 : index
    %c0_0 = arith.constant 0 : index
    %0 = vector.load %arg0[%c0, %c0_0] : memref<16x32xf32, #tpu.memory_space<vmem>>, vector<16x32xf32>
    %c0_1 = arith.constant 0 : index
    %c0_2 = arith.constant 0 : index
    %1 = vector.load %arg1[%c0_1, %c0_2] : memref<16x32xf32, #tpu.memory_space<vmem>>, vector<16x32xf32>
    %2 = arith.addf %0, %1 : vector<16x32xf32>
    %c0_3 = arith.constant 0 : index
    %c0_4 = arith.constant 0 : index
    %3 = vector.load %arg2[%c0_3, %c0_4] : memref<16x16xf32, #tpu.memory_space<vmem>>, vector<16x16xf32>
    %c0_5 = arith.constant 0 : index
    %c0_6 = arith.constant 0 : index
    %4 = vector.load %arg4[%c0_5, %c0_6] : memref<64x4xf32, #tpu.memory_space<vmem>>, vector<64x4xf32>
    %c0_7 = arith.constant 0 : index
    %c0_8 = arith.constant 0 : index
    %c0_9 = arith.constant 0 : index
    %5 = vector.load %arg5[%c0_7, %c0_8, %c0_9] : memref<2x1x32xf32, #tpu.memory_space<vmem>>, vector<1x1x32xf32>
    %6 = vector.shape_cast %5 : vector<1x1x32xf32> to vector<1x32xf32>
    %c0_10 = arith.constant 0 : index
    %c0_11 = arith.constant 0 : index
    %c0_12 = arith.constant 0 : index
    %7 = vector.load %arg6[%c0_10, %c0_11, %c0_12] : memref<2x1x32xf32, #tpu.memory_space<vmem>>, vector<1x1x32xf32>
    %8 = vector.shape_cast %7 : vector<1x1x32xf32> to vector<1x32xf32>
    %cst = arith.constant dense<0.000000e+00> : vector<16xf32>
    %9 = vector.multi_reduction <add>, %2, %cst [1] : vector<16x32xf32> to vector<16xf32>
    %10 = vector.shape_cast %9 : vector<16xf32> to vector<16x1xf32>
    %11 = arith.mulf %2, %2 : vector<16x32xf32>
    %cst_13 = arith.constant dense<0.000000e+00> : vector<16xf32>
    %12 = vector.multi_reduction <add>, %11, %cst_13 [1] : vector<16x32xf32> to vector<16xf32>
    %13 = vector.shape_cast %12 : vector<16xf32> to vector<16x1xf32>
    %cst_14 = arith.constant 3.125000e-02 : f32
    %14 = vector.broadcast %cst_14 : f32 to vector<16x1xf32>
    %15 = arith.mulf %10, %14 : vector<16x1xf32>
    %cst_15 = arith.constant 3.125000e-02 : f32
    %16 = vector.broadcast %cst_15 : f32 to vector<16x1xf32>
    %17 = arith.mulf %13, %16 : vector<16x1xf32>
    %18 = arith.mulf %15, %15 : vector<16x1xf32>
    %19 = arith.subf %17, %18 : vector<16x1xf32>
    %cst_16 = arith.constant 0.000000e+00 : f32
    %20 = vector.broadcast %cst_16 : f32 to vector<16x1xf32>
    %21 = arith.maximumf %19, %20 : vector<16x1xf32>
    %22 = vector.broadcast %15 : vector<16x1xf32> to vector<16x32xf32>
    %23 = arith.subf %2, %22 : vector<16x32xf32>
    %cst_17 = arith.constant 9.99999974E-6 : f32
    %24 = vector.broadcast %cst_17 : f32 to vector<16x1xf32>
    %25 = arith.addf %21, %24 : vector<16x1xf32>
    %26 = math.rsqrt %25 : vector<16x1xf32>
    %27 = vector.broadcast %26 : vector<16x1xf32> to vector<16x32xf32>
    %28 = arith.mulf %23, %27 : vector<16x32xf32>
    %29 = vector.broadcast %6 : vector<1x32xf32> to vector<16x32xf32>
    %30 = arith.mulf %28, %29 : vector<16x32xf32>
    %31 = vector.broadcast %8 : vector<1x32xf32> to vector<16x32xf32>
    %32 = arith.addf %30, %31 : vector<16x32xf32>
    %c0_18 = arith.constant 0 : index
    %c0_19 = arith.constant 0 : index
    %c0_20 = arith.constant 0 : index
    %33 = vector.load %arg7[%c0_18, %c0_19, %c0_20] : memref<2x32x96xf32, #tpu.memory_space<vmem>>, vector<1x32x96xf32>
    %34 = vector.shape_cast %33 : vector<1x32x96xf32> to vector<32x96xf32>
    %cst_21 = arith.constant dense<0.000000e+00> : vector<16x96xf32>
    %35 = tpu.matmul %32, %34, %cst_21 {dimension_numbers = #tpu.dot_dimension_numbers<[1], [0], [0], [1], [0, 0, 1, 1], [], []>} : vector<16x32xf32>, vector<32x96xf32>, vector<16x96xf32> -> vector<16x96xf32>
    %c0_22 = arith.constant 0 : index
    %c0_23 = arith.constant 0 : index
    %c0_24 = arith.constant 0 : index
    %36 = vector.load %arg8[%c0_22, %c0_23, %c0_24] : memref<2x1x96xf32, #tpu.memory_space<vmem>>, vector<1x1x96xf32>
    %37 = vector.shape_cast %36 : vector<1x1x96xf32> to vector<1x96xf32>
    %38 = vector.broadcast %37 : vector<1x96xf32> to vector<16x96xf32>
    %39 = arith.addf %35, %38 : vector<16x96xf32>
    %40 = vector.extract_strided_slice %39 {offsets = [0, 0], sizes = [16, 32], strides = [1, 1]} : vector<16x96xf32> to vector<16x32xf32>
    %cst_25 = arith.constant 0.353553385 : f32
    %41 = vector.broadcast %cst_25 : f32 to vector<16x32xf32>
    %42 = arith.mulf %40, %41 : vector<16x32xf32>
    %43 = vector.extract_strided_slice %39 {offsets = [0, 32], sizes = [16, 32], strides = [1, 1]} : vector<16x96xf32> to vector<16x32xf32>
    %44 = vector.extract_strided_slice %39 {offsets = [0, 64], sizes = [16, 32], strides = [1, 1]} : vector<16x96xf32> to vector<16x32xf32>
    %45 = vector.extract_strided_slice %42 {offsets = [0, 0], sizes = [16, 8], strides = [1, 1]} : vector<16x32xf32> to vector<16x8xf32>
    %46 = vector.extract_strided_slice %43 {offsets = [0, 0], sizes = [16, 8], strides = [1, 1]} : vector<16x32xf32> to vector<16x8xf32>
    %cst_26 = arith.constant dense<0.000000e+00> : vector<16x16xf32>
    %47 = tpu.matmul %45, %46, %cst_26 {dimension_numbers = #tpu.dot_dimension_numbers<[1], [1], [0], [0], [0, 0, 1, 0], [], []>} : vector<16x8xf32>, vector<16x8xf32>, vector<16x16xf32> -> vector<16x16xf32>
    %48 = arith.addf %47, %3 : vector<16x16xf32>
    %49 = vector.extract_strided_slice %42 {offsets = [0, 8], sizes = [16, 8], strides = [1, 1]} : vector<16x32xf32> to vector<16x8xf32>
    %50 = vector.extract_strided_slice %43 {offsets = [0, 8], sizes = [16, 8], strides = [1, 1]} : vector<16x32xf32> to vector<16x8xf32>
    %cst_27 = arith.constant dense<0.000000e+00> : vector<16x16xf32>
    %51 = tpu.matmul %49, %50, %cst_27 {dimension_numbers = #tpu.dot_dimension_numbers<[1], [1], [0], [0], [0, 0, 1, 0], [], []>} : vector<16x8xf32>, vector<16x8xf32>, vector<16x16xf32> -> vector<16x16xf32>
    %52 = arith.addf %51, %3 : vector<16x16xf32>
    %53 = vector.extract_strided_slice %42 {offsets = [0, 16], sizes = [16, 8], strides = [1, 1]} : vector<16x32xf32> to vector<16x8xf32>
    %54 = vector.extract_strided_slice %43 {offsets = [0, 16], sizes = [16, 8], strides = [1, 1]} : vector<16x32xf32> to vector<16x8xf32>
    %cst_28 = arith.constant dense<0.000000e+00> : vector<16x16xf32>
    %55 = tpu.matmul %53, %54, %cst_28 {dimension_numbers = #tpu.dot_dimension_numbers<[1], [1], [0], [0], [0, 0, 1, 0], [], []>} : vector<16x8xf32>, vector<16x8xf32>, vector<16x16xf32> -> vector<16x16xf32>
    %56 = arith.addf %55, %3 : vector<16x16xf32>
    %57 = vector.extract_strided_slice %42 {offsets = [0, 24], sizes = [16, 8], strides = [1, 1]} : vector<16x32xf32> to vector<16x8xf32>
    %58 = vector.extract_strided_slice %43 {offsets = [0, 24], sizes = [16, 8], strides = [1, 1]} : vector<16x32xf32> to vector<16x8xf32>
    %cst_29 = arith.constant dense<0.000000e+00> : vector<16x16xf32>
    %59 = tpu.matmul %57, %58, %cst_29 {dimension_numbers = #tpu.dot_dimension_numbers<[1], [1], [0], [0], [0, 0, 1, 0], [], []>} : vector<16x8xf32>, vector<16x8xf32>, vector<16x16xf32> -> vector<16x16xf32>
    %60 = arith.addf %59, %3 : vector<16x16xf32>
    %61 = tpu.concatenate %48, %52, %56, %60 in 1 : vector<16x16xf32>, vector<16x16xf32>, vector<16x16xf32>, vector<16x16xf32> -> vector<16x64xf32>
    %cst_30 = arith.constant dense<0xFF800000> : vector<16xf32>
    %62 = vector.multi_reduction <maximumf>, %61, %cst_30 [1] : vector<16x64xf32> to vector<16xf32>
    %63 = vector.shape_cast %62 : vector<16xf32> to vector<16x1xf32>
    %64 = vector.broadcast %63 : vector<16x1xf32> to vector<16x64xf32>
    %65 = arith.subf %61, %64 : vector<16x64xf32>
    %66 = math.exp %65 : vector<16x64xf32>
    %cst_31 = arith.constant dense<0.000000e+00> : vector<16x4xf32>
    %67 = tpu.matmul %66, %4, %cst_31 {dimension_numbers = #tpu.dot_dimension_numbers<[1], [0], [0], [1], [0, 0, 1, 1], [], []>} : vector<16x64xf32>, vector<64x4xf32>, vector<16x4xf32> -> vector<16x4xf32>
    %68 = tpu.reciprocal %67 {approx = true} : vector<16x4xf32> -> vector<16x4xf32>
    %c0_32 = arith.constant 0 : index
    %c0_33 = arith.constant 0 : index
    %c0_34 = arith.constant 0 : index
    %69 = vector.load %arg9[%c0_32, %c0_33, %c0_34] : memref<2x32x32xf32, #tpu.memory_space<vmem>>, vector<1x32x32xf32>
    %70 = vector.shape_cast %69 : vector<1x32x32xf32> to vector<32x32xf32>
    %71 = vector.extract_strided_slice %66 {offsets = [0, 0], sizes = [16, 16], strides = [1, 1]} : vector<16x64xf32> to vector<16x16xf32>
    %72 = vector.extract_strided_slice %44 {offsets = [0, 0], sizes = [16, 8], strides = [1, 1]} : vector<16x32xf32> to vector<16x8xf32>
    %cst_35 = arith.constant dense<0.000000e+00> : vector<16x8xf32>
    %73 = tpu.matmul %71, %72, %cst_35 {dimension_numbers = #tpu.dot_dimension_numbers<[1], [0], [0], [1], [0, 0, 1, 1], [], []>} : vector<16x16xf32>, vector<16x8xf32>, vector<16x8xf32> -> vector<16x8xf32>
    %74 = vector.extract_strided_slice %68 {offsets = [0, 0], sizes = [16, 1], strides = [1, 1]} : vector<16x4xf32> to vector<16x1xf32>
    %75 = vector.broadcast %74 : vector<16x1xf32> to vector<16x8xf32>
    %76 = arith.mulf %73, %75 : vector<16x8xf32>
    %77 = vector.extract_strided_slice %70 {offsets = [0, 0], sizes = [8, 32], strides = [1, 1]} : vector<32x32xf32> to vector<8x32xf32>
    %cst_36 = arith.constant dense<0.000000e+00> : vector<16x32xf32>
    %78 = tpu.matmul %76, %77, %cst_36 {dimension_numbers = #tpu.dot_dimension_numbers<[1], [0], [0], [1], [0, 0, 1, 1], [], []>} : vector<16x8xf32>, vector<8x32xf32>, vector<16x32xf32> -> vector<16x32xf32>
    %79 = vector.extract_strided_slice %66 {offsets = [0, 16], sizes = [16, 16], strides = [1, 1]} : vector<16x64xf32> to vector<16x16xf32>
    %80 = vector.extract_strided_slice %44 {offsets = [0, 8], sizes = [16, 8], strides = [1, 1]} : vector<16x32xf32> to vector<16x8xf32>
    %cst_37 = arith.constant dense<0.000000e+00> : vector<16x8xf32>
    %81 = tpu.matmul %79, %80, %cst_37 {dimension_numbers = #tpu.dot_dimension_numbers<[1], [0], [0], [1], [0, 0, 1, 1], [], []>} : vector<16x16xf32>, vector<16x8xf32>, vector<16x8xf32> -> vector<16x8xf32>
    %82 = vector.extract_strided_slice %68 {offsets = [0, 1], sizes = [16, 1], strides = [1, 1]} : vector<16x4xf32> to vector<16x1xf32>
    %83 = vector.broadcast %82 : vector<16x1xf32> to vector<16x8xf32>
    %84 = arith.mulf %81, %83 : vector<16x8xf32>
    %85 = vector.extract_strided_slice %70 {offsets = [8, 0], sizes = [8, 32], strides = [1, 1]} : vector<32x32xf32> to vector<8x32xf32>
    %cst_38 = arith.constant dense<0.000000e+00> : vector<16x32xf32>
    %86 = tpu.matmul %84, %85, %cst_38 {dimension_numbers = #tpu.dot_dimension_numbers<[1], [0], [0], [1], [0, 0, 1, 1], [], []>} : vector<16x8xf32>, vector<8x32xf32>, vector<16x32xf32> -> vector<16x32xf32>
    %87 = arith.addf %78, %86 : vector<16x32xf32>
    %88 = vector.extract_strided_slice %66 {offsets = [0, 32], sizes = [16, 16], strides = [1, 1]} : vector<16x64xf32> to vector<16x16xf32>
    %89 = vector.extract_strided_slice %44 {offsets = [0, 16], sizes = [16, 8], strides = [1, 1]} : vector<16x32xf32> to vector<16x8xf32>
    %cst_39 = arith.constant dense<0.000000e+00> : vector<16x8xf32>
    %90 = tpu.matmul %88, %89, %cst_39 {dimension_numbers = #tpu.dot_dimension_numbers<[1], [0], [0], [1], [0, 0, 1, 1], [], []>} : vector<16x16xf32>, vector<16x8xf32>, vector<16x8xf32> -> vector<16x8xf32>
    %91 = vector.extract_strided_slice %68 {offsets = [0, 2], sizes = [16, 1], strides = [1, 1]} : vector<16x4xf32> to vector<16x1xf32>
    %92 = vector.broadcast %91 : vector<16x1xf32> to vector<16x8xf32>
    %93 = arith.mulf %90, %92 : vector<16x8xf32>
    %94 = vector.extract_strided_slice %70 {offsets = [16, 0], sizes = [8, 32], strides = [1, 1]} : vector<32x32xf32> to vector<8x32xf32>
    %cst_40 = arith.constant dense<0.000000e+00> : vector<16x32xf32>
    %95 = tpu.matmul %93, %94, %cst_40 {dimension_numbers = #tpu.dot_dimension_numbers<[1], [0], [0], [1], [0, 0, 1, 1], [], []>} : vector<16x8xf32>, vector<8x32xf32>, vector<16x32xf32> -> vector<16x32xf32>
    %96 = arith.addf %87, %95 : vector<16x32xf32>
    %97 = vector.extract_strided_slice %66 {offsets = [0, 48], sizes = [16, 16], strides = [1, 1]} : vector<16x64xf32> to vector<16x16xf32>
    %98 = vector.extract_strided_slice %44 {offsets = [0, 24], sizes = [16, 8], strides = [1, 1]} : vector<16x32xf32> to vector<16x8xf32>
    %cst_41 = arith.constant dense<0.000000e+00> : vector<16x8xf32>
    %99 = tpu.matmul %97, %98, %cst_41 {dimension_numbers = #tpu.dot_dimension_numbers<[1], [0], [0], [1], [0, 0, 1, 1], [], []>} : vector<16x16xf32>, vector<16x8xf32>, vector<16x8xf32> -> vector<16x8xf32>
    %100 = vector.extract_strided_slice %68 {offsets = [0, 3], sizes = [16, 1], strides = [1, 1]} : vector<16x4xf32> to vector<16x1xf32>
    %101 = vector.broadcast %100 : vector<16x1xf32> to vector<16x8xf32>
    %102 = arith.mulf %99, %101 : vector<16x8xf32>
    %103 = vector.extract_strided_slice %70 {offsets = [24, 0], sizes = [8, 32], strides = [1, 1]} : vector<32x32xf32> to vector<8x32xf32>
    %cst_42 = arith.constant dense<0.000000e+00> : vector<16x32xf32>
    %104 = tpu.matmul %102, %103, %cst_42 {dimension_numbers = #tpu.dot_dimension_numbers<[1], [0], [0], [1], [0, 0, 1, 1], [], []>} : vector<16x8xf32>, vector<8x32xf32>, vector<16x32xf32> -> vector<16x32xf32>
    %105 = arith.addf %96, %104 : vector<16x32xf32>
    %106 = arith.addf %2, %105 : vector<16x32xf32>
    %c0_43 = arith.constant 0 : index
    %c0_44 = arith.constant 0 : index
    %c0_45 = arith.constant 0 : index
    %107 = vector.load %arg10[%c0_43, %c0_44, %c0_45] : memref<2x1x32xf32, #tpu.memory_space<vmem>>, vector<1x1x32xf32>
    %108 = vector.shape_cast %107 : vector<1x1x32xf32> to vector<1x32xf32>
    %109 = vector.broadcast %108 : vector<1x32xf32> to vector<16x32xf32>
    %110 = arith.addf %106, %109 : vector<16x32xf32>
    %c0_46 = arith.constant 0 : index
    %c0_47 = arith.constant 0 : index
    %c0_48 = arith.constant 0 : index
    %111 = vector.load %arg11[%c0_46, %c0_47, %c0_48] : memref<2x1x32xf32, #tpu.memory_space<vmem>>, vector<1x1x32xf32>
    %112 = vector.shape_cast %111 : vector<1x1x32xf32> to vector<1x32xf32>
    %c0_49 = arith.constant 0 : index
    %c0_50 = arith.constant 0 : index
    %c0_51 = arith.constant 0 : index
    %113 = vector.load %arg12[%c0_49, %c0_50, %c0_51] : memref<2x1x32xf32, #tpu.memory_space<vmem>>, vector<1x1x32xf32>
    %114 = vector.shape_cast %113 : vector<1x1x32xf32> to vector<1x32xf32>
    %cst_52 = arith.constant dense<0.000000e+00> : vector<16xf32>
    %115 = vector.multi_reduction <add>, %110, %cst_52 [1] : vector<16x32xf32> to vector<16xf32>
    %116 = vector.shape_cast %115 : vector<16xf32> to vector<16x1xf32>
    %117 = arith.mulf %110, %110 : vector<16x32xf32>
    %cst_53 = arith.constant dense<0.000000e+00> : vector<16xf32>
    %118 = vector.multi_reduction <add>, %117, %cst_53 [1] : vector<16x32xf32> to vector<16xf32>
    %119 = vector.shape_cast %118 : vector<16xf32> to vector<16x1xf32>
    %cst_54 = arith.constant 3.125000e-02 : f32
    %120 = vector.broadcast %cst_54 : f32 to vector<16x1xf32>
    %121 = arith.mulf %116, %120 : vector<16x1xf32>
    %cst_55 = arith.constant 3.125000e-02 : f32
    %122 = vector.broadcast %cst_55 : f32 to vector<16x1xf32>
    %123 = arith.mulf %119, %122 : vector<16x1xf32>
    %124 = arith.mulf %121, %121 : vector<16x1xf32>
    %125 = arith.subf %123, %124 : vector<16x1xf32>
    %cst_56 = arith.constant 0.000000e+00 : f32
    %126 = vector.broadcast %cst_56 : f32 to vector<16x1xf32>
    %127 = arith.maximumf %125, %126 : vector<16x1xf32>
    %128 = vector.broadcast %121 : vector<16x1xf32> to vector<16x32xf32>
    %129 = arith.subf %110, %128 : vector<16x32xf32>
    %cst_57 = arith.constant 9.99999974E-6 : f32
    %130 = vector.broadcast %cst_57 : f32 to vector<16x1xf32>
    %131 = arith.addf %127, %130 : vector<16x1xf32>
    %132 = math.rsqrt %131 : vector<16x1xf32>
    %133 = vector.broadcast %132 : vector<16x1xf32> to vector<16x32xf32>
    %134 = arith.mulf %129, %133 : vector<16x32xf32>
    %135 = vector.broadcast %112 : vector<1x32xf32> to vector<16x32xf32>
    %136 = arith.mulf %134, %135 : vector<16x32xf32>
    %137 = vector.broadcast %114 : vector<1x32xf32> to vector<16x32xf32>
    %138 = arith.addf %136, %137 : vector<16x32xf32>
    %c0_58 = arith.constant 0 : index
    %c0_59 = arith.constant 0 : index
    %c0_60 = arith.constant 0 : index
    %139 = vector.load %arg13[%c0_58, %c0_59, %c0_60] : memref<2x32x128xf32, #tpu.memory_space<vmem>>, vector<1x32x128xf32>
    %140 = vector.shape_cast %139 : vector<1x32x128xf32> to vector<32x128xf32>
    %cst_61 = arith.constant dense<0.000000e+00> : vector<16x128xf32>
    %141 = tpu.matmul %138, %140, %cst_61 {dimension_numbers = #tpu.dot_dimension_numbers<[1], [0], [0], [1], [0, 0, 1, 1], [], []>} : vector<16x32xf32>, vector<32x128xf32>, vector<16x128xf32> -> vector<16x128xf32>
    %c0_62 = arith.constant 0 : index
    %c0_63 = arith.constant 0 : index
    %c0_64 = arith.constant 0 : index
    %142 = vector.load %arg14[%c0_62, %c0_63, %c0_64] : memref<2x1x128xf32, #tpu.memory_space<vmem>>, vector<1x1x128xf32>
    %143 = vector.shape_cast %142 : vector<1x1x128xf32> to vector<1x128xf32>
    %144 = vector.broadcast %143 : vector<1x128xf32> to vector<16x128xf32>
    %145 = arith.addf %141, %144 : vector<16x128xf32>
    %cst_65 = arith.constant 1.702000e+00 : f32
    %146 = vector.broadcast %cst_65 : f32 to vector<16x128xf32>
    %147 = arith.mulf %146, %145 : vector<16x128xf32>
    %148 = arith.negf %147 : vector<16x128xf32>
    %149 = math.exp %148 : vector<16x128xf32>
    %cst_66 = arith.constant 1.000000e+00 : f32
    %150 = vector.broadcast %cst_66 : f32 to vector<16x128xf32>
    %151 = arith.addf %150, %149 : vector<16x128xf32>
    %152 = arith.divf %150, %151 : vector<16x128xf32>
    %153 = arith.mulf %145, %152 : vector<16x128xf32>
    %c0_67 = arith.constant 0 : index
    %c0_68 = arith.constant 0 : index
    %c0_69 = arith.constant 0 : index
    %154 = vector.load %arg15[%c0_67, %c0_68, %c0_69] : memref<2x128x32xf32, #tpu.memory_space<vmem>>, vector<1x128x32xf32>
    %155 = vector.shape_cast %154 : vector<1x128x32xf32> to vector<128x32xf32>
    %cst_70 = arith.constant dense<0.000000e+00> : vector<16x32xf32>
    %156 = tpu.matmul %153, %155, %cst_70 {dimension_numbers = #tpu.dot_dimension_numbers<[1], [0], [0], [1], [0, 0, 1, 1], [], []>} : vector<16x128xf32>, vector<128x32xf32>, vector<16x32xf32> -> vector<16x32xf32>
    %157 = arith.addf %110, %156 : vector<16x32xf32>
    %c0_71 = arith.constant 0 : index
    %c0_72 = arith.constant 0 : index
    %c0_73 = arith.constant 0 : index
    %158 = vector.load %arg16[%c0_71, %c0_72, %c0_73] : memref<2x1x32xf32, #tpu.memory_space<vmem>>, vector<1x1x32xf32>
    %159 = vector.shape_cast %158 : vector<1x1x32xf32> to vector<1x32xf32>
    %160 = vector.broadcast %159 : vector<1x32xf32> to vector<16x32xf32>
    %161 = arith.addf %157, %160 : vector<16x32xf32>
    %c1 = arith.constant 1 : index
    %c0_74 = arith.constant 0 : index
    %c0_75 = arith.constant 0 : index
    %162 = vector.load %arg5[%c1, %c0_74, %c0_75] : memref<2x1x32xf32, #tpu.memory_space<vmem>>, vector<1x1x32xf32>
    %163 = vector.shape_cast %162 : vector<1x1x32xf32> to vector<1x32xf32>
    %c1_76 = arith.constant 1 : index
    %c0_77 = arith.constant 0 : index
    %c0_78 = arith.constant 0 : index
    %164 = vector.load %arg6[%c1_76, %c0_77, %c0_78] : memref<2x1x32xf32, #tpu.memory_space<vmem>>, vector<1x1x32xf32>
    %165 = vector.shape_cast %164 : vector<1x1x32xf32> to vector<1x32xf32>
    %cst_79 = arith.constant dense<0.000000e+00> : vector<16xf32>
    %166 = vector.multi_reduction <add>, %161, %cst_79 [1] : vector<16x32xf32> to vector<16xf32>
    %167 = vector.shape_cast %166 : vector<16xf32> to vector<16x1xf32>
    %168 = arith.mulf %161, %161 : vector<16x32xf32>
    %cst_80 = arith.constant dense<0.000000e+00> : vector<16xf32>
    %169 = vector.multi_reduction <add>, %168, %cst_80 [1] : vector<16x32xf32> to vector<16xf32>
    %170 = vector.shape_cast %169 : vector<16xf32> to vector<16x1xf32>
    %cst_81 = arith.constant 3.125000e-02 : f32
    %171 = vector.broadcast %cst_81 : f32 to vector<16x1xf32>
    %172 = arith.mulf %167, %171 : vector<16x1xf32>
    %cst_82 = arith.constant 3.125000e-02 : f32
    %173 = vector.broadcast %cst_82 : f32 to vector<16x1xf32>
    %174 = arith.mulf %170, %173 : vector<16x1xf32>
    %175 = arith.mulf %172, %172 : vector<16x1xf32>
    %176 = arith.subf %174, %175 : vector<16x1xf32>
    %cst_83 = arith.constant 0.000000e+00 : f32
    %177 = vector.broadcast %cst_83 : f32 to vector<16x1xf32>
    %178 = arith.maximumf %176, %177 : vector<16x1xf32>
    %179 = vector.broadcast %172 : vector<16x1xf32> to vector<16x32xf32>
    %180 = arith.subf %161, %179 : vector<16x32xf32>
    %cst_84 = arith.constant 9.99999974E-6 : f32
    %181 = vector.broadcast %cst_84 : f32 to vector<16x1xf32>
    %182 = arith.addf %178, %181 : vector<16x1xf32>
    %183 = math.rsqrt %182 : vector<16x1xf32>
    %184 = vector.broadcast %183 : vector<16x1xf32> to vector<16x32xf32>
    %185 = arith.mulf %180, %184 : vector<16x32xf32>
    %186 = vector.broadcast %163 : vector<1x32xf32> to vector<16x32xf32>
    %187 = arith.mulf %185, %186 : vector<16x32xf32>
    %188 = vector.broadcast %165 : vector<1x32xf32> to vector<16x32xf32>
    %189 = arith.addf %187, %188 : vector<16x32xf32>
    %c1_85 = arith.constant 1 : index
    %c0_86 = arith.constant 0 : index
    %c0_87 = arith.constant 0 : index
    %190 = vector.load %arg7[%c1_85, %c0_86, %c0_87] : memref<2x32x96xf32, #tpu.memory_space<vmem>>, vector<1x32x96xf32>
    %191 = vector.shape_cast %190 : vector<1x32x96xf32> to vector<32x96xf32>
    %cst_88 = arith.constant dense<0.000000e+00> : vector<16x96xf32>
    %192 = tpu.matmul %189, %191, %cst_88 {dimension_numbers = #tpu.dot_dimension_numbers<[1], [0], [0], [1], [0, 0, 1, 1], [], []>} : vector<16x32xf32>, vector<32x96xf32>, vector<16x96xf32> -> vector<16x96xf32>
    %c1_89 = arith.constant 1 : index
    %c0_90 = arith.constant 0 : index
    %c0_91 = arith.constant 0 : index
    %193 = vector.load %arg8[%c1_89, %c0_90, %c0_91] : memref<2x1x96xf32, #tpu.memory_space<vmem>>, vector<1x1x96xf32>
    %194 = vector.shape_cast %193 : vector<1x1x96xf32> to vector<1x96xf32>
    %195 = vector.broadcast %194 : vector<1x96xf32> to vector<16x96xf32>
    %196 = arith.addf %192, %195 : vector<16x96xf32>
    %197 = vector.extract_strided_slice %196 {offsets = [0, 0], sizes = [16, 32], strides = [1, 1]} : vector<16x96xf32> to vector<16x32xf32>
    %cst_92 = arith.constant 0.353553385 : f32
    %198 = vector.broadcast %cst_92 : f32 to vector<16x32xf32>
    %199 = arith.mulf %197, %198 : vector<16x32xf32>
    %200 = vector.extract_strided_slice %196 {offsets = [0, 32], sizes = [16, 32], strides = [1, 1]} : vector<16x96xf32> to vector<16x32xf32>
    %201 = vector.extract_strided_slice %196 {offsets = [0, 64], sizes = [16, 32], strides = [1, 1]} : vector<16x96xf32> to vector<16x32xf32>
    %202 = vector.extract_strided_slice %199 {offsets = [0, 0], sizes = [16, 8], strides = [1, 1]} : vector<16x32xf32> to vector<16x8xf32>
    %203 = vector.extract_strided_slice %200 {offsets = [0, 0], sizes = [16, 8], strides = [1, 1]} : vector<16x32xf32> to vector<16x8xf32>
    %cst_93 = arith.constant dense<0.000000e+00> : vector<16x16xf32>
    %204 = tpu.matmul %202, %203, %cst_93 {dimension_numbers = #tpu.dot_dimension_numbers<[1], [1], [0], [0], [0, 0, 1, 0], [], []>} : vector<16x8xf32>, vector<16x8xf32>, vector<16x16xf32> -> vector<16x16xf32>
    %205 = arith.addf %204, %3 : vector<16x16xf32>
    %206 = vector.extract_strided_slice %199 {offsets = [0, 8], sizes = [16, 8], strides = [1, 1]} : vector<16x32xf32> to vector<16x8xf32>
    %207 = vector.extract_strided_slice %200 {offsets = [0, 8], sizes = [16, 8], strides = [1, 1]} : vector<16x32xf32> to vector<16x8xf32>
    %cst_94 = arith.constant dense<0.000000e+00> : vector<16x16xf32>
    %208 = tpu.matmul %206, %207, %cst_94 {dimension_numbers = #tpu.dot_dimension_numbers<[1], [1], [0], [0], [0, 0, 1, 0], [], []>} : vector<16x8xf32>, vector<16x8xf32>, vector<16x16xf32> -> vector<16x16xf32>
    %209 = arith.addf %208, %3 : vector<16x16xf32>
    %210 = vector.extract_strided_slice %199 {offsets = [0, 16], sizes = [16, 8], strides = [1, 1]} : vector<16x32xf32> to vector<16x8xf32>
    %211 = vector.extract_strided_slice %200 {offsets = [0, 16], sizes = [16, 8], strides = [1, 1]} : vector<16x32xf32> to vector<16x8xf32>
    %cst_95 = arith.constant dense<0.000000e+00> : vector<16x16xf32>
    %212 = tpu.matmul %210, %211, %cst_95 {dimension_numbers = #tpu.dot_dimension_numbers<[1], [1], [0], [0], [0, 0, 1, 0], [], []>} : vector<16x8xf32>, vector<16x8xf32>, vector<16x16xf32> -> vector<16x16xf32>
    %213 = arith.addf %212, %3 : vector<16x16xf32>
    %214 = vector.extract_strided_slice %199 {offsets = [0, 24], sizes = [16, 8], strides = [1, 1]} : vector<16x32xf32> to vector<16x8xf32>
    %215 = vector.extract_strided_slice %200 {offsets = [0, 24], sizes = [16, 8], strides = [1, 1]} : vector<16x32xf32> to vector<16x8xf32>
    %cst_96 = arith.constant dense<0.000000e+00> : vector<16x16xf32>
    %216 = tpu.matmul %214, %215, %cst_96 {dimension_numbers = #tpu.dot_dimension_numbers<[1], [1], [0], [0], [0, 0, 1, 0], [], []>} : vector<16x8xf32>, vector<16x8xf32>, vector<16x16xf32> -> vector<16x16xf32>
    %217 = arith.addf %216, %3 : vector<16x16xf32>
    %218 = tpu.concatenate %205, %209, %213, %217 in 1 : vector<16x16xf32>, vector<16x16xf32>, vector<16x16xf32>, vector<16x16xf32> -> vector<16x64xf32>
    %cst_97 = arith.constant dense<0xFF800000> : vector<16xf32>
    %219 = vector.multi_reduction <maximumf>, %218, %cst_97 [1] : vector<16x64xf32> to vector<16xf32>
    %220 = vector.shape_cast %219 : vector<16xf32> to vector<16x1xf32>
    %221 = vector.broadcast %220 : vector<16x1xf32> to vector<16x64xf32>
    %222 = arith.subf %218, %221 : vector<16x64xf32>
    %223 = math.exp %222 : vector<16x64xf32>
    %cst_98 = arith.constant dense<0.000000e+00> : vector<16x4xf32>
    %224 = tpu.matmul %223, %4, %cst_98 {dimension_numbers = #tpu.dot_dimension_numbers<[1], [0], [0], [1], [0, 0, 1, 1], [], []>} : vector<16x64xf32>, vector<64x4xf32>, vector<16x4xf32> -> vector<16x4xf32>
    %225 = tpu.reciprocal %224 {approx = true} : vector<16x4xf32> -> vector<16x4xf32>
    %c1_99 = arith.constant 1 : index
    %c0_100 = arith.constant 0 : index
    %c0_101 = arith.constant 0 : index
    %226 = vector.load %arg9[%c1_99, %c0_100, %c0_101] : memref<2x32x32xf32, #tpu.memory_space<vmem>>, vector<1x32x32xf32>
    %227 = vector.shape_cast %226 : vector<1x32x32xf32> to vector<32x32xf32>
    %228 = vector.extract_strided_slice %223 {offsets = [0, 0], sizes = [16, 16], strides = [1, 1]} : vector<16x64xf32> to vector<16x16xf32>
    %229 = vector.extract_strided_slice %201 {offsets = [0, 0], sizes = [16, 8], strides = [1, 1]} : vector<16x32xf32> to vector<16x8xf32>
    %cst_102 = arith.constant dense<0.000000e+00> : vector<16x8xf32>
    %230 = tpu.matmul %228, %229, %cst_102 {dimension_numbers = #tpu.dot_dimension_numbers<[1], [0], [0], [1], [0, 0, 1, 1], [], []>} : vector<16x16xf32>, vector<16x8xf32>, vector<16x8xf32> -> vector<16x8xf32>
    %231 = vector.extract_strided_slice %225 {offsets = [0, 0], sizes = [16, 1], strides = [1, 1]} : vector<16x4xf32> to vector<16x1xf32>
    %232 = vector.broadcast %231 : vector<16x1xf32> to vector<16x8xf32>
    %233 = arith.mulf %230, %232 : vector<16x8xf32>
    %234 = vector.extract_strided_slice %227 {offsets = [0, 0], sizes = [8, 32], strides = [1, 1]} : vector<32x32xf32> to vector<8x32xf32>
    %cst_103 = arith.constant dense<0.000000e+00> : vector<16x32xf32>
    %235 = tpu.matmul %233, %234, %cst_103 {dimension_numbers = #tpu.dot_dimension_numbers<[1], [0], [0], [1], [0, 0, 1, 1], [], []>} : vector<16x8xf32>, vector<8x32xf32>, vector<16x32xf32> -> vector<16x32xf32>
    %236 = vector.extract_strided_slice %223 {offsets = [0, 16], sizes = [16, 16], strides = [1, 1]} : vector<16x64xf32> to vector<16x16xf32>
    %237 = vector.extract_strided_slice %201 {offsets = [0, 8], sizes = [16, 8], strides = [1, 1]} : vector<16x32xf32> to vector<16x8xf32>
    %cst_104 = arith.constant dense<0.000000e+00> : vector<16x8xf32>
    %238 = tpu.matmul %236, %237, %cst_104 {dimension_numbers = #tpu.dot_dimension_numbers<[1], [0], [0], [1], [0, 0, 1, 1], [], []>} : vector<16x16xf32>, vector<16x8xf32>, vector<16x8xf32> -> vector<16x8xf32>
    %239 = vector.extract_strided_slice %225 {offsets = [0, 1], sizes = [16, 1], strides = [1, 1]} : vector<16x4xf32> to vector<16x1xf32>
    %240 = vector.broadcast %239 : vector<16x1xf32> to vector<16x8xf32>
    %241 = arith.mulf %238, %240 : vector<16x8xf32>
    %242 = vector.extract_strided_slice %227 {offsets = [8, 0], sizes = [8, 32], strides = [1, 1]} : vector<32x32xf32> to vector<8x32xf32>
    %cst_105 = arith.constant dense<0.000000e+00> : vector<16x32xf32>
    %243 = tpu.matmul %241, %242, %cst_105 {dimension_numbers = #tpu.dot_dimension_numbers<[1], [0], [0], [1], [0, 0, 1, 1], [], []>} : vector<16x8xf32>, vector<8x32xf32>, vector<16x32xf32> -> vector<16x32xf32>
    %244 = arith.addf %235, %243 : vector<16x32xf32>
    %245 = vector.extract_strided_slice %223 {offsets = [0, 32], sizes = [16, 16], strides = [1, 1]} : vector<16x64xf32> to vector<16x16xf32>
    %246 = vector.extract_strided_slice %201 {offsets = [0, 16], sizes = [16, 8], strides = [1, 1]} : vector<16x32xf32> to vector<16x8xf32>
    %cst_106 = arith.constant dense<0.000000e+00> : vector<16x8xf32>
    %247 = tpu.matmul %245, %246, %cst_106 {dimension_numbers = #tpu.dot_dimension_numbers<[1], [0], [0], [1], [0, 0, 1, 1], [], []>} : vector<16x16xf32>, vector<16x8xf32>, vector<16x8xf32> -> vector<16x8xf32>
    %248 = vector.extract_strided_slice %225 {offsets = [0, 2], sizes = [16, 1], strides = [1, 1]} : vector<16x4xf32> to vector<16x1xf32>
    %249 = vector.broadcast %248 : vector<16x1xf32> to vector<16x8xf32>
    %250 = arith.mulf %247, %249 : vector<16x8xf32>
    %251 = vector.extract_strided_slice %227 {offsets = [16, 0], sizes = [8, 32], strides = [1, 1]} : vector<32x32xf32> to vector<8x32xf32>
    %cst_107 = arith.constant dense<0.000000e+00> : vector<16x32xf32>
    %252 = tpu.matmul %250, %251, %cst_107 {dimension_numbers = #tpu.dot_dimension_numbers<[1], [0], [0], [1], [0, 0, 1, 1], [], []>} : vector<16x8xf32>, vector<8x32xf32>, vector<16x32xf32> -> vector<16x32xf32>
    %253 = arith.addf %244, %252 : vector<16x32xf32>
    %254 = vector.extract_strided_slice %223 {offsets = [0, 48], sizes = [16, 16], strides = [1, 1]} : vector<16x64xf32> to vector<16x16xf32>
    %255 = vector.extract_strided_slice %201 {offsets = [0, 24], sizes = [16, 8], strides = [1, 1]} : vector<16x32xf32> to vector<16x8xf32>
    %cst_108 = arith.constant dense<0.000000e+00> : vector<16x8xf32>
    %256 = tpu.matmul %254, %255, %cst_108 {dimension_numbers = #tpu.dot_dimension_numbers<[1], [0], [0], [1], [0, 0, 1, 1], [], []>} : vector<16x16xf32>, vector<16x8xf32>, vector<16x8xf32> -> vector<16x8xf32>
    %257 = vector.extract_strided_slice %225 {offsets = [0, 3], sizes = [16, 1], strides = [1, 1]} : vector<16x4xf32> to vector<16x1xf32>
    %258 = vector.broadcast %257 : vector<16x1xf32> to vector<16x8xf32>
    %259 = arith.mulf %256, %258 : vector<16x8xf32>
    %260 = vector.extract_strided_slice %227 {offsets = [24, 0], sizes = [8, 32], strides = [1, 1]} : vector<32x32xf32> to vector<8x32xf32>
    %cst_109 = arith.constant dense<0.000000e+00> : vector<16x32xf32>
    %261 = tpu.matmul %259, %260, %cst_109 {dimension_numbers = #tpu.dot_dimension_numbers<[1], [0], [0], [1], [0, 0, 1, 1], [], []>} : vector<16x8xf32>, vector<8x32xf32>, vector<16x32xf32> -> vector<16x32xf32>
    %262 = arith.addf %253, %261 : vector<16x32xf32>
    %263 = arith.addf %161, %262 : vector<16x32xf32>
    %c1_110 = arith.constant 1 : index
    %c0_111 = arith.constant 0 : index
    %c0_112 = arith.constant 0 : index
    %264 = vector.load %arg10[%c1_110, %c0_111, %c0_112] : memref<2x1x32xf32, #tpu.memory_space<vmem>>, vector<1x1x32xf32>
    %265 = vector.shape_cast %264 : vector<1x1x32xf32> to vector<1x32xf32>
    %266 = vector.broadcast %265 : vector<1x32xf32> to vector<16x32xf32>
    %267 = arith.addf %263, %266 : vector<16x32xf32>
    %c1_113 = arith.constant 1 : index
    %c0_114 = arith.constant 0 : index
    %c0_115 = arith.constant 0 : index
    %268 = vector.load %arg11[%c1_113, %c0_114, %c0_115] : memref<2x1x32xf32, #tpu.memory_space<vmem>>, vector<1x1x32xf32>
    %269 = vector.shape_cast %268 : vector<1x1x32xf32> to vector<1x32xf32>
    %c1_116 = arith.constant 1 : index
    %c0_117 = arith.constant 0 : index
    %c0_118 = arith.constant 0 : index
    %270 = vector.load %arg12[%c1_116, %c0_117, %c0_118] : memref<2x1x32xf32, #tpu.memory_space<vmem>>, vector<1x1x32xf32>
    %271 = vector.shape_cast %270 : vector<1x1x32xf32> to vector<1x32xf32>
    %cst_119 = arith.constant dense<0.000000e+00> : vector<16xf32>
    %272 = vector.multi_reduction <add>, %267, %cst_119 [1] : vector<16x32xf32> to vector<16xf32>
    %273 = vector.shape_cast %272 : vector<16xf32> to vector<16x1xf32>
    %274 = arith.mulf %267, %267 : vector<16x32xf32>
    %cst_120 = arith.constant dense<0.000000e+00> : vector<16xf32>
    %275 = vector.multi_reduction <add>, %274, %cst_120 [1] : vector<16x32xf32> to vector<16xf32>
    %276 = vector.shape_cast %275 : vector<16xf32> to vector<16x1xf32>
    %cst_121 = arith.constant 3.125000e-02 : f32
    %277 = vector.broadcast %cst_121 : f32 to vector<16x1xf32>
    %278 = arith.mulf %273, %277 : vector<16x1xf32>
    %cst_122 = arith.constant 3.125000e-02 : f32
    %279 = vector.broadcast %cst_122 : f32 to vector<16x1xf32>
    %280 = arith.mulf %276, %279 : vector<16x1xf32>
    %281 = arith.mulf %278, %278 : vector<16x1xf32>
    %282 = arith.subf %280, %281 : vector<16x1xf32>
    %cst_123 = arith.constant 0.000000e+00 : f32
    %283 = vector.broadcast %cst_123 : f32 to vector<16x1xf32>
    %284 = arith.maximumf %282, %283 : vector<16x1xf32>
    %285 = vector.broadcast %278 : vector<16x1xf32> to vector<16x32xf32>
    %286 = arith.subf %267, %285 : vector<16x32xf32>
    %cst_124 = arith.constant 9.99999974E-6 : f32
    %287 = vector.broadcast %cst_124 : f32 to vector<16x1xf32>
    %288 = arith.addf %284, %287 : vector<16x1xf32>
    %289 = math.rsqrt %288 : vector<16x1xf32>
    %290 = vector.broadcast %289 : vector<16x1xf32> to vector<16x32xf32>
    %291 = arith.mulf %286, %290 : vector<16x32xf32>
    %292 = vector.broadcast %269 : vector<1x32xf32> to vector<16x32xf32>
    %293 = arith.mulf %291, %292 : vector<16x32xf32>
    %294 = vector.broadcast %271 : vector<1x32xf32> to vector<16x32xf32>
    %295 = arith.addf %293, %294 : vector<16x32xf32>
    %c1_125 = arith.constant 1 : index
    %c0_126 = arith.constant 0 : index
    %c0_127 = arith.constant 0 : index
    %296 = vector.load %arg13[%c1_125, %c0_126, %c0_127] : memref<2x32x128xf32, #tpu.memory_space<vmem>>, vector<1x32x128xf32>
    %297 = vector.shape_cast %296 : vector<1x32x128xf32> to vector<32x128xf32>
    %cst_128 = arith.constant dense<0.000000e+00> : vector<16x128xf32>
    %298 = tpu.matmul %295, %297, %cst_128 {dimension_numbers = #tpu.dot_dimension_numbers<[1], [0], [0], [1], [0, 0, 1, 1], [], []>} : vector<16x32xf32>, vector<32x128xf32>, vector<16x128xf32> -> vector<16x128xf32>
    %c1_129 = arith.constant 1 : index
    %c0_130 = arith.constant 0 : index
    %c0_131 = arith.constant 0 : index
    %299 = vector.load %arg14[%c1_129, %c0_130, %c0_131] : memref<2x1x128xf32, #tpu.memory_space<vmem>>, vector<1x1x128xf32>
    %300 = vector.shape_cast %299 : vector<1x1x128xf32> to vector<1x128xf32>
    %301 = vector.broadcast %300 : vector<1x128xf32> to vector<16x128xf32>
    %302 = arith.addf %298, %301 : vector<16x128xf32>
    %cst_132 = arith.constant 1.702000e+00 : f32
    %303 = vector.broadcast %cst_132 : f32 to vector<16x128xf32>
    %304 = arith.mulf %303, %302 : vector<16x128xf32>
    %305 = arith.negf %304 : vector<16x128xf32>
    %306 = math.exp %305 : vector<16x128xf32>
    %cst_133 = arith.constant 1.000000e+00 : f32
    %307 = vector.broadcast %cst_133 : f32 to vector<16x128xf32>
    %308 = arith.addf %307, %306 : vector<16x128xf32>
    %309 = arith.divf %307, %308 : vector<16x128xf32>
    %310 = arith.mulf %302, %309 : vector<16x128xf32>
    %c1_134 = arith.constant 1 : index
    %c0_135 = arith.constant 0 : index
    %c0_136 = arith.constant 0 : index
    %311 = vector.load %arg15[%c1_134, %c0_135, %c0_136] : memref<2x128x32xf32, #tpu.memory_space<vmem>>, vector<1x128x32xf32>
    %312 = vector.shape_cast %311 : vector<1x128x32xf32> to vector<128x32xf32>
    %cst_137 = arith.constant dense<0.000000e+00> : vector<16x32xf32>
    %313 = tpu.matmul %310, %312, %cst_137 {dimension_numbers = #tpu.dot_dimension_numbers<[1], [0], [0], [1], [0, 0, 1, 1], [], []>} : vector<16x128xf32>, vector<128x32xf32>, vector<16x32xf32> -> vector<16x32xf32>
    %314 = arith.addf %267, %313 : vector<16x32xf32>
    %c1_138 = arith.constant 1 : index
    %c0_139 = arith.constant 0 : index
    %c0_140 = arith.constant 0 : index
    %315 = vector.load %arg16[%c1_138, %c0_139, %c0_140] : memref<2x1x32xf32, #tpu.memory_space<vmem>>, vector<1x1x32xf32>
    %316 = vector.shape_cast %315 : vector<1x1x32xf32> to vector<1x32xf32>
    %317 = vector.broadcast %316 : vector<1x32xf32> to vector<16x32xf32>
    %318 = arith.addf %314, %317 : vector<16x32xf32>
    %c0_141 = arith.constant 0 : index
    %c0_142 = arith.constant 0 : index
    %319 = vector.load %arg17[%c0_141, %c0_142] : memref<1x32xf32, #tpu.memory_space<vmem>>, vector<1x32xf32>
    %c0_143 = arith.constant 0 : index
    %c0_144 = arith.constant 0 : index
    %320 = vector.load %arg18[%c0_143, %c0_144] : memref<1x32xf32, #tpu.memory_space<vmem>>, vector<1x32xf32>
    %cst_145 = arith.constant dense<0.000000e+00> : vector<16xf32>
    %321 = vector.multi_reduction <add>, %318, %cst_145 [1] : vector<16x32xf32> to vector<16xf32>
    %322 = vector.shape_cast %321 : vector<16xf32> to vector<16x1xf32>
    %323 = arith.mulf %318, %318 : vector<16x32xf32>
    %cst_146 = arith.constant dense<0.000000e+00> : vector<16xf32>
    %324 = vector.multi_reduction <add>, %323, %cst_146 [1] : vector<16x32xf32> to vector<16xf32>
    %325 = vector.shape_cast %324 : vector<16xf32> to vector<16x1xf32>
    %cst_147 = arith.constant 3.125000e-02 : f32
    %326 = vector.broadcast %cst_147 : f32 to vector<16x1xf32>
    %327 = arith.mulf %322, %326 : vector<16x1xf32>
    %cst_148 = arith.constant 3.125000e-02 : f32
    %328 = vector.broadcast %cst_148 : f32 to vector<16x1xf32>
    %329 = arith.mulf %325, %328 : vector<16x1xf32>
    %330 = arith.mulf %327, %327 : vector<16x1xf32>
    %331 = arith.subf %329, %330 : vector<16x1xf32>
    %cst_149 = arith.constant 0.000000e+00 : f32
    %332 = vector.broadcast %cst_149 : f32 to vector<16x1xf32>
    %333 = arith.maximumf %331, %332 : vector<16x1xf32>
    %334 = vector.broadcast %327 : vector<16x1xf32> to vector<16x32xf32>
    %335 = arith.subf %318, %334 : vector<16x32xf32>
    %cst_150 = arith.constant 9.99999974E-6 : f32
    %336 = vector.broadcast %cst_150 : f32 to vector<16x1xf32>
    %337 = arith.addf %333, %336 : vector<16x1xf32>
    %338 = math.rsqrt %337 : vector<16x1xf32>
    %339 = vector.broadcast %338 : vector<16x1xf32> to vector<16x32xf32>
    %340 = arith.mulf %335, %339 : vector<16x32xf32>
    %341 = vector.broadcast %319 : vector<1x32xf32> to vector<16x32xf32>
    %342 = arith.mulf %340, %341 : vector<16x32xf32>
    %343 = vector.broadcast %320 : vector<1x32xf32> to vector<16x32xf32>
    %344 = arith.addf %342, %343 : vector<16x32xf32>
    %c0_151 = arith.constant 0 : index
    %c0_152 = arith.constant 0 : index
    %345 = vector.load %arg3[%c0_151, %c0_152] : memref<2x16xf32, #tpu.memory_space<vmem>>, vector<2x16xf32>
    %cst_153 = arith.constant dense<0.000000e+00> : vector<2x32xf32>
    %346 = tpu.matmul %345, %344, %cst_153 {dimension_numbers = #tpu.dot_dimension_numbers<[1], [0], [0], [1], [0, 0, 1, 1], [], []>} : vector<2x16xf32>, vector<16x32xf32>, vector<2x32xf32> -> vector<2x32xf32>
    %c0_154 = arith.constant 0 : index
    %c0_155 = arith.constant 0 : index
    %347 = vector.load %arg19[%c0_154, %c0_155] : memref<32x32xf32, #tpu.memory_space<vmem>>, vector<32x32xf32>
    %cst_156 = arith.constant dense<0.000000e+00> : vector<2x32xf32>
    %348 = tpu.matmul %346, %347, %cst_156 {dimension_numbers = #tpu.dot_dimension_numbers<[1], [0], [0], [1], [0, 0, 1, 1], [], []>} : vector<2x32xf32>, vector<32x32xf32>, vector<2x32xf32> -> vector<2x32xf32>
    %c0_157 = arith.constant 0 : index
    %c0_158 = arith.constant 0 : index
    %349 = vector.load %arg20[%c0_157, %c0_158] : memref<2x32xf32, #tpu.memory_space<vmem>>, vector<2x32xf32>
    tpu.vector_store %arg20[%c0_157, %c0_158], %348 {strides = array<i32>} : memref<2x32xf32, #tpu.memory_space<vmem>>, vector<2x32xf32>,
    return
  }
}

</mosaic_0001>

<llo_original>
// kernel: text_encoder_forward.1
$region0: #{text_encoder_forward.1}
  #allocation0 [shape = 'u32[]', space=smem, size = 0x4, offset = 0x4, fixed_abs, tag = 'smem constant byte address 0x4 - core index']
  #allocation1 [shape = 'u32[144,128]{1,0:T(1,128)}', space=vmem, size = 0x12000, scoped, tag = 'internal scratch']
  %s0 = inlined_call_operand.vmem [shape: f32[16,32], index: 0, kind: input, shape index: {}]
  %s1 = inlined_call_operand.vmem [shape: f32[16,32], index: 1, kind: input, shape index: {}]
  %s2 = inlined_call_operand.vmem [shape: f32[16,16], index: 2, kind: input, shape index: {}]
  %s3 = inlined_call_operand.vmem [shape: f32[2,16], index: 3, kind: input, shape index: {}]
  %s4 = inlined_call_operand.vmem [shape: f32[64,4], index: 4, kind: input, shape index: {}]
  %s5 = inlined_call_operand.vmem [shape: f32[2,1,32], index: 5, kind: input, shape index: {}]
  %s6 = inlined_call_operand.vmem [shape: f32[2,1,32], index: 6, kind: input, shape index: {}]
  %s7 = inlined_call_operand.vmem [shape: f32[2,32,96], index: 7, kind: input, shape index: {}]
  %s8 = inlined_call_operand.vmem [shape: f32[2,1,96], index: 8, kind: input, shape index: {}]
  %s9 = inlined_call_operand.vmem [shape: f32[2,32,32], index: 9, kind: input, shape index: {}]
  %s10 = inlined_call_operand.vmem [shape: f32[2,1,32], index: 10, kind: input, shape index: {}]
  %s11 = inlined_call_operand.vmem [shape: f32[2,1,32], index: 11, kind: input, shape index: {}]
  %s12 = inlined_call_operand.vmem [shape: f32[2,1,32], index: 12, kind: input, shape index: {}]
  %s13 = inlined_call_operand.vmem [shape: f32[2,32,128], index: 13, kind: input, shape index: {}]
  %s14 = inlined_call_operand.vmem [shape: f32[2,1,128], index: 14, kind: input, shape index: {}]
  %s15 = inlined_call_operand.vmem [shape: f32[2,128,32], index: 15, kind: input, shape index: {}]
  %s16 = inlined_call_operand.vmem [shape: f32[2,1,32], index: 16, kind: input, shape index: {}]
  %s17 = inlined_call_operand.vmem [shape: f32[1,32], index: 17, kind: input, shape index: {}]
  %s18 = inlined_call_operand.vmem [shape: f32[1,32], index: 18, kind: input, shape index: {}]
  %s19 = inlined_call_operand.vmem [shape: f32[32,32], index: 19, kind: input, shape index: {}]
  %s20 = inlined_call_operand.hbm [shape: f32[2,32], index: 20, kind: output, shape index: {}]
  %s21 = sld [smem:[#allocation0]]
  $region90: #{text_encoder_forward.1} parent=0
    _
  %s23 = ssub.s32 1, %s21
  %s24 = scalar_select 0, %s23, %s21
  $region1: #{text_encoder_forward.1} parent=0
    #allocation2 [shape = 'u8[1024]{0}', space=vmem, size = 0x400, scoped, tag = 'output window, operand 0, single buffered']
    #allocation3 [shape = 's32[1]{0}', space=sflag, size = 0x4, scoped, tag = 'scoped memory for text_encoder_forward.1']
    %25 = vsyncpa [#allocation3], 0
    // Predicated region
    $region2: #{text_encoder_forward.1} parent=1 // pred_check
      _
    $region3: #{text_encoder_forward.1} parent=1 // pred_check_branch
      %27 = sbr.rel (0) target = $region5
    $region4: #{text_encoder_forward.1} parent=1 // pred_region
      _
    $region5: #{text_encoder_forward.1} parent=1 // pred_fallthru
      _
    // Predicated region
    $region6: #{text_encoder_forward.1} parent=1 // pred_check
      _
    $region7: #{text_encoder_forward.1} parent=1 // pred_check_branch
      %29 = sbr.rel (0) target = $region9
    $region8: #{text_encoder_forward.1} parent=1 // pred_region
      _
    $region9: #{text_encoder_forward.1} parent=1 // pred_fallthru
      _
    // Predicated region
    $region10: #{text_encoder_forward.1} parent=1 // pred_check
      _
    $region11: #{text_encoder_forward.1} parent=1 // pred_check_branch
      %31 = sbr.rel (0) target = $region13
    $region12: #{text_encoder_forward.1} parent=1 // pred_region
      _
    $region13: #{text_encoder_forward.1} parent=1 // pred_fallthru
      _
    // Predicated region
    $region14: #{text_encoder_forward.1} parent=1 // pred_check
      _
    $region15: #{text_encoder_forward.1} parent=1 // pred_check_branch
      %33 = sbr.rel (0) target = $region17
    $region16: #{text_encoder_forward.1} parent=1 // pred_region
      _
    $region17: #{text_encoder_forward.1} parent=1 // pred_fallthru
      _
    // Predicated region
    $region18: #{text_encoder_forward.1} parent=1 // pred_check
      _
    $region19: #{text_encoder_forward.1} parent=1 // pred_check_branch
      %35 = sbr.rel (0) target = $region21
    $region20: #{text_encoder_forward.1} parent=1 // pred_region
      _
    $region21: #{text_encoder_forward.1} parent=1 // pred_fallthru
      _
    // Predicated region
    $region22: #{text_encoder_forward.1} parent=1 // pred_check
      _
    $region23: #{text_encoder_forward.1} parent=1 // pred_check_branch
      %37 = sbr.rel (0) target = $region25
    $region24: #{text_encoder_forward.1} parent=1 // pred_region
      _
    $region25: #{text_encoder_forward.1} parent=1 // pred_fallthru
      _
    // Predicated region
    $region26: #{text_encoder_forward.1} parent=1 // pred_check
      _
    $region27: #{text_encoder_forward.1} parent=1 // pred_check_branch
      %39 = sbr.rel (0) target = $region29
    $region28: #{text_encoder_forward.1} parent=1 // pred_region
      _
    $region29: #{text_encoder_forward.1} parent=1 // pred_fallthru
      _
    // Predicated region
    $region30: #{text_encoder_forward.1} parent=1 // pred_check
      _
    $region31: #{text_encoder_forward.1} parent=1 // pred_check_branch
      %41 = sbr.rel (0) target = $region33
    $region32: #{text_encoder_forward.1} parent=1 // pred_region
      _
    $region33: #{text_encoder_forward.1} parent=1 // pred_fallthru
      _
    // Predicated region
    $region34: #{text_encoder_forward.1} parent=1 // pred_check
      _
    $region35: #{text_encoder_forward.1} parent=1 // pred_check_branch
      %43 = sbr.rel (0) target = $region37
    $region36: #{text_encoder_forward.1} parent=1 // pred_region
      _
    $region37: #{text_encoder_forward.1} parent=1 // pred_fallthru
      _
    // Predicated region
    $region38: #{text_encoder_forward.1} parent=1 // pred_check
      _
    $region39: #{text_encoder_forward.1} parent=1 // pred_check_branch
      %45 = sbr.rel (0) target = $region41
    $region40: #{text_encoder_forward.1} parent=1 // pred_region
      _
    $region41: #{text_encoder_forward.1} parent=1 // pred_fallthru
      _
    // Predicated region
    $region42: #{text_encoder_forward.1} parent=1 // pred_check
      _
    $region43: #{text_encoder_forward.1} parent=1 // pred_check_branch
      %47 = sbr.rel (0) target = $region45
    $region44: #{text_encoder_forward.1} parent=1 // pred_region
      _
    $region45: #{text_encoder_forward.1} parent=1 // pred_fallthru
      _
    // Predicated region
    $region46: #{text_encoder_forward.1} parent=1 // pred_check
      _
    $region47: #{text_encoder_forward.1} parent=1 // pred_check_branch
      %49 = sbr.rel (0) target = $region49
    $region48: #{text_encoder_forward.1} parent=1 // pred_region
      _
    $region49: #{text_encoder_forward.1} parent=1 // pred_fallthru
      _
    // Predicated region
    $region50: #{text_encoder_forward.1} parent=1 // pred_check
      _
    $region51: #{text_encoder_forward.1} parent=1 // pred_check_branch
      %51 = sbr.rel (0) target = $region53
    $region52: #{text_encoder_forward.1} parent=1 // pred_region
      _
    $region53: #{text_encoder_forward.1} parent=1 // pred_fallthru
      _
    // Predicated region
    $region54: #{text_encoder_forward.1} parent=1 // pred_check
      _
    $region55: #{text_encoder_forward.1} parent=1 // pred_check_branch
      %53 = sbr.rel (0) target = $region57
    $region56: #{text_encoder_forward.1} parent=1 // pred_region
      _
    $region57: #{text_encoder_forward.1} parent=1 // pred_fallthru
      _
    // Predicated region
    $region58: #{text_encoder_forward.1} parent=1 // pred_check
      _
    $region59: #{text_encoder_forward.1} parent=1 // pred_check_branch
      %55 = sbr.rel (0) target = $region61
    $region60: #{text_encoder_forward.1} parent=1 // pred_region
      _
    $region61: #{text_encoder_forward.1} parent=1 // pred_fallthru
      _
    // Predicated region
    $region62: #{text_encoder_forward.1} parent=1 // pred_check
      _
    $region63: #{text_encoder_forward.1} parent=1 // pred_check_branch
      %57 = sbr.rel (0) target = $region65
    $region64: #{text_encoder_forward.1} parent=1 // pred_region
      _
    $region65: #{text_encoder_forward.1} parent=1 // pred_fallthru
      _
    // Predicated region
    $region66: #{text_encoder_forward.1} parent=1 // pred_check
      _
    $region67: #{text_encoder_forward.1} parent=1 // pred_check_branch
      %59 = sbr.rel (0) target = $region69
    $region68: #{text_encoder_forward.1} parent=1 // pred_region
      _
    $region69: #{text_encoder_forward.1} parent=1 // pred_fallthru
      _
    // Predicated region
    $region70: #{text_encoder_forward.1} parent=1 // pred_check
      _
    $region71: #{text_encoder_forward.1} parent=1 // pred_check_branch
      %61 = sbr.rel (0) target = $region73
    $region72: #{text_encoder_forward.1} parent=1 // pred_region
      _
    $region73: #{text_encoder_forward.1} parent=1 // pred_fallthru
      _
    // Predicated region
    $region74: #{text_encoder_forward.1} parent=1 // pred_check
      _
    $region75: #{text_encoder_forward.1} parent=1 // pred_check_branch
      %63 = sbr.rel (0) target = $region77
    $region76: #{text_encoder_forward.1} parent=1 // pred_region
      _
    $region77: #{text_encoder_forward.1} parent=1 // pred_fallthru
      _
    // Predicated region
    $region78: #{text_encoder_forward.1} parent=1 // pred_check
      _
    $region79: #{text_encoder_forward.1} parent=1 // pred_check_branch
      %65 = sbr.rel (0) target = $region81
    $region80: #{text_encoder_forward.1} parent=1 // pred_region
      _
    $region81: #{text_encoder_forward.1} parent=1 // pred_fallthru
      _
    %v66 = vld [vmem:[%s0] sm:$0xff]
    %v67 = vld [vmem:[%s0 + $0x8] sm:$0xff]
    %v68 = vld [vmem:[%s1] sm:$0xff]
    %v69 = vld [vmem:[%s1 + $0x8] sm:$0xff]
    %v70 = vadd.f32 %v66, %v68
    %v71 = vadd.f32 %v67, %v69
    %v72 = vld [vmem:[%s2] sm:$0xff]
    %v73 = vld [vmem:[%s2 + $0x8] sm:$0xff]
    %v74 = vld [vmem:[%s4] sm:$0xff]
    %v75 = vld [vmem:[%s4 + $0x8] sm:$0xff]
    %v76 = vld [vmem:[%s4 + $0x10] sm:$0xff]
    %v77 = vld [vmem:[%s4 + $0x18] sm:$0xff]
    %v78 = vld [vmem:[%s4 + $0x20] sm:$0xff]
    %v79 = vld [vmem:[%s4 + $0x28] sm:$0xff]
    %v80 = vld [vmem:[%s4 + $0x30] sm:$0xff]
    %v81 = vld [vmem:[%s4 + $0x38] sm:$0xff]
    %v82 = vld [vmem:[%s5] sm:$0x1]
    %v83 = vld [vmem:[%s6] sm:$0x1]
    %vm84 = vcmask 261120
    %v85 = vsel %vm84, %v70, 0.0
    %86 = vadd.xlane.f32.xlu0 %v85
    %v87 = vpop.xlane.xlu0 %86
    %v88 = vsel %vm84, %v71, 0.0
    %89 = vadd.xlane.f32.xlu0 %v88
    %v90 = vpop.xlane.xlu0 %89
    %v91 = vmul.f32 %v70, %v70
    %v92 = vmul.f32 %v71, %v71
    %v93 = vsel %vm84, %v91, 0.0
    %94 = vadd.xlane.f32.xlu0 %v93
    %v95 = vpop.xlane.xlu0 %94
    %v96 = vsel %vm84, %v92, 0.0
    %97 = vadd.xlane.f32.xlu0 %v96
    %v98 = vpop.xlane.xlu0 %97
    %v99 = vmul.f32 %v87, 0.03125
    %v100 = vmul.f32 %v90, 0.03125
    %v101 = vmul.f32 %v95, 0.03125
    %v102 = vmul.f32 %v98, 0.03125
    %v103 = vmul.f32 %v99, %v99
    %v104 = vmul.f32 %v100, %v100
    %v105 = vsub.f32 %v101, %v103
    %v106 = vsub.f32 %v102, %v104
    %v107 = vmax.f32 %v105, 0.0
    %v108 = vmax.f32 %v106, 0.0
    %v109 = vsub.f32 %v70, %v99
    %v110 = vsub.f32 %v71, %v100
    %v111 = vadd.f32 %v107, 1e-05
    %v112 = vadd.f32 %v108, 1e-05
    %v113 = vrsqrt.pop %v111
    %v114 = vrsqrt.pop %v112
    %v115 = vmul.f32 %v109, %v113
    %v116 = vmul.f32 %v110, %v114
    %v118 = vlaneseq
    %v119 = vshrl.u32 %v118, 7
    %v120 = vsub.s32 0, %v119
    %v121 = vrot.slane %v82, %v120
    %v123 = vmul.f32 %v115, %v121
    %v124 = vmul.f32 %v116, %v121
    %v126 = vlaneseq
    %v127 = vshrl.u32 %v126, 7
    %v128 = vsub.s32 0, %v127
    %v129 = vrot.slane %v83, %v128
    %v131 = vadd.f32 %v123, %v129
    %v132 = vadd.f32 %v124, %v129
    %v133 = vld [vmem:[%s7] sm:$0xff]
    %v134 = vld [vmem:[%s7 + $0x8] sm:$0xff]
    %v135 = vld [vmem:[%s7 + $0x10] sm:$0xff]
    %v136 = vld [vmem:[%s7 + $0x18] sm:$0xff]
    %v137 = vld [vmem:[%s8] sm:$0x1]
    %v139 = vlaneseq
    %v140 = vshrl.u32 %v139, 7
    %v141 = vsub.s32 0, %v140
    %v142 = vrot.slane %v137, %v141
    %v145 = vsel %vm84, %v131, 0
    %v148 = vsel %vm84, %v132, 0
    %150 = vmatprep.subr.mxu0 0.0
    %151 = vmatpush1.msra.mxu0 %v133
    %152 = vmatprep.subr.mxu0 0.0
    %153 = vmatpush1.msra.mxu0 %v134
    %154 = vmatprep.subr.mxu0 0.0
    %155 = vmatpush1.msra.mxu0 %v135
    %156 = vmatprep.subr.mxu0 0.0
    %157 = vmatpush1.msra.mxu0 %v136
    %158 = vmatprep.subr.mxu0 0.0
    %159 = vmatpush1.msra.mxu0 0.0
    %160 = vmatprep.subr.mxu0 0.0
    %161 = vmatpush1.msra.mxu0 0.0
    %162 = vmatprep.subr.mxu0 0.0
    %163 = vmatpush1.msra.mxu0 0.0
    %164 = vmatprep.subr.mxu0 0.0
    %165 = vmatpush1.msra.mxu0 0.0
    %166 = vmatprep.subr.mxu0 0.0
    %167 = vmatpush1.msra.mxu0 0.0
    %168 = vmatprep.subr.mxu0 0.0
    %169 = vmatpush1.msra.mxu0 0.0
    %170 = vmatprep.subr.mxu0 0.0
    %171 = vmatpush1.msra.mxu0 0.0
    %172 = vmatprep.subr.mxu0 0.0
    %173 = vmatpush1.msra.mxu0 0.0
    %174 = vmatprep.subr.mxu0 0.0
    %175 = vmatpush1.msra.mxu0 0.0
    %176 = vmatprep.subr.mxu0 0.0
    %177 = vmatpush1.msra.mxu0 0.0
    %178 = vmatprep.subr.mxu0 0.0
    %179 = vmatpush1.msra.mxu0 0.0
    %180 = vmatprep.subr.mxu0 0.0
    %181 = vmatpush1.msra.mxu0 0.0
    %182 = vmatprep.subr.mxu0 0.0
    %183 = vmatpush1.msra.mxu0 0.0
    %184 = vmatprep.subr.mxu0 0.0
    %185 = vmatpush1.msra.mxu0 0.0
    %186 = vmatprep.subr.mxu0 0.0
    %187 = vmatpush1.msra.mxu0 0.0
    %188 = vmatprep.subr.mxu0 0.0
    %189 = vmatpush1.msra.mxu0 0.0
    %190 = vmatprep.subr.mxu0 0.0
    %191 = vmatpush1.msra.mxu0 0.0
    %192 = vmatprep.subr.mxu0 0.0
    %193 = vmatpush1.msra.mxu0 0.0
    %194 = vmatprep.subr.mxu0 0.0
    %195 = vmatpush1.msra.mxu0 0.0
    %196 = vmatprep.subr.mxu0 0.0
    %197 = vmatpush1.msra.mxu0 0.0
    %198 = vmatprep.subr.mxu0 0.0
    %199 = vmatpush1.msra.mxu0 0.0
    %200 = vmatprep.subr.mxu0 0.0
    %201 = vmatpush1.msra.mxu0 0.0
    %202 = vmatprep.subr.mxu0 0.0
    %203 = vmatpush1.msra.mxu0 0.0
    %204 = vmatprep.subr.mxu0 0.0
    %205 = vmatpush1.msra.mxu0 0.0
    %206 = vmatprep.subr.mxu0 0.0
    %207 = vmatpush1.msra.mxu0 0.0
    %208 = vmatprep.subr.mxu0 0.0
    %209 = vmatpush1.msra.mxu0 0.0
    %210 = vmatprep.subr.mxu0 0.0
    %211 = vmatpush1.msra.mxu0 0.0
    %212 = vmatprep.subr.mxu0 0.0
    %213 = vmatpush1.msra.mxu0 0.0
    %214 = vmatprep.mubr.f32.mxu0 0.0
    %215 = vmatmul.mubr.f32.gmra.mrb[0].mxu0 %v145
    %v216 = vpop.f32.mrb[0].mxu0
    %v217 = vadd.f32 %v142, %v216
    %v218 = vpop.f32.mrb[0].mxu0
    %219 = vmatprep.mubr.f32.mxu0 0.0
    %220 = vmatmul.mubr.f32.gmra.mrb[0].mxu0 %v148
    %v221 = vpop.f32.mrb[0].mxu0
    %v222 = vadd.f32 %v142, %v221
    %v223 = vpop.f32.mrb[0].mxu0
    %224 = vdwg.mxu0
    %v225 = vmul.f32 %v217, 0.35355338
    %v226 = vmul.f32 %v222, 0.35355338
    %229 = vrot.lane.b32.xlu0 %v217, 96
    %v230 = vpop.permute.xlu0 %229
    %231 = vrot.lane.b32.xlu0 %v222, 96
    %v232 = vpop.permute.xlu0 %231
    %vm233 = vcmask 64512
    %v235 = vsel %vm233, %v225, 0
    %v238 = vsel %vm233, %v226, 0
    %v240 = vsel %vm233, %v230, 0
    %v242 = vsel %vm233, %v232, 0
    %244 = vmatprep.subr.mxu0 0.0
    %245 = vmatpush1.xpose.msra.mxu0 %v240
    %246 = vmatprep.subr.mxu0 0.0
    %247 = vmatpush1.xpose.msra.mxu0 %v242
    %248 = vmatprep.subr.mxu0 0.0
    %249 = vmatpush1.xpose.msra.mxu0 0.0
    %250 = vmatprep.subr.mxu0 0.0
    %251 = vmatpush1.xpose.msra.mxu0 0.0
    %252 = vmatprep.subr.mxu0 0.0
    %253 = vmatpush1.xpose.msra.mxu0 0.0
    %254 = vmatprep.subr.mxu0 0.0
    %255 = vmatpush1.xpose.msra.mxu0 0.0
    %256 = vmatprep.subr.mxu0 0.0
    %257 = vmatpush1.xpose.msra.mxu0 0.0
    %258 = vmatprep.subr.mxu0 0.0
    %259 = vmatpush1.xpose.msra.mxu0 0.0
    %260 = vmatprep.subr.mxu0 0.0
    %261 = vmatpush1.xpose.msra.mxu0 0.0
    %262 = vmatprep.subr.mxu0 0.0
    %263 = vmatpush1.xpose.msra.mxu0 0.0
    %264 = vmatprep.subr.mxu0 0.0
    %265 = vmatpush1.xpose.msra.mxu0 0.0
    %266 = vmatprep.subr.mxu0 0.0
    %267 = vmatpush1.xpose.msra.mxu0 0.0
    %268 = vmatprep.subr.mxu0 0.0
    %269 = vmatpush1.xpose.msra.mxu0 0.0
    %270 = vmatprep.subr.mxu0 0.0
    %271 = vmatpush1.xpose.msra.mxu0 0.0
    %272 = vmatprep.subr.mxu0 0.0
    %273 = vmatpush1.xpose.msra.mxu0 0.0
    %274 = vmatprep.subr.mxu0 0.0
    %275 = vmatpush1.xpose.msra.mxu0 0.0
    %276 = vmatprep.subr.mxu0 0.0
    %277 = vmatpush1.xpose.msra.mxu0 0.0
    %278 = vmatprep.subr.mxu0 0.0
    %279 = vmatpush1.xpose.msra.mxu0 0.0
    %280 = vmatprep.subr.mxu0 0.0
    %281 = vmatpush1.xpose.msra.mxu0 0.0
    %282 = vmatprep.subr.mxu0 0.0
    %283 = vmatpush1.xpose.msra.mxu0 0.0
    %284 = vmatprep.subr.mxu0 0.0
    %285 = vmatpush1.xpose.msra.mxu0 0.0
    %286 = vmatprep.subr.mxu0 0.0
    %287 = vmatpush1.xpose.msra.mxu0 0.0
    %288 = vmatprep.subr.mxu0 0.0
    %289 = vmatpush1.xpose.msra.mxu0 0.0
    %290 = vmatprep.subr.mxu0 0.0
    %291 = vmatpush1.xpose.msra.mxu0 0.0
    %292 = vmatprep.subr.mxu0 0.0
    %293 = vmatpush1.xpose.msra.mxu0 0.0
    %294 = vmatprep.subr.mxu0 0.0
    %295 = vmatpush1.xpose.msra.mxu0 0.0
    %296 = vmatprep.subr.mxu0 0.0
    %297 = vmatpush1.xpose.msra.mxu0 0.0
    %298 = vmatprep.subr.mxu0 0.0
    %299 = vmatpush1.xpose.msra.mxu0 0.0
    %300 = vmatprep.subr.mxu0 0.0
    %301 = vmatpush1.xpose.msra.mxu0 0.0
    %302 = vmatprep.subr.mxu0 0.0
    %303 = vmatpush1.xpose.msra.mxu0 0.0
    %304 = vmatprep.subr.mxu0 0.0
    %305 = vmatpush1.xpose.msra.mxu0 0.0
    %306 = vmatprep.subr.mxu0 0.0
    %307 = vmatpush1.xpose.msra.mxu0 0.0
    %308 = vmatprep.mubr.f32.mxu0 0.0
    %309 = vmatmul.mubr.f32.gmra.mrb[0].mxu0 %v235
    %v310 = vpop.f32.mrb[0].mxu0
    %v311 = vadd.f32 %v72, %v310
    %v312 = vpop.f32.mrb[0].mxu0
    %313 = vmatprep.mubr.f32.mxu0 0.0
    %314 = vmatmul.mubr.f32.gmra.mrb[0].mxu0 %v238
    %v315 = vpop.f32.mrb[0].mxu0
    %v316 = vadd.f32 %v73, %v315
    %v317 = vpop.f32.mrb[0].mxu0
    %318 = vdwg.mxu0
    %319 = vrot.lane.b32.xlu0 %v225, 120
    %v320 = vpop.permute.xlu0 %319
    %321 = vrot.lane.b32.xlu0 %v226, 120
    %v322 = vpop.permute.xlu0 %321
    %323 = vrot.lane.b32.xlu0 %v217, 88
    %v324 = vpop.permute.xlu0 %323
    %325 = vrot.lane.b32.xlu0 %v222, 88
    %v326 = vpop.permute.xlu0 %325
    %v327 = vsel %vm233, %v320, 0
    %v329 = vsel %vm233, %v322, 0
    %v331 = vsel %vm233, %v324, 0
    %v333 = vsel %vm233, %v326, 0
    %335 = vmatprep.subr.mxu0 0.0
    %336 = vmatpush1.xpose.msra.mxu0 %v331
    %337 = vmatprep.subr.mxu0 0.0
    %338 = vmatpush1.xpose.msra.mxu0 %v333
    %339 = vmatprep.subr.mxu0 0.0
    %340 = vmatpush1.xpose.msra.mxu0 0.0
    %341 = vmatprep.subr.mxu0 0.0
    %342 = vmatpush1.xpose.msra.mxu0 0.0
    %343 = vmatprep.subr.mxu0 0.0
    %344 = vmatpush1.xpose.msra.mxu0 0.0
    %345 = vmatprep.subr.mxu0 0.0
    %346 = vmatpush1.xpose.msra.mxu0 0.0
    %347 = vmatprep.subr.mxu0 0.0
    %348 = vmatpush1.xpose.msra.mxu0 0.0
    %349 = vmatprep.subr.mxu0 0.0
    %350 = vmatpush1.xpose.msra.mxu0 0.0
    %351 = vmatprep.subr.mxu0 0.0
    %352 = vmatpush1.xpose.msra.mxu0 0.0
    %353 = vmatprep.subr.mxu0 0.0
    %354 = vmatpush1.xpose.msra.mxu0 0.0
    %355 = vmatprep.subr.mxu0 0.0
    %356 = vmatpush1.xpose.msra.mxu0 0.0
    %357 = vmatprep.subr.mxu0 0.0
    %358 = vmatpush1.xpose.msra.mxu0 0.0
    %359 = vmatprep.subr.mxu0 0.0
    %360 = vmatpush1.xpose.msra.mxu0 0.0
    %361 = vmatprep.subr.mxu0 0.0
    %362 = vmatpush1.xpose.msra.mxu0 0.0
    %363 = vmatprep.subr.mxu0 0.0
    %364 = vmatpush1.xpose.msra.mxu0 0.0
    %365 = vmatprep.subr.mxu0 0.0
    %366 = vmatpush1.xpose.msra.mxu0 0.0
    %367 = vmatprep.subr.mxu0 0.0
    %368 = vmatpush1.xpose.msra.mxu0 0.0
    %369 = vmatprep.subr.mxu0 0.0
    %370 = vmatpush1.xpose.msra.mxu0 0.0
    %371 = vmatprep.subr.mxu0 0.0
    %372 = vmatpush1.xpose.msra.mxu0 0.0
    %373 = vmatprep.subr.mxu0 0.0
    %374 = vmatpush1.xpose.msra.mxu0 0.0
    %375 = vmatprep.subr.mxu0 0.0
    %376 = vmatpush1.xpose.msra.mxu0 0.0
    %377 = vmatprep.subr.mxu0 0.0
    %378 = vmatpush1.xpose.msra.mxu0 0.0
    %379 = vmatprep.subr.mxu0 0.0
    %380 = vmatpush1.xpose.msra.mxu0 0.0
    %381 = vmatprep.subr.mxu0 0.0
    %382 = vmatpush1.xpose.msra.mxu0 0.0
    %383 = vmatprep.subr.mxu0 0.0
    %384 = vmatpush1.xpose.msra.mxu0 0.0
    %385 = vmatprep.subr.mxu0 0.0
    %386 = vmatpush1.xpose.msra.mxu0 0.0
    %387 = vmatprep.subr.mxu0 0.0
    %388 = vmatpush1.xpose.msra.mxu0 0.0
    %389 = vmatprep.subr.mxu0 0.0
    %390 = vmatpush1.xpose.msra.mxu0 0.0
    %391 = vmatprep.subr.mxu0 0.0
    %392 = vmatpush1.xpose.msra.mxu0 0.0
    %393 = vmatprep.subr.mxu0 0.0
    %394 = vmatpush1.xpose.msra.mxu0 0.0
    %395 = vmatprep.subr.mxu0 0.0
    %396 = vmatpush1.xpose.msra.mxu0 0.0
    %397 = vmatprep.subr.mxu0 0.0
    %398 = vmatpush1.xpose.msra.mxu0 0.0
    %399 = vmatprep.mubr.f32.mxu0 0.0
    %400 = vmatmul.mubr.f32.gmra.mrb[0].mxu0 %v327
    %v401 = vpop.f32.mrb[0].mxu0
    %v402 = vadd.f32 %v72, %v401
    %v403 = vpop.f32.mrb[0].mxu0
    %404 = vmatprep.mubr.f32.mxu0 0.0
    %405 = vmatmul.mubr.f32.gmra.mrb[0].mxu0 %v329
    %v406 = vpop.f32.mrb[0].mxu0
    %v407 = vadd.f32 %v73, %v406
    %v408 = vpop.f32.mrb[0].mxu0
    %409 = vdwg.mxu0
    %410 = vrot.lane.b32.xlu0 %v225, 112
    %v411 = vpop.permute.xlu0 %410
    %412 = vrot.lane.b32.xlu0 %v226, 112
    %v413 = vpop.permute.xlu0 %412
    %414 = vrot.lane.b32.xlu0 %v217, 80
    %v415 = vpop.permute.xlu0 %414
    %416 = vrot.lane.b32.xlu0 %v222, 80
    %v417 = vpop.permute.xlu0 %416
    %v418 = vsel %vm233, %v411, 0
    %v420 = vsel %vm233, %v413, 0
    %v422 = vsel %vm233, %v415, 0
    %v424 = vsel %vm233, %v417, 0
    %426 = vmatprep.subr.mxu0 0.0
    %427 = vmatpush1.xpose.msra.mxu0 %v422
    %428 = vmatprep.subr.mxu0 0.0
    %429 = vmatpush1.xpose.msra.mxu0 %v424
    %430 = vmatprep.subr.mxu0 0.0
    %431 = vmatpush1.xpose.msra.mxu0 0.0
    %432 = vmatprep.subr.mxu0 0.0
    %433 = vmatpush1.xpose.msra.mxu0 0.0
    %434 = vmatprep.subr.mxu0 0.0
    %435 = vmatpush1.xpose.msra.mxu0 0.0
    %436 = vmatprep.subr.mxu0 0.0
    %437 = vmatpush1.xpose.msra.mxu0 0.0
    %438 = vmatprep.subr.mxu0 0.0
    %439 = vmatpush1.xpose.msra.mxu0 0.0
    %440 = vmatprep.subr.mxu0 0.0
    %441 = vmatpush1.xpose.msra.mxu0 0.0
    %442 = vmatprep.subr.mxu0 0.0
    %443 = vmatpush1.xpose.msra.mxu0 0.0
    %444 = vmatprep.subr.mxu0 0.0
    %445 = vmatpush1.xpose.msra.mxu0 0.0
    %446 = vmatprep.subr.mxu0 0.0
    %447 = vmatpush1.xpose.msra.mxu0 0.0
    %448 = vmatprep.subr.mxu0 0.0
    %449 = vmatpush1.xpose.msra.mxu0 0.0
    %450 = vmatprep.subr.mxu0 0.0
    %451 = vmatpush1.xpose.msra.mxu0 0.0
    %452 = vmatprep.subr.mxu0 0.0
    %453 = vmatpush1.xpose.msra.mxu0 0.0
    %454 = vmatprep.subr.mxu0 0.0
    %455 = vmatpush1.xpose.msra.mxu0 0.0
    %456 = vmatprep.subr.mxu0 0.0
    %457 = vmatpush1.xpose.msra.mxu0 0.0
    %458 = vmatprep.subr.mxu0 0.0
    %459 = vmatpush1.xpose.msra.mxu0 0.0
    %460 = vmatprep.subr.mxu0 0.0
    %461 = vmatpush1.xpose.msra.mxu0 0.0
    %462 = vmatprep.subr.mxu0 0.0
    %463 = vmatpush1.xpose.msra.mxu0 0.0
    %464 = vmatprep.subr.mxu0 0.0
    %465 = vmatpush1.xpose.msra.mxu0 0.0
    %466 = vmatprep.subr.mxu0 0.0
    %467 = vmatpush1.xpose.msra.mxu0 0.0
    %468 = vmatprep.subr.mxu0 0.0
    %469 = vmatpush1.xpose.msra.mxu0 0.0
    %470 = vmatprep.subr.mxu0 0.0
    %471 = vmatpush1.xpose.msra.mxu0 0.0
    %472 = vmatprep.subr.mxu0 0.0
    %473 = vmatpush1.xpose.msra.mxu0 0.0
    %474 = vmatprep.subr.mxu0 0.0
    %475 = vmatpush1.xpose.msra.mxu0 0.0
    %476 = vmatprep.subr.mxu0 0.0
    %477 = vmatpush1.xpose.msra.mxu0 0.0
    %478 = vmatprep.subr.mxu0 0.0
    %479 = vmatpush1.xpose.msra.mxu0 0.0
    %480 = vmatprep.subr.mxu0 0.0
    %481 = vmatpush1.xpose.msra.mxu0 0.0
    %482 = vmatprep.subr.mxu0 0.0
    %483 = vmatpush1.xpose.msra.mxu0 0.0
    %484 = vmatprep.subr.mxu0 0.0
    %485 = vmatpush1.xpose.msra.mxu0 0.0
    %486 = vmatprep.subr.mxu0 0.0
    %487 = vmatpush1.xpose.msra.mxu0 0.0
    %488 = vmatprep.subr.mxu0 0.0
    %489 = vmatpush1.xpose.msra.mxu0 0.0
    %490 = vmatprep.mubr.f32.mxu0 0.0
    %491 = vmatmul.mubr.f32.gmra.mrb[0].mxu0 %v418
    %v492 = vpop.f32.mrb[0].mxu0
    %v493 = vadd.f32 %v72, %v492
    %v494 = vpop.f32.mrb[0].mxu0
    %495 = vmatprep.mubr.f32.mxu0 0.0
    %496 = vmatmul.mubr.f32.gmra.mrb[0].mxu0 %v420
    %v497 = vpop.f32.mrb[0].mxu0
    %v498 = vadd.f32 %v73, %v497
    %v499 = vpop.f32.mrb[0].mxu0
    %500 = vdwg.mxu0
    %501 = vrot.lane.b32.xlu0 %v225, 104
    %v502 = vpop.permute.xlu0 %501
    %503 = vrot.lane.b32.xlu0 %v226, 104
    %v504 = vpop.permute.xlu0 %503
    %505 = vrot.lane.b32.xlu0 %v217, 72
    %v506 = vpop.permute.xlu0 %505
    %507 = vrot.lane.b32.xlu0 %v222, 72
    %v508 = vpop.permute.xlu0 %507
    %v509 = vsel %vm233, %v502, 0
    %v511 = vsel %vm233, %v504, 0
    %v513 = vsel %vm233, %v506, 0
    %v515 = vsel %vm233, %v508, 0
    %517 = vmatprep.subr.mxu0 0.0
    %518 = vmatpush1.xpose.msra.mxu0 %v513
    %519 = vmatprep.subr.mxu0 0.0
    %520 = vmatpush1.xpose.msra.mxu0 %v515
    %521 = vmatprep.subr.mxu0 0.0
    %522 = vmatpush1.xpose.msra.mxu0 0.0
    %523 = vmatprep.subr.mxu0 0.0
    %524 = vmatpush1.xpose.msra.mxu0 0.0
    %525 = vmatprep.subr.mxu0 0.0
    %526 = vmatpush1.xpose.msra.mxu0 0.0
    %527 = vmatprep.subr.mxu0 0.0
    %528 = vmatpush1.xpose.msra.mxu0 0.0
    %529 = vmatprep.subr.mxu0 0.0
    %530 = vmatpush1.xpose.msra.mxu0 0.0
    %531 = vmatprep.subr.mxu0 0.0
    %532 = vmatpush1.xpose.msra.mxu0 0.0
    %533 = vmatprep.subr.mxu0 0.0
    %534 = vmatpush1.xpose.msra.mxu0 0.0
    %535 = vmatprep.subr.mxu0 0.0
    %536 = vmatpush1.xpose.msra.mxu0 0.0
    %537 = vmatprep.subr.mxu0 0.0
    %538 = vmatpush1.xpose.msra.mxu0 0.0
    %539 = vmatprep.subr.mxu0 0.0
    %540 = vmatpush1.xpose.msra.mxu0 0.0
    %541 = vmatprep.subr.mxu0 0.0
    %542 = vmatpush1.xpose.msra.mxu0 0.0
    %543 = vmatprep.subr.mxu0 0.0
    %544 = vmatpush1.xpose.msra.mxu0 0.0
    %545 = vmatprep.subr.mxu0 0.0
    %546 = vmatpush1.xpose.msra.mxu0 0.0
    %547 = vmatprep.subr.mxu0 0.0
    %548 = vmatpush1.xpose.msra.mxu0 0.0
    %549 = vmatprep.subr.mxu0 0.0
    %550 = vmatpush1.xpose.msra.mxu0 0.0
    %551 = vmatprep.subr.mxu0 0.0
    %552 = vmatpush1.xpose.msra.mxu0 0.0
    %553 = vmatprep.subr.mxu0 0.0
    %554 = vmatpush1.xpose.msra.mxu0 0.0
    %555 = vmatprep.subr.mxu0 0.0
    %556 = vmatpush1.xpose.msra.mxu0 0.0
    %557 = vmatprep.subr.mxu0 0.0
    %558 = vmatpush1.xpose.msra.mxu0 0.0
    %559 = vmatprep.subr.mxu0 0.0
    %560 = vmatpush1.xpose.msra.mxu0 0.0
    %561 = vmatprep.subr.mxu0 0.0
    %562 = vmatpush1.xpose.msra.mxu0 0.0
    %563 = vmatprep.subr.mxu0 0.0
    %564 = vmatpush1.xpose.msra.mxu0 0.0
    %565 = vmatprep.subr.mxu0 0.0
    %566 = vmatpush1.xpose.msra.mxu0 0.0
    %567 = vmatprep.subr.mxu0 0.0
    %568 = vmatpush1.xpose.msra.mxu0 0.0
    %569 = vmatprep.subr.mxu0 0.0
    %570 = vmatpush1.xpose.msra.mxu0 0.0
    %571 = vmatprep.subr.mxu0 0.0
    %572 = vmatpush1.xpose.msra.mxu0 0.0
    %573 = vmatprep.subr.mxu0 0.0
    %574 = vmatpush1.xpose.msra.mxu0 0.0
    %575 = vmatprep.subr.mxu0 0.0
    %576 = vmatpush1.xpose.msra.mxu0 0.0
    %577 = vmatprep.subr.mxu0 0.0
    %578 = vmatpush1.xpose.msra.mxu0 0.0
    %579 = vmatprep.subr.mxu0 0.0
    %580 = vmatpush1.xpose.msra.mxu0 0.0
    %581 = vmatprep.mubr.f32.mxu0 0.0
    %582 = vmatmul.mubr.f32.gmra.mrb[0].mxu0 %v509
    %v583 = vpop.f32.mrb[0].mxu0
    %v584 = vadd.f32 %v72, %v583
    %v585 = vpop.f32.mrb[0].mxu0
    %586 = vmatprep.mubr.f32.mxu0 0.0
    %587 = vmatmul.mubr.f32.gmra.mrb[0].mxu0 %v511
    %v588 = vpop.f32.mrb[0].mxu0
    %v589 = vadd.f32 %v73, %v588
    %v590 = vpop.f32.mrb[0].mxu0
    %591 = vdwg.mxu0
    %594 = vrot.lane.b32.xlu0 %v402, 16
    %v595 = vpop.permute.xlu0 %594
    %596 = vrot.lane.b32.xlu0 %v407, 16
    %v597 = vpop.permute.xlu0 %596
    %602 = vrot.lane.b32.xlu0 %v493, 32
    %v603 = vpop.permute.xlu0 %602
    %604 = vrot.lane.b32.xlu0 %v498, 32
    %v605 = vpop.permute.xlu0 %604
    %610 = vrot.lane.b32.xlu0 %v584, 48
    %v611 = vpop.permute.xlu0 %610
    %612 = vrot.lane.b32.xlu0 %v589, 48
    %v613 = vpop.permute.xlu0 %612
    %vm616 = vcmask 130048
    %v617 = vsel %vm616, %v311, %v595
    %v618 = vsel %vm616, %v316, %v597
    %v619 = vsel %vm84, %v617, %v603
    %v620 = vsel %vm84, %v618, %v605
    %vm621 = vcmask 392192
    %v622 = vsel %vm621, %v619, %v611
    %v623 = vsel %vm621, %v620, %v613
    %vm624 = vcmask 523264
    %v625 = vsel %vm624, %v622, -inf
    %626 = vmax.xlane.f32.xlu0 %v625
    %v627 = vpop.xlane.xlu0 %626
    %v628 = vsel %vm624, %v623, -inf
    %629 = vmax.xlane.f32.xlu0 %v628
    %v630 = vpop.xlane.xlu0 %629
    %v631 = vsub.f32 %v622, %v627
    %v632 = vsub.f32 %v623, %v630
    %v633 = vmul.f32 %v631, 1.442695
    %v634 = vpow.pop %v633
    %v635 = vmul.f32 %v632, 1.442695
    %v636 = vpow.pop %v635
    %v638 = vsel %vm624, %v634, 0
    %v641 = vsel %vm624, %v636, 0
    %643 = vmatprep.subr.mxu0 0.0
    %644 = vmatpush1.msra.mxu0 %v74
    %645 = vmatprep.subr.mxu0 0.0
    %646 = vmatpush1.msra.mxu0 %v75
    %647 = vmatprep.subr.mxu0 0.0
    %648 = vmatpush1.msra.mxu0 %v76
    %649 = vmatprep.subr.mxu0 0.0
    %650 = vmatpush1.msra.mxu0 %v77
    %651 = vmatprep.subr.mxu0 0.0
    %652 = vmatpush1.msra.mxu0 %v78
    %653 = vmatprep.subr.mxu0 0.0
    %654 = vmatpush1.msra.mxu0 %v79
    %655 = vmatprep.subr.mxu0 0.0
    %656 = vmatpush1.msra.mxu0 %v80
    %657 = vmatprep.subr.mxu0 0.0
    %658 = vmatpush1.msra.mxu0 %v81
    %659 = vmatprep.subr.mxu0 0.0
    %660 = vmatpush1.msra.mxu0 0.0
    %661 = vmatprep.subr.mxu0 0.0
    %662 = vmatpush1.msra.mxu0 0.0
    %663 = vmatprep.subr.mxu0 0.0
    %664 = vmatpush1.msra.mxu0 0.0
    %665 = vmatprep.subr.mxu0 0.0
    %666 = vmatpush1.msra.mxu0 0.0
    %667 = vmatprep.subr.mxu0 0.0
    %668 = vmatpush1.msra.mxu0 0.0
    %669 = vmatprep.subr.mxu0 0.0
    %670 = vmatpush1.msra.mxu0 0.0
    %671 = vmatprep.subr.mxu0 0.0
    %672 = vmatpush1.msra.mxu0 0.0
    %673 = vmatprep.subr.mxu0 0.0
    %674 = vmatpush1.msra.mxu0 0.0
    %675 = vmatprep.subr.mxu0 0.0
    %676 = vmatpush1.msra.mxu0 0.0
    %677 = vmatprep.subr.mxu0 0.0
    %678 = vmatpush1.msra.mxu0 0.0
    %679 = vmatprep.subr.mxu0 0.0
    %680 = vmatpush1.msra.mxu0 0.0
    %681 = vmatprep.subr.mxu0 0.0
    %682 = vmatpush1.msra.mxu0 0.0
    %683 = vmatprep.subr.mxu0 0.0
    %684 = vmatpush1.msra.mxu0 0.0
    %685 = vmatprep.subr.mxu0 0.0
    %686 = vmatpush1.msra.mxu0 0.0
    %687 = vmatprep.subr.mxu0 0.0
    %688 = vmatpush1.msra.mxu0 0.0
    %689 = vmatprep.subr.mxu0 0.0
    %690 = vmatpush1.msra.mxu0 0.0
    %691 = vmatprep.subr.mxu0 0.0
    %692 = vmatpush1.msra.mxu0 0.0
    %693 = vmatprep.subr.mxu0 0.0
    %694 = vmatpush1.msra.mxu0 0.0
    %695 = vmatprep.subr.mxu0 0.0
    %696 = vmatpush1.msra.mxu0 0.0
    %697 = vmatprep.subr.mxu0 0.0
    %698 = vmatpush1.msra.mxu0 0.0
    %699 = vmatprep.subr.mxu0 0.0
    %700 = vmatpush1.msra.mxu0 0.0
    %701 = vmatprep.subr.mxu0 0.0
    %702 = vmatpush1.msra.mxu0 0.0
    %703 = vmatprep.subr.mxu0 0.0
    %704 = vmatpush1.msra.mxu0 0.0
    %705 = vmatprep.subr.mxu0 0.0
    %706 = vmatpush1.msra.mxu0 0.0
    %707 = vmatprep.mubr.f32.mxu0 0.0
    %708 = vmatmul.mubr.f32.gmra.mrb[0].mxu0 %v638
    %v709 = vpop.f32.mrb[0].mxu0
    %v710 = vadd.f32 0.0, %v709
    %v711 = vpop.f32.mrb[0].mxu0
    %712 = vmatprep.mubr.f32.mxu0 0.0
    %713 = vmatmul.mubr.f32.gmra.mrb[0].mxu0 %v641
    %v714 = vpop.f32.mrb[0].mxu0
    %v715 = vadd.f32 0.0, %v714
    %v716 = vpop.f32.mrb[0].mxu0
    %717 = vdwg.mxu0
    %v718 = vrcp.pop %v710
    %v719 = vrcp.pop %v715
    %v720 = vld [vmem:[%s9] sm:$0xff]
    %v721 = vld [vmem:[%s9 + $0x8] sm:$0xff]
    %v722 = vld [vmem:[%s9 + $0x10] sm:$0xff]
    %v723 = vld [vmem:[%s9 + $0x18] sm:$0xff]
    %724 = vrot.lane.b32.xlu0 %v217, 64
    %v725 = vpop.permute.xlu0 %724
    %726 = vrot.lane.b32.xlu0 %v222, 64
    %v727 = vpop.permute.xlu0 %726
    %v730 = vsel %vm616, %v634, 0
    %v732 = vsel %vm616, %v636, 0
    %734 = vmatprep.subr.mxu0 0.0
    %735 = vmatpush1.msra.mxu0 %v725
    %736 = vmatprep.subr.mxu0 0.0
    %737 = vmatpush1.msra.mxu0 %v727
    %738 = vmatprep.subr.mxu0 0.0
    %739 = vmatpush1.msra.mxu0 0.0
    %740 = vmatprep.subr.mxu0 0.0
    %741 = vmatpush1.msra.mxu0 0.0
    %742 = vmatprep.subr.mxu0 0.0
    %743 = vmatpush1.msra.mxu0 0.0
    %744 = vmatprep.subr.mxu0 0.0
    %745 = vmatpush1.msra.mxu0 0.0
    %746 = vmatprep.subr.mxu0 0.0
    %747 = vmatpush1.msra.mxu0 0.0
    %748 = vmatprep.subr.mxu0 0.0
    %749 = vmatpush1.msra.mxu0 0.0
    %750 = vmatprep.subr.mxu0 0.0
    %751 = vmatpush1.msra.mxu0 0.0
    %752 = vmatprep.subr.mxu0 0.0
    %753 = vmatpush1.msra.mxu0 0.0
    %754 = vmatprep.subr.mxu0 0.0
    %755 = vmatpush1.msra.mxu0 0.0
    %756 = vmatprep.subr.mxu0 0.0
    %757 = vmatpush1.msra.mxu0 0.0
    %758 = vmatprep.subr.mxu0 0.0
    %759 = vmatpush1.msra.mxu0 0.0
    %760 = vmatprep.subr.mxu0 0.0
    %761 = vmatpush1.msra.mxu0 0.0
    %762 = vmatprep.subr.mxu0 0.0
    %763 = vmatpush1.msra.mxu0 0.0
    %764 = vmatprep.subr.mxu0 0.0
    %765 = vmatpush1.msra.mxu0 0.0
    %766 = vmatprep.subr.mxu0 0.0
    %767 = vmatpush1.msra.mxu0 0.0
    %768 = vmatprep.subr.mxu0 0.0
    %769 = vmatpush1.msra.mxu0 0.0
    %770 = vmatprep.subr.mxu0 0.0
    %771 = vmatpush1.msra.mxu0 0.0
    %772 = vmatprep.subr.mxu0 0.0
    %773 = vmatpush1.msra.mxu0 0.0
    %774 = vmatprep.subr.mxu0 0.0
    %775 = vmatpush1.msra.mxu0 0.0
    %776 = vmatprep.subr.mxu0 0.0
    %777 = vmatpush1.msra.mxu0 0.0
    %778 = vmatprep.subr.mxu0 0.0
    %779 = vmatpush1.msra.mxu0 0.0
    %780 = vmatprep.subr.mxu0 0.0
    %781 = vmatpush1.msra.mxu0 0.0
    %782 = vmatprep.subr.mxu0 0.0
    %783 = vmatpush1.msra.mxu0 0.0
    %784 = vmatprep.subr.mxu0 0.0
    %785 = vmatpush1.msra.mxu0 0.0
    %786 = vmatprep.subr.mxu0 0.0
    %787 = vmatpush1.msra.mxu0 0.0
    %788 = vmatprep.subr.mxu0 0.0
    %789 = vmatpush1.msra.mxu0 0.0
    %790 = vmatprep.subr.mxu0 0.0
    %791 = vmatpush1.msra.mxu0 0.0
    %792 = vmatprep.subr.mxu0 0.0
    %793 = vmatpush1.msra.mxu0 0.0
    %794 = vmatprep.subr.mxu0 0.0
    %795 = vmatpush1.msra.mxu0 0.0
    %796 = vmatprep.subr.mxu0 0.0
    %797 = vmatpush1.msra.mxu0 0.0
    %798 = vmatprep.mubr.f32.mxu0 0.0
    %799 = vmatmul.mubr.f32.gmra.mrb[0].mxu0 %v730
    %v800 = vpop.f32.mrb[0].mxu0
    %v801 = vadd.f32 0.0, %v800
    %v802 = vpop.f32.mrb[0].mxu0
    %803 = vmatprep.mubr.f32.mxu0 0.0
    %804 = vmatmul.mubr.f32.gmra.mrb[0].mxu0 %v732
    %v805 = vpop.f32.mrb[0].mxu0
    %v806 = vadd.f32 0.0, %v805
    %v807 = vpop.f32.mrb[0].mxu0
    %808 = vdwg.mxu0
    %810 = vset.pattern.permute.xlu0 0
    %811 = vperm.xlu0 %810, %v718
    %v812 = vpop.permute.xlu0 %811
    %815 = vset.pattern.permute.xlu0 0
    %816 = vperm.xlu0 %815, %v719
    %v817 = vpop.permute.xlu0 %816
    %v819 = vmul.f32 %v801, %v812
    %v820 = vmul.f32 %v806, %v817
    %821 = vrot.lane.b32.xlu0 %v634, 112
    %v822 = vpop.permute.xlu0 %821
    %823 = vrot.lane.b32.xlu0 %v636, 112
    %v824 = vpop.permute.xlu0 %823
    %825 = vrot.lane.b32.xlu0 %v217, 56
    %v826 = vpop.permute.xlu0 %825
    %827 = vrot.lane.b32.xlu0 %v222, 56
    %v828 = vpop.permute.xlu0 %827
    %v831 = vsel %vm616, %v822, 0
    %v833 = vsel %vm616, %v824, 0
    %835 = vmatprep.subr.mxu0 0.0
    %836 = vmatpush1.msra.mxu0 %v826
    %837 = vmatprep.subr.mxu0 0.0
    %838 = vmatpush1.msra.mxu0 %v828
    %839 = vmatprep.subr.mxu0 0.0
    %840 = vmatpush1.msra.mxu0 0.0
    %841 = vmatprep.subr.mxu0 0.0
    %842 = vmatpush1.msra.mxu0 0.0
    %843 = vmatprep.subr.mxu0 0.0
    %844 = vmatpush1.msra.mxu0 0.0
    %845 = vmatprep.subr.mxu0 0.0
    %846 = vmatpush1.msra.mxu0 0.0
    %847 = vmatprep.subr.mxu0 0.0
    %848 = vmatpush1.msra.mxu0 0.0
    %849 = vmatprep.subr.mxu0 0.0
    %850 = vmatpush1.msra.mxu0 0.0
    %851 = vmatprep.subr.mxu0 0.0
    %852 = vmatpush1.msra.mxu0 0.0
    %853 = vmatprep.subr.mxu0 0.0
    %854 = vmatpush1.msra.mxu0 0.0
    %855 = vmatprep.subr.mxu0 0.0
    %856 = vmatpush1.msra.mxu0 0.0
    %857 = vmatprep.subr.mxu0 0.0
    %858 = vmatpush1.msra.mxu0 0.0
    %859 = vmatprep.subr.mxu0 0.0
    %860 = vmatpush1.msra.mxu0 0.0
    %861 = vmatprep.subr.mxu0 0.0
    %862 = vmatpush1.msra.mxu0 0.0
    %863 = vmatprep.subr.mxu0 0.0
    %864 = vmatpush1.msra.mxu0 0.0
    %865 = vmatprep.subr.mxu0 0.0
    %866 = vmatpush1.msra.mxu0 0.0
    %867 = vmatprep.subr.mxu0 0.0
    %868 = vmatpush1.msra.mxu0 0.0
    %869 = vmatprep.subr.mxu0 0.0
    %870 = vmatpush1.msra.mxu0 0.0
    %871 = vmatprep.subr.mxu0 0.0
    %872 = vmatpush1.msra.mxu0 0.0
    %873 = vmatprep.subr.mxu0 0.0
    %874 = vmatpush1.msra.mxu0 0.0
    %875 = vmatprep.subr.mxu0 0.0
    %876 = vmatpush1.msra.mxu0 0.0
    %877 = vmatprep.subr.mxu0 0.0
    %878 = vmatpush1.msra.mxu0 0.0
    %879 = vmatprep.subr.mxu0 0.0
    %880 = vmatpush1.msra.mxu0 0.0
    %881 = vmatprep.subr.mxu0 0.0
    %882 = vmatpush1.msra.mxu0 0.0
    %883 = vmatprep.subr.mxu0 0.0
    %884 = vmatpush1.msra.mxu0 0.0
    %885 = vmatprep.subr.mxu0 0.0
    %886 = vmatpush1.msra.mxu0 0.0
    %887 = vmatprep.subr.mxu0 0.0
    %888 = vmatpush1.msra.mxu0 0.0
    %889 = vmatprep.subr.mxu0 0.0
    %890 = vmatpush1.msra.mxu0 0.0
    %891 = vmatprep.subr.mxu0 0.0
    %892 = vmatpush1.msra.mxu0 0.0
    %893 = vmatprep.subr.mxu0 0.0
    %894 = vmatpush1.msra.mxu0 0.0
    %895 = vmatprep.subr.mxu0 0.0
    %896 = vmatpush1.msra.mxu0 0.0
    %897 = vmatprep.subr.mxu0 0.0
    %898 = vmatpush1.msra.mxu0 0.0
    %899 = vmatprep.mubr.f32.mxu0 0.0
    %900 = vmatmul.mubr.f32.gmra.mrb[0].mxu0 %v831
    %v901 = vpop.f32.mrb[0].mxu0
    %v902 = vadd.f32 0.0, %v901
    %v903 = vpop.f32.mrb[0].mxu0
    %904 = vmatprep.mubr.f32.mxu0 0.0
    %905 = vmatmul.mubr.f32.gmra.mrb[0].mxu0 %v833
    %v906 = vpop.f32.mrb[0].mxu0
    %v907 = vadd.f32 0.0, %v906
    %v908 = vpop.f32.mrb[0].mxu0
    %909 = vdwg.mxu0
    %910 = vset.pattern.permute.xlu0 1
    %911 = vperm.xlu0 %910, %v718
    %v912 = vpop.permute.xlu0 %911
    %914 = vset.pattern.permute.xlu0 1
    %915 = vperm.xlu0 %914, %v719
    %v916 = vpop.permute.xlu0 %915
    %v918 = vmul.f32 %v902, %v912
    %v919 = vmul.f32 %v907, %v916
    %v921 = vsel %vm233, %v918, 0
    %v924 = vsel %vm233, %v919, 0
    %926 = vmatprep.subr.mxu0 0.0
    %927 = vmatpush1.msra.mxu0 %v721
    %928 = vmatprep.subr.mxu0 0.0
    %929 = vmatpush1.msra.mxu0 0.0
    %930 = vmatprep.subr.mxu0 0.0
    %931 = vmatpush1.msra.mxu0 0.0
    %932 = vmatprep.subr.mxu0 0.0
    %933 = vmatpush1.msra.mxu0 0.0
    %934 = vmatprep.subr.mxu0 0.0
    %935 = vmatpush1.msra.mxu0 0.0
    %936 = vmatprep.subr.mxu0 0.0
    %937 = vmatpush1.msra.mxu0 0.0
    %938 = vmatprep.subr.mxu0 0.0
    %939 = vmatpush1.msra.mxu0 0.0
    %940 = vmatprep.subr.mxu0 0.0
    %941 = vmatpush1.msra.mxu0 0.0
    %942 = vmatprep.subr.mxu0 0.0
    %943 = vmatpush1.msra.mxu0 0.0
    %944 = vmatprep.subr.mxu0 0.0
    %945 = vmatpush1.msra.mxu0 0.0
    %946 = vmatprep.subr.mxu0 0.0
    %947 = vmatpush1.msra.mxu0 0.0
    %948 = vmatprep.subr.mxu0 0.0
    %949 = vmatpush1.msra.mxu0 0.0
    %950 = vmatprep.subr.mxu0 0.0
    %951 = vmatpush1.msra.mxu0 0.0
    %952 = vmatprep.subr.mxu0 0.0
    %953 = vmatpush1.msra.mxu0 0.0
    %954 = vmatprep.subr.mxu0 0.0
    %955 = vmatpush1.msra.mxu0 0.0
    %956 = vmatprep.subr.mxu0 0.0
    %957 = vmatpush1.msra.mxu0 0.0
    %958 = vmatprep.subr.mxu0 0.0
    %959 = vmatpush1.msra.mxu0 0.0
    %960 = vmatprep.subr.mxu0 0.0
    %961 = vmatpush1.msra.mxu0 0.0
    %962 = vmatprep.subr.mxu0 0.0
    %963 = vmatpush1.msra.mxu0 0.0
    %964 = vmatprep.subr.mxu0 0.0
    %965 = vmatpush1.msra.mxu0 0.0
    %966 = vmatprep.subr.mxu0 0.0
    %967 = vmatpush1.msra.mxu0 0.0
    %968 = vmatprep.subr.mxu0 0.0
    %969 = vmatpush1.msra.mxu0 0.0
    %970 = vmatprep.subr.mxu0 0.0
    %971 = vmatpush1.msra.mxu0 0.0
    %972 = vmatprep.subr.mxu0 0.0
    %973 = vmatpush1.msra.mxu0 0.0
    %974 = vmatprep.subr.mxu0 0.0
    %975 = vmatpush1.msra.mxu0 0.0
    %976 = vmatprep.subr.mxu0 0.0
    %977 = vmatpush1.msra.mxu0 0.0
    %978 = vmatprep.subr.mxu0 0.0
    %979 = vmatpush1.msra.mxu0 0.0
    %980 = vmatprep.subr.mxu0 0.0
    %981 = vmatpush1.msra.mxu0 0.0
    %982 = vmatprep.subr.mxu0 0.0
    %983 = vmatpush1.msra.mxu0 0.0
    %984 = vmatprep.subr.mxu0 0.0
    %985 = vmatpush1.msra.mxu0 0.0
    %986 = vmatprep.subr.mxu0 0.0
    %987 = vmatpush1.msra.mxu0 0.0
    %988 = vmatprep.subr.mxu0 0.0
    %989 = vmatpush1.msra.mxu0 0.0
    %990 = vmatprep.mubr.f32.mxu0 0.0
    %991 = vmatmul.mubr.f32.gmra.mrb[0].mxu0 %v921
    %v992 = vpop.f32.mrb[0].mxu0
    %v993 = vadd.f32 0.0, %v992
    %v994 = vpop.f32.mrb[0].mxu0
    %995 = vmatprep.mubr.f32.mxu0 0.0
    %996 = vmatmul.mubr.f32.gmra.mrb[0].mxu0 %v924
    %v997 = vpop.f32.mrb[0].mxu0
    %v998 = vadd.f32 0.0, %v997
    %v999 = vpop.f32.mrb[0].mxu0
    %1000 = vdwg.mxu0
    %v1002 = vsel %vm233, %v819, 0
    %v1005 = vsel %vm233, %v820, 0
    %1007 = vmatprep.subr.mxu0 0.0
    %1008 = vmatpush1.msra.mxu0 %v720
    %1009 = vmatprep.subr.mxu0 0.0
    %1010 = vmatpush1.msra.mxu0 0.0
    %1011 = vmatprep.subr.mxu0 0.0
    %1012 = vmatpush1.msra.mxu0 0.0
    %1013 = vmatprep.subr.mxu0 0.0
    %1014 = vmatpush1.msra.mxu0 0.0
    %1015 = vmatprep.subr.mxu0 0.0
    %1016 = vmatpush1.msra.mxu0 0.0
    %1017 = vmatprep.subr.mxu0 0.0
    %1018 = vmatpush1.msra.mxu0 0.0
    %1019 = vmatprep.subr.mxu0 0.0
    %1020 = vmatpush1.msra.mxu0 0.0
    %1021 = vmatprep.subr.mxu0 0.0
    %1022 = vmatpush1.msra.mxu0 0.0
    %1023 = vmatprep.subr.mxu0 0.0
    %1024 = vmatpush1.msra.mxu0 0.0
    %1025 = vmatprep.subr.mxu0 0.0
    %1026 = vmatpush1.msra.mxu0 0.0
    %1027 = vmatprep.subr.mxu0 0.0
    %1028 = vmatpush1.msra.mxu0 0.0
    %1029 = vmatprep.subr.mxu0 0.0
    %1030 = vmatpush1.msra.mxu0 0.0
    %1031 = vmatprep.subr.mxu0 0.0
    %1032 = vmatpush1.msra.mxu0 0.0
    %1033 = vmatprep.subr.mxu0 0.0
    %1034 = vmatpush1.msra.mxu0 0.0
    %1035 = vmatprep.subr.mxu0 0.0
    %1036 = vmatpush1.msra.mxu0 0.0
    %1037 = vmatprep.subr.mxu0 0.0
    %1038 = vmatpush1.msra.mxu0 0.0
    %1039 = vmatprep.subr.mxu0 0.0
    %1040 = vmatpush1.msra.mxu0 0.0
    %1041 = vmatprep.subr.mxu0 0.0
    %1042 = vmatpush1.msra.mxu0 0.0
    %1043 = vmatprep.subr.mxu0 0.0
    %1044 = vmatpush1.msra.mxu0 0.0
    %1045 = vmatprep.subr.mxu0 0.0
    %1046 = vmatpush1.msra.mxu0 0.0
    %1047 = vmatprep.subr.mxu0 0.0
    %1048 = vmatpush1.msra.mxu0 0.0
    %1049 = vmatprep.subr.mxu0 0.0
    %1050 = vmatpush1.msra.mxu0 0.0
    %1051 = vmatprep.subr.mxu0 0.0
    %1052 = vmatpush1.msra.mxu0 0.0
    %1053 = vmatprep.subr.mxu0 0.0
    %1054 = vmatpush1.msra.mxu0 0.0
    %1055 = vmatprep.subr.mxu0 0.0
    %1056 = vmatpush1.msra.mxu0 0.0
    %1057 = vmatprep.subr.mxu0 0.0
    %1058 = vmatpush1.msra.mxu0 0.0
    %1059 = vmatprep.subr.mxu0 0.0
    %1060 = vmatpush1.msra.mxu0 0.0
    %1061 = vmatprep.subr.mxu0 0.0
    %1062 = vmatpush1.msra.mxu0 0.0
    %1063 = vmatprep.subr.mxu0 0.0
    %1064 = vmatpush1.msra.mxu0 0.0
    %1065 = vmatprep.subr.mxu0 0.0
    %1066 = vmatpush1.msra.mxu0 0.0
    %1067 = vmatprep.subr.mxu0 0.0
    %1068 = vmatpush1.msra.mxu0 0.0
    %1069 = vmatprep.subr.mxu0 0.0
    %1070 = vmatpush1.msra.mxu0 0.0
    %1071 = vmatprep.mubr.f32.mxu0 0.0
    %1072 = vmatmul.mubr.f32.gmra.mrb[0].mxu0 %v1002
    %v1073 = vpop.f32.mrb[0].mxu0
    %v1074 = vadd.f32 %v993, %v1073
    %v1075 = vpop.f32.mrb[0].mxu0
    %1076 = vmatprep.mubr.f32.mxu0 0.0
    %1077 = vmatmul.mubr.f32.gmra.mrb[0].mxu0 %v1005
    %v1078 = vpop.f32.mrb[0].mxu0
    %v1079 = vadd.f32 %v998, %v1078
    %v1080 = vpop.f32.mrb[0].mxu0
    %1081 = vdwg.mxu0
    %1082 = vrot.lane.b32.xlu0 %v634, 96
    %v1083 = vpop.permute.xlu0 %1082
    %1084 = vrot.lane.b32.xlu0 %v636, 96
    %v1085 = vpop.permute.xlu0 %1084
    %1086 = vrot.lane.b32.xlu0 %v217, 48
    %v1087 = vpop.permute.xlu0 %1086
    %1088 = vrot.lane.b32.xlu0 %v222, 48
    %v1089 = vpop.permute.xlu0 %1088
    %v1092 = vsel %vm616, %v1083, 0
    %v1094 = vsel %vm616, %v1085, 0
    %1096 = vmatprep.subr.mxu0 0.0
    %1097 = vmatpush1.msra.mxu0 %v1087
    %1098 = vmatprep.subr.mxu0 0.0
    %1099 = vmatpush1.msra.mxu0 %v1089
    %1100 = vmatprep.subr.mxu0 0.0
    %1101 = vmatpush1.msra.mxu0 0.0
    %1102 = vmatprep.subr.mxu0 0.0
    %1103 = vmatpush1.msra.mxu0 0.0
    %1104 = vmatprep.subr.mxu0 0.0
    %1105 = vmatpush1.msra.mxu0 0.0
    %1106 = vmatprep.subr.mxu0 0.0
    %1107 = vmatpush1.msra.mxu0 0.0
    %1108 = vmatprep.subr.mxu0 0.0
    %1109 = vmatpush1.msra.mxu0 0.0
    %1110 = vmatprep.subr.mxu0 0.0
    %1111 = vmatpush1.msra.mxu0 0.0
    %1112 = vmatprep.subr.mxu0 0.0
    %1113 = vmatpush1.msra.mxu0 0.0
    %1114 = vmatprep.subr.mxu0 0.0
    %1115 = vmatpush1.msra.mxu0 0.0
    %1116 = vmatprep.subr.mxu0 0.0
    %1117 = vmatpush1.msra.mxu0 0.0
    %1118 = vmatprep.subr.mxu0 0.0
    %1119 = vmatpush1.msra.mxu0 0.0
    %1120 = vmatprep.subr.mxu0 0.0
    %1121 = vmatpush1.msra.mxu0 0.0
    %1122 = vmatprep.subr.mxu0 0.0
    %1123 = vmatpush1.msra.mxu0 0.0
    %1124 = vmatprep.subr.mxu0 0.0
    %1125 = vmatpush1.msra.mxu0 0.0
    %1126 = vmatprep.subr.mxu0 0.0
    %1127 = vmatpush1.msra.mxu0 0.0
    %1128 = vmatprep.subr.mxu0 0.0
    %1129 = vmatpush1.msra.mxu0 0.0
    %1130 = vmatprep.subr.mxu0 0.0
    %1131 = vmatpush1.msra.mxu0 0.0
    %1132 = vmatprep.subr.mxu0 0.0
    %1133 = vmatpush1.msra.mxu0 0.0
    %1134 = vmatprep.subr.mxu0 0.0
    %1135 = vmatpush1.msra.mxu0 0.0
    %1136 = vmatprep.subr.mxu0 0.0
    %1137 = vmatpush1.msra.mxu0 0.0
    %1138 = vmatprep.subr.mxu0 0.0
    %1139 = vmatpush1.msra.mxu0 0.0
    %1140 = vmatprep.subr.mxu0 0.0
    %1141 = vmatpush1.msra.mxu0 0.0
    %1142 = vmatprep.subr.mxu0 0.0
    %1143 = vmatpush1.msra.mxu0 0.0
    %1144 = vmatprep.subr.mxu0 0.0
    %1145 = vmatpush1.msra.mxu0 0.0
    %1146 = vmatprep.subr.mxu0 0.0
    %1147 = vmatpush1.msra.mxu0 0.0
    %1148 = vmatprep.subr.mxu0 0.0
    %1149 = vmatpush1.msra.mxu0 0.0
    %1150 = vmatprep.subr.mxu0 0.0
    %1151 = vmatpush1.msra.mxu0 0.0
    %1152 = vmatprep.subr.mxu0 0.0
    %1153 = vmatpush1.msra.mxu0 0.0
    %1154 = vmatprep.subr.mxu0 0.0
    %1155 = vmatpush1.msra.mxu0 0.0
    %1156 = vmatprep.subr.mxu0 0.0
    %1157 = vmatpush1.msra.mxu0 0.0
    %1158 = vmatprep.subr.mxu0 0.0
    %1159 = vmatpush1.msra.mxu0 0.0
    %1160 = vmatprep.mubr.f32.mxu0 0.0
    %1161 = vmatmul.mubr.f32.gmra.mrb[0].mxu0 %v1092
    %v1162 = vpop.f32.mrb[0].mxu0
    %v1163 = vadd.f32 0.0, %v1162
    %v1164 = vpop.f32.mrb[0].mxu0
    %1165 = vmatprep.mubr.f32.mxu0 0.0
    %1166 = vmatmul.mubr.f32.gmra.mrb[0].mxu0 %v1094
    %v1167 = vpop.f32.mrb[0].mxu0
    %v1168 = vadd.f32 0.0, %v1167
    %v1169 = vpop.f32.mrb[0].mxu0
    %1170 = vdwg.mxu0
    %1171 = vset.pattern.permute.xlu0 2
    %1172 = vperm.xlu0 %1171, %v718
    %v1173 = vpop.permute.xlu0 %1172
    %1175 = vset.pattern.permute.xlu0 2
    %1176 = vperm.xlu0 %1175, %v719
    %v1177 = vpop.permute.xlu0 %1176
    %v1179 = vmul.f32 %v1163, %v1173
    %v1180 = vmul.f32 %v1168, %v1177
    %v1182 = vsel %vm233, %v1179, 0
    %v1185 = vsel %vm233, %v1180, 0
    %1187 = vmatprep.subr.mxu0 0.0
    %1188 = vmatpush1.msra.mxu0 %v722
    %1189 = vmatprep.subr.mxu0 0.0
    %1190 = vmatpush1.msra.mxu0 0.0
    %1191 = vmatprep.subr.mxu0 0.0
    %1192 = vmatpush1.msra.mxu0 0.0
    %1193 = vmatprep.subr.mxu0 0.0
    %1194 = vmatpush1.msra.mxu0 0.0
    %1195 = vmatprep.subr.mxu0 0.0
    %1196 = vmatpush1.msra.mxu0 0.0
    %1197 = vmatprep.subr.mxu0 0.0
    %1198 = vmatpush1.msra.mxu0 0.0
    %1199 = vmatprep.subr.mxu0 0.0
    %1200 = vmatpush1.msra.mxu0 0.0
    %1201 = vmatprep.subr.mxu0 0.0
    %1202 = vmatpush1.msra.mxu0 0.0
    %1203 = vmatprep.subr.mxu0 0.0
    %1204 = vmatpush1.msra.mxu0 0.0
    %1205 = vmatprep.subr.mxu0 0.0
    %1206 = vmatpush1.msra.mxu0 0.0
    %1207 = vmatprep.subr.mxu0 0.0
    %1208 = vmatpush1.msra.mxu0 0.0
    %1209 = vmatprep.subr.mxu0 0.0
    %1210 = vmatpush1.msra.mxu0 0.0
    %1211 = vmatprep.subr.mxu0 0.0
    %1212 = vmatpush1.msra.mxu0 0.0
    %1213 = vmatprep.subr.mxu0 0.0
    %1214 = vmatpush1.msra.mxu0 0.0
    %1215 = vmatprep.subr.mxu0 0.0
    %1216 = vmatpush1.msra.mxu0 0.0
    %1217 = vmatprep.subr.mxu0 0.0
    %1218 = vmatpush1.msra.mxu0 0.0
    %1219 = vmatprep.subr.mxu0 0.0
    %1220 = vmatpush1.msra.mxu0 0.0
    %1221 = vmatprep.subr.mxu0 0.0
    %1222 = vmatpush1.msra.mxu0 0.0
    %1223 = vmatprep.subr.mxu0 0.0
    %1224 = vmatpush1.msra.mxu0 0.0
    %1225 = vmatprep.subr.mxu0 0.0
    %1226 = vmatpush1.msra.mxu0 0.0
    %1227 = vmatprep.subr.mxu0 0.0
    %1228 = vmatpush1.msra.mxu0 0.0
    %1229 = vmatprep.subr.mxu0 0.0
    %1230 = vmatpush1.msra.mxu0 0.0
    %1231 = vmatprep.subr.mxu0 0.0
    %1232 = vmatpush1.msra.mxu0 0.0
    %1233 = vmatprep.subr.mxu0 0.0
    %1234 = vmatpush1.msra.mxu0 0.0
    %1235 = vmatprep.subr.mxu0 0.0
    %1236 = vmatpush1.msra.mxu0 0.0
    %1237 = vmatprep.subr.mxu0 0.0
    %1238 = vmatpush1.msra.mxu0 0.0
    %1239 = vmatprep.subr.mxu0 0.0
    %1240 = vmatpush1.msra.mxu0 0.0
    %1241 = vmatprep.subr.mxu0 0.0
    %1242 = vmatpush1.msra.mxu0 0.0
    %1243 = vmatprep.subr.mxu0 0.0
    %1244 = vmatpush1.msra.mxu0 0.0
    %1245 = vmatprep.subr.mxu0 0.0
    %1246 = vmatpush1.msra.mxu0 0.0
    %1247 = vmatprep.subr.mxu0 0.0
    %1248 = vmatpush1.msra.mxu0 0.0
    %1249 = vmatprep.subr.mxu0 0.0
    %1250 = vmatpush1.msra.mxu0 0.0
    %1251 = vmatprep.mubr.f32.mxu0 0.0
    %1252 = vmatmul.mubr.f32.gmra.mrb[0].mxu0 %v1182
    %v1253 = vpop.f32.mrb[0].mxu0
    %v1254 = vadd.f32 0.0, %v1253
    %v1255 = vpop.f32.mrb[0].mxu0
    %1256 = vmatprep.mubr.f32.mxu0 0.0
    %1257 = vmatmul.mubr.f32.gmra.mrb[0].mxu0 %v1185
    %v1258 = vpop.f32.mrb[0].mxu0
    %v1259 = vadd.f32 0.0, %v1258
    %v1260 = vpop.f32.mrb[0].mxu0
    %1261 = vdwg.mxu0
    %v1262 = vadd.f32 %v1074, %v1254
    %v1263 = vadd.f32 %v1079, %v1259
    %1264 = vrot.lane.b32.xlu0 %v634, 80
    %v1265 = vpop.permute.xlu0 %1264
    %1266 = vrot.lane.b32.xlu0 %v636, 80
    %v1267 = vpop.permute.xlu0 %1266
    %1268 = vrot.lane.b32.xlu0 %v217, 40
    %v1269 = vpop.permute.xlu0 %1268
    %1270 = vrot.lane.b32.xlu0 %v222, 40
    %v1271 = vpop.permute.xlu0 %1270
    %v1274 = vsel %vm616, %v1265, 0
    %v1276 = vsel %vm616, %v1267, 0
    %1278 = vmatprep.subr.mxu0 0.0
    %1279 = vmatpush1.msra.mxu0 %v1269
    %1280 = vmatprep.subr.mxu0 0.0
    %1281 = vmatpush1.msra.mxu0 %v1271
    %1282 = vmatprep.subr.mxu0 0.0
    %1283 = vmatpush1.msra.mxu0 0.0
    %1284 = vmatprep.subr.mxu0 0.0
    %1285 = vmatpush1.msra.mxu0 0.0
    %1286 = vmatprep.subr.mxu0 0.0
    %1287 = vmatpush1.msra.mxu0 0.0
    %1288 = vmatprep.subr.mxu0 0.0
    %1289 = vmatpush1.msra.mxu0 0.0
    %1290 = vmatprep.subr.mxu0 0.0
    %1291 = vmatpush1.msra.mxu0 0.0
    %1292 = vmatprep.subr.mxu0 0.0
    %1293 = vmatpush1.msra.mxu0 0.0
    %1294 = vmatprep.subr.mxu0 0.0
    %1295 = vmatpush1.msra.mxu0 0.0
    %1296 = vmatprep.subr.mxu0 0.0
    %1297 = vmatpush1.msra.mxu0 0.0
    %1298 = vmatprep.subr.mxu0 0.0
    %1299 = vmatpush1.msra.mxu0 0.0
    %1300 = vmatprep.subr.mxu0 0.0
    %1301 = vmatpush1.msra.mxu0 0.0
    %1302 = vmatprep.subr.mxu0 0.0
    %1303 = vmatpush1.msra.mxu0 0.0
    %1304 = vmatprep.subr.mxu0 0.0
    %1305 = vmatpush1.msra.mxu0 0.0
    %1306 = vmatprep.subr.mxu0 0.0
    %1307 = vmatpush1.msra.mxu0 0.0
    %1308 = vmatprep.subr.mxu0 0.0
    %1309 = vmatpush1.msra.mxu0 0.0
    %1310 = vmatprep.subr.mxu0 0.0
    %1311 = vmatpush1.msra.mxu0 0.0
    %1312 = vmatprep.subr.mxu0 0.0
    %1313 = vmatpush1.msra.mxu0 0.0
    %1314 = vmatprep.subr.mxu0 0.0
    %1315 = vmatpush1.msra.mxu0 0.0
    %1316 = vmatprep.subr.mxu0 0.0
    %1317 = vmatpush1.msra.mxu0 0.0
    %1318 = vmatprep.subr.mxu0 0.0
    %1319 = vmatpush1.msra.mxu0 0.0
    %1320 = vmatprep.subr.mxu0 0.0
    %1321 = vmatpush1.msra.mxu0 0.0
    %1322 = vmatprep.subr.mxu0 0.0
    %1323 = vmatpush1.msra.mxu0 0.0
    %1324 = vmatprep.subr.mxu0 0.0
    %1325 = vmatpush1.msra.mxu0 0.0
    %1326 = vmatprep.subr.mxu0 0.0
    %1327 = vmatpush1.msra.mxu0 0.0
    %1328 = vmatprep.subr.mxu0 0.0
    %1329 = vmatpush1.msra.mxu0 0.0
    %1330 = vmatprep.subr.mxu0 0.0
    %1331 = vmatpush1.msra.mxu0 0.0
    %1332 = vmatprep.subr.mxu0 0.0
    %1333 = vmatpush1.msra.mxu0 0.0
    %1334 = vmatprep.subr.mxu0 0.0
    %1335 = vmatpush1.msra.mxu0 0.0
    %1336 = vmatprep.subr.mxu0 0.0
    %1337 = vmatpush1.msra.mxu0 0.0
    %1338 = vmatprep.subr.mxu0 0.0
    %1339 = vmatpush1.msra.mxu0 0.0
    %1340 = vmatprep.subr.mxu0 0.0
    %1341 = vmatpush1.msra.mxu0 0.0
    %1342 = vmatprep.mubr.f32.mxu0 0.0
    %1343 = vmatmul.mubr.f32.gmra.mrb[0].mxu0 %v1274
    %v1344 = vpop.f32.mrb[0].mxu0
    %v1345 = vadd.f32 0.0, %v1344
    %v1346 = vpop.f32.mrb[0].mxu0
    %1347 = vmatprep.mubr.f32.mxu0 0.0
    %1348 = vmatmul.mubr.f32.gmra.mrb[0].mxu0 %v1276
    %v1349 = vpop.f32.mrb[0].mxu0
    %v1350 = vadd.f32 0.0, %v1349
    %v1351 = vpop.f32.mrb[0].mxu0
    %1352 = vdwg.mxu0
    %1353 = vset.pattern.permute.xlu0 3
    %1354 = vperm.xlu0 %1353, %v718
    %v1355 = vpop.permute.xlu0 %1354
    %1357 = vset.pattern.permute.xlu0 3
    %1358 = vperm.xlu0 %1357, %v719
    %v1359 = vpop.permute.xlu0 %1358
    %v1361 = vmul.f32 %v1345, %v1355
    %v1362 = vmul.f32 %v1350, %v1359
    %v1364 = vsel %vm233, %v1361, 0
    %v1367 = vsel %vm233, %v1362, 0
    %1369 = vmatprep.subr.mxu0 0.0
    %1370 = vmatpush1.msra.mxu0 %v723
    %1371 = vmatprep.subr.mxu0 0.0
    %1372 = vmatpush1.msra.mxu0 0.0
    %1373 = vmatprep.subr.mxu0 0.0
    %1374 = vmatpush1.msra.mxu0 0.0
    %1375 = vmatprep.subr.mxu0 0.0
    %1376 = vmatpush1.msra.mxu0 0.0
    %1377 = vmatprep.subr.mxu0 0.0
    %1378 = vmatpush1.msra.mxu0 0.0
    %1379 = vmatprep.subr.mxu0 0.0
    %1380 = vmatpush1.msra.mxu0 0.0
    %1381 = vmatprep.subr.mxu0 0.0
    %1382 = vmatpush1.msra.mxu0 0.0
    %1383 = vmatprep.subr.mxu0 0.0
    %1384 = vmatpush1.msra.mxu0 0.0
    %1385 = vmatprep.subr.mxu0 0.0
    %1386 = vmatpush1.msra.mxu0 0.0
    %1387 = vmatprep.subr.mxu0 0.0
    %1388 = vmatpush1.msra.mxu0 0.0
    %1389 = vmatprep.subr.mxu0 0.0
    %1390 = vmatpush1.msra.mxu0 0.0
    %1391 = vmatprep.subr.mxu0 0.0
    %1392 = vmatpush1.msra.mxu0 0.0
    %1393 = vmatprep.subr.mxu0 0.0
    %1394 = vmatpush1.msra.mxu0 0.0
    %1395 = vmatprep.subr.mxu0 0.0
    %1396 = vmatpush1.msra.mxu0 0.0
    %1397 = vmatprep.subr.mxu0 0.0
    %1398 = vmatpush1.msra.mxu0 0.0
    %1399 = vmatprep.subr.mxu0 0.0
    %1400 = vmatpush1.msra.mxu0 0.0
    %1401 = vmatprep.subr.mxu0 0.0
    %1402 = vmatpush1.msra.mxu0 0.0
    %1403 = vmatprep.subr.mxu0 0.0
    %1404 = vmatpush1.msra.mxu0 0.0
    %1405 = vmatprep.subr.mxu0 0.0
    %1406 = vmatpush1.msra.mxu0 0.0
    %1407 = vmatprep.subr.mxu0 0.0
    %1408 = vmatpush1.msra.mxu0 0.0
    %1409 = vmatprep.subr.mxu0 0.0
    %1410 = vmatpush1.msra.mxu0 0.0
    %1411 = vmatprep.subr.mxu0 0.0
    %1412 = vmatpush1.msra.mxu0 0.0
    %1413 = vmatprep.subr.mxu0 0.0
    %1414 = vmatpush1.msra.mxu0 0.0
    %1415 = vmatprep.subr.mxu0 0.0
    %1416 = vmatpush1.msra.mxu0 0.0
    %1417 = vmatprep.subr.mxu0 0.0
    %1418 = vmatpush1.msra.mxu0 0.0
    %1419 = vmatprep.subr.mxu0 0.0
    %1420 = vmatpush1.msra.mxu0 0.0
    %1421 = vmatprep.subr.mxu0 0.0
    %1422 = vmatpush1.msra.mxu0 0.0
    %1423 = vmatprep.subr.mxu0 0.0
    %1424 = vmatpush1.msra.mxu0 0.0
    %1425 = vmatprep.subr.mxu0 0.0
    %1426 = vmatpush1.msra.mxu0 0.0
    %1427 = vmatprep.subr.mxu0 0.0
    %1428 = vmatpush1.msra.mxu0 0.0
    %1429 = vmatprep.subr.mxu0 0.0
    %1430 = vmatpush1.msra.mxu0 0.0
    %1431 = vmatprep.subr.mxu0 0.0
    %1432 = vmatpush1.msra.mxu0 0.0
    %1433 = vmatprep.mubr.f32.mxu0 0.0
    %1434 = vmatmul.mubr.f32.gmra.mrb[0].mxu0 %v1364
    %v1435 = vpop.f32.mrb[0].mxu0
    %v1436 = vadd.f32 0.0, %v1435
    %v1437 = vpop.f32.mrb[0].mxu0
    %1438 = vmatprep.mubr.f32.mxu0 0.0
    %1439 = vmatmul.mubr.f32.gmra.mrb[0].mxu0 %v1367
    %v1440 = vpop.f32.mrb[0].mxu0
    %v1441 = vadd.f32 0.0, %v1440
    %v1442 = vpop.f32.mrb[0].mxu0
    %1443 = vdwg.mxu0
    %v1444 = vadd.f32 %v1262, %v1436
    %v1445 = vadd.f32 %v1263, %v1441
    %v1446 = vadd.f32 %v70, %v1444
    %v1447 = vadd.f32 %v71, %v1445
    %v1448 = vld [vmem:[%s10] sm:$0x1]
    %v1450 = vlaneseq
    %v1451 = vshrl.u32 %v1450, 7
    %v1452 = vsub.s32 0, %v1451
    %v1453 = vrot.slane %v1448, %v1452
    %v1455 = vadd.f32 %v1446, %v1453
    %v1456 = vadd.f32 %v1447, %v1453
    %v1457 = vld [vmem:[%s11] sm:$0x1]
    %v1458 = vld [vmem:[%s12] sm:$0x1]
    %v1459 = vsel %vm84, %v1455, 0.0
    %1460 = vadd.xlane.f32.xlu0 %v1459
    %v1461 = vpop.xlane.xlu0 %1460
    %v1462 = vsel %vm84, %v1456, 0.0
    %1463 = vadd.xlane.f32.xlu0 %v1462
    %v1464 = vpop.xlane.xlu0 %1463
    %v1465 = vmul.f32 %v1455, %v1455
    %v1466 = vmul.f32 %v1456, %v1456
    %v1467 = vsel %vm84, %v1465, 0.0
    %1468 = vadd.xlane.f32.xlu0 %v1467
    %v1469 = vpop.xlane.xlu0 %1468
    %v1470 = vsel %vm84, %v1466, 0.0
    %1471 = vadd.xlane.f32.xlu0 %v1470
    %v1472 = vpop.xlane.xlu0 %1471
    %v1473 = vmul.f32 %v1461, 0.03125
    %v1474 = vmul.f32 %v1464, 0.03125
    %v1475 = vmul.f32 %v1469, 0.03125
    %v1476 = vmul.f32 %v1472, 0.03125
    %v1477 = vmul.f32 %v1473, %v1473
    %v1478 = vmul.f32 %v1474, %v1474
    %v1479 = vsub.f32 %v1475, %v1477
    %v1480 = vsub.f32 %v1476, %v1478
    %v1481 = vmax.f32 %v1479, 0.0
    %v1482 = vmax.f32 %v1480, 0.0
    %v1483 = vsub.f32 %v1455, %v1473
    %v1484 = vsub.f32 %v1456, %v1474
    %v1485 = vadd.f32 %v1481, 1e-05
    %v1486 = vadd.f32 %v1482, 1e-05
    %v1487 = vrsqrt.pop %v1485
    %v1488 = vrsqrt.pop %v1486
    %v1489 = vmul.f32 %v1483, %v1487
    %v1490 = vmul.f32 %v1484, %v1488
    %v1492 = vlaneseq
    %v1493 = vshrl.u32 %v1492, 7
    %v1494 = vsub.s32 0, %v1493
    %v1495 = vrot.slane %v1457, %v1494
    %v1497 = vmul.f32 %v1489, %v1495
    %v1498 = vmul.f32 %v1490, %v1495
    %v1500 = vlaneseq
    %v1501 = vshrl.u32 %v1500, 7
    %v1502 = vsub.s32 0, %v1501
    %v1503 = vrot.slane %v1458, %v1502
    %v1505 = vadd.f32 %v1497, %v1503
    %v1506 = vadd.f32 %v1498, %v1503
    %v1507 = vld [vmem:[%s13] sm:$0xff]
    %v1508 = vld [vmem:[%s13 + $0x8] sm:$0xff]
    %v1509 = vld [vmem:[%s13 + $0x10] sm:$0xff]
    %v1510 = vld [vmem:[%s13 + $0x18] sm:$0xff]
    %v1511 = vld [vmem:[%s14] sm:$0x1]
    %v1513 = vlaneseq
    %v1514 = vshrl.u32 %v1513, 7
    %v1515 = vsub.s32 0, %v1514
    %v1516 = vrot.slane %v1511, %v1515
    %v1519 = vsel %vm84, %v1505, 0
    %v1522 = vsel %vm84, %v1506, 0
    %1524 = vmatprep.subr.mxu0 0.0
    %1525 = vmatpush1.msra.mxu0 %v1507
    %1526 = vmatprep.subr.mxu0 0.0
    %1527 = vmatpush1.msra.mxu0 %v1508
    %1528 = vmatprep.subr.mxu0 0.0
    %1529 = vmatpush1.msra.mxu0 %v1509
    %1530 = vmatprep.subr.mxu0 0.0
    %1531 = vmatpush1.msra.mxu0 %v1510
    %1532 = vmatprep.subr.mxu0 0.0
    %1533 = vmatpush1.msra.mxu0 0.0
    %1534 = vmatprep.subr.mxu0 0.0
    %1535 = vmatpush1.msra.mxu0 0.0
    %1536 = vmatprep.subr.mxu0 0.0
    %1537 = vmatpush1.msra.mxu0 0.0
    %1538 = vmatprep.subr.mxu0 0.0
    %1539 = vmatpush1.msra.mxu0 0.0
    %1540 = vmatprep.subr.mxu0 0.0
    %1541 = vmatpush1.msra.mxu0 0.0
    %1542 = vmatprep.subr.mxu0 0.0
    %1543 = vmatpush1.msra.mxu0 0.0
    %1544 = vmatprep.subr.mxu0 0.0
    %1545 = vmatpush1.msra.mxu0 0.0
    %1546 = vmatprep.subr.mxu0 0.0
    %1547 = vmatpush1.msra.mxu0 0.0
    %1548 = vmatprep.subr.mxu0 0.0
    %1549 = vmatpush1.msra.mxu0 0.0
    %1550 = vmatprep.subr.mxu0 0.0
    %1551 = vmatpush1.msra.mxu0 0.0
    %1552 = vmatprep.subr.mxu0 0.0
    %1553 = vmatpush1.msra.mxu0 0.0
    %1554 = vmatprep.subr.mxu0 0.0
    %1555 = vmatpush1.msra.mxu0 0.0
    %1556 = vmatprep.subr.mxu0 0.0
    %1557 = vmatpush1.msra.mxu0 0.0
    %1558 = vmatprep.subr.mxu0 0.0
    %1559 = vmatpush1.msra.mxu0 0.0
    %1560 = vmatprep.subr.mxu0 0.0
    %1561 = vmatpush1.msra.mxu0 0.0
    %1562 = vmatprep.subr.mxu0 0.0
    %1563 = vmatpush1.msra.mxu0 0.0
    %1564 = vmatprep.subr.mxu0 0.0
    %1565 = vmatpush1.msra.mxu0 0.0
    %1566 = vmatprep.subr.mxu0 0.0
    %1567 = vmatpush1.msra.mxu0 0.0
    %1568 = vmatprep.subr.mxu0 0.0
    %1569 = vmatpush1.msra.mxu0 0.0
    %1570 = vmatprep.subr.mxu0 0.0
    %1571 = vmatpush1.msra.mxu0 0.0
    %1572 = vmatprep.subr.mxu0 0.0
    %1573 = vmatpush1.msra.mxu0 0.0
    %1574 = vmatprep.subr.mxu0 0.0
    %1575 = vmatpush1.msra.mxu0 0.0
    %1576 = vmatprep.subr.mxu0 0.0
    %1577 = vmatpush1.msra.mxu0 0.0
    %1578 = vmatprep.subr.mxu0 0.0
    %1579 = vmatpush1.msra.mxu0 0.0
    %1580 = vmatprep.subr.mxu0 0.0
    %1581 = vmatpush1.msra.mxu0 0.0
    %1582 = vmatprep.subr.mxu0 0.0
    %1583 = vmatpush1.msra.mxu0 0.0
    %1584 = vmatprep.subr.mxu0 0.0
    %1585 = vmatpush1.msra.mxu0 0.0
    %1586 = vmatprep.subr.mxu0 0.0
    %1587 = vmatpush1.msra.mxu0 0.0
    %1588 = vmatprep.mubr.f32.mxu0 0.0
    %1589 = vmatmul.mubr.f32.gmra.mrb[0].mxu0 %v1519
    %v1590 = vpop.f32.mrb[0].mxu0
    %v1591 = vadd.f32 %v1516, %v1590
    %v1592 = vpop.f32.mrb[0].mxu0
    %1593 = vmatprep.mubr.f32.mxu0 0.0
    %1594 = vmatmul.mubr.f32.gmra.mrb[0].mxu0 %v1522
    %v1595 = vpop.f32.mrb[0].mxu0
    %v1596 = vadd.f32 %v1516, %v1595
    %v1597 = vpop.f32.mrb[0].mxu0
    %1598 = vdwg.mxu0
    %v1599 = vmul.f32 %v1591, 1.702
    %v1600 = vmul.f32 %v1596, 1.702
    %v1601 = vxor.u32 %v1599, 2147483648
    %v1602 = vxor.u32 %v1600, 2147483648
    %v1603 = vmul.f32 %v1601, 1.442695
    %v1604 = vpow.pop %v1603
    %v1605 = vmul.f32 %v1602, 1.442695
    %v1606 = vpow.pop %v1605
    %v1607 = vadd.f32 %v1604, 1.0
    %v1608 = vadd.f32 %v1606, 1.0
    %v1609 = vrcp.pop %v1607
    %v1610 = vmul.f32 1.0, %v1609
    %v1611 = vrcp.pop %v1608
    %v1612 = vmul.f32 1.0, %v1611
    %v1613 = vmul.f32 %v1591, %v1610
    %v1614 = vmul.f32 %v1596, %v1612
    %v1615 = vld [vmem:[%s15] sm:$0xff]
    %v1616 = vld [vmem:[%s15 + $0x8] sm:$0xff]
    %v1617 = vld [vmem:[%s15 + $0x10] sm:$0xff]
    %v1618 = vld [vmem:[%s15 + $0x18] sm:$0xff]
    %v1619 = vld [vmem:[%s15 + $0x20] sm:$0xff]
    %v1620 = vld [vmem:[%s15 + $0x28] sm:$0xff]
    %v1621 = vld [vmem:[%s15 + $0x30] sm:$0xff]
    %v1622 = vld [vmem:[%s15 + $0x38] sm:$0xff]
    %v1623 = vld [vmem:[%s15 + $0x40] sm:$0xff]
    %v1624 = vld [vmem:[%s15 + $0x48] sm:$0xff]
    %v1625 = vld [vmem:[%s15 + $0x50] sm:$0xff]
    %v1626 = vld [vmem:[%s15 + $0x58] sm:$0xff]
    %v1627 = vld [vmem:[%s15 + $0x60] sm:$0xff]
    %v1628 = vld [vmem:[%s15 + $0x68] sm:$0xff]
    %v1629 = vld [vmem:[%s15 + $0x70] sm:$0xff]
    %v1630 = vld [vmem:[%s15 + $0x78] sm:$0xff]
    %1631 = vmatprep.subr.mxu0 0.0
    %1632 = vmatpush1.msra.mxu0 %v1615
    %1633 = vmatprep.subr.mxu0 0.0
    %1634 = vmatpush1.msra.mxu0 %v1616
    %1635 = vmatprep.subr.mxu0 0.0
    %1636 = vmatpush1.msra.mxu0 %v1617
    %1637 = vmatprep.subr.mxu0 0.0
    %1638 = vmatpush1.msra.mxu0 %v1618
    %1639 = vmatprep.subr.mxu0 0.0
    %1640 = vmatpush1.msra.mxu0 %v1619
    %1641 = vmatprep.subr.mxu0 0.0
    %1642 = vmatpush1.msra.mxu0 %v1620
    %1643 = vmatprep.subr.mxu0 0.0
    %1644 = vmatpush1.msra.mxu0 %v1621
    %1645 = vmatprep.subr.mxu0 0.0
    %1646 = vmatpush1.msra.mxu0 %v1622
    %1647 = vmatprep.subr.mxu0 0.0
    %1648 = vmatpush1.msra.mxu0 %v1623
    %1649 = vmatprep.subr.mxu0 0.0
    %1650 = vmatpush1.msra.mxu0 %v1624
    %1651 = vmatprep.subr.mxu0 0.0
    %1652 = vmatpush1.msra.mxu0 %v1625
    %1653 = vmatprep.subr.mxu0 0.0
    %1654 = vmatpush1.msra.mxu0 %v1626
    %1655 = vmatprep.subr.mxu0 0.0
    %1656 = vmatpush1.msra.mxu0 %v1627
    %1657 = vmatprep.subr.mxu0 0.0
    %1658 = vmatpush1.msra.mxu0 %v1628
    %1659 = vmatprep.subr.mxu0 0.0
    %1660 = vmatpush1.msra.mxu0 %v1629
    %1661 = vmatprep.subr.mxu0 0.0
    %1662 = vmatpush1.msra.mxu0 %v1630
    %1663 = vmatprep.subr.mxu0 0.0
    %1664 = vmatpush1.msra.mxu0 0.0
    %1665 = vmatprep.subr.mxu0 0.0
    %1666 = vmatpush1.msra.mxu0 0.0
    %1667 = vmatprep.subr.mxu0 0.0
    %1668 = vmatpush1.msra.mxu0 0.0
    %1669 = vmatprep.subr.mxu0 0.0
    %1670 = vmatpush1.msra.mxu0 0.0
    %1671 = vmatprep.subr.mxu0 0.0
    %1672 = vmatpush1.msra.mxu0 0.0
    %1673 = vmatprep.subr.mxu0 0.0
    %1674 = vmatpush1.msra.mxu0 0.0
    %1675 = vmatprep.subr.mxu0 0.0
    %1676 = vmatpush1.msra.mxu0 0.0
    %1677 = vmatprep.subr.mxu0 0.0
    %1678 = vmatpush1.msra.mxu0 0.0
    %1679 = vmatprep.subr.mxu0 0.0
    %1680 = vmatpush1.msra.mxu0 0.0
    %1681 = vmatprep.subr.mxu0 0.0
    %1682 = vmatpush1.msra.mxu0 0.0
    %1683 = vmatprep.subr.mxu0 0.0
    %1684 = vmatpush1.msra.mxu0 0.0
    %1685 = vmatprep.subr.mxu0 0.0
    %1686 = vmatpush1.msra.mxu0 0.0
    %1687 = vmatprep.subr.mxu0 0.0
    %1688 = vmatpush1.msra.mxu0 0.0
    %1689 = vmatprep.subr.mxu0 0.0
    %1690 = vmatpush1.msra.mxu0 0.0
    %1691 = vmatprep.subr.mxu0 0.0
    %1692 = vmatpush1.msra.mxu0 0.0
    %1693 = vmatprep.subr.mxu0 0.0
    %1694 = vmatpush1.msra.mxu0 0.0
    %1695 = vmatprep.mubr.f32.mxu0 0.0
    %1696 = vmatmul.mubr.f32.gmra.mrb[0].mxu0 %v1613
    %v1697 = vpop.f32.mrb[0].mxu0
    %v1698 = vadd.f32 0.0, %v1697
    %v1699 = vpop.f32.mrb[0].mxu0
    %1700 = vmatprep.mubr.f32.mxu0 0.0
    %1701 = vmatmul.mubr.f32.gmra.mrb[0].mxu0 %v1614
    %v1702 = vpop.f32.mrb[0].mxu0
    %v1703 = vadd.f32 0.0, %v1702
    %v1704 = vpop.f32.mrb[0].mxu0
    %1705 = vdwg.mxu0
    %v1706 = vadd.f32 %v1455, %v1698
    %v1707 = vadd.f32 %v1456, %v1703
    %v1708 = vld [vmem:[%s16] sm:$0x1]
    %v1710 = vlaneseq
    %v1711 = vshrl.u32 %v1710, 7
    %v1712 = vsub.s32 0, %v1711
    %v1713 = vrot.slane %v1708, %v1712
    %v1715 = vadd.f32 %v1706, %v1713
    %v1716 = vadd.f32 %v1707, %v1713
    %s1717 = scalar_lea.vmem %s5, 1
    %v1718 = vld [vmem:[%s1717] sm:$0x1]
    %s1719 = scalar_lea.vmem %s6, 1
    %v1720 = vld [vmem:[%s1719] sm:$0x1]
    %v1721 = vsel %vm84, %v1715, 0.0
    %1722 = vadd.xlane.f32.xlu0 %v1721
    %v1723 = vpop.xlane.xlu0 %1722
    %v1724 = vsel %vm84, %v1716, 0.0
    %1725 = vadd.xlane.f32.xlu0 %v1724
    %v1726 = vpop.xlane.xlu0 %1725
    %v1727 = vmul.f32 %v1715, %v1715
    %v1728 = vmul.f32 %v1716, %v1716
    %v1729 = vsel %vm84, %v1727, 0.0
    %1730 = vadd.xlane.f32.xlu0 %v1729
    %v1731 = vpop.xlane.xlu0 %1730
    %v1732 = vsel %vm84, %v1728, 0.0
    %1733 = vadd.xlane.f32.xlu0 %v1732
    %v1734 = vpop.xlane.xlu0 %1733
    %v1735 = vmul.f32 %v1723, 0.03125
    %v1736 = vmul.f32 %v1726, 0.03125
    %v1737 = vmul.f32 %v1731, 0.03125
    %v1738 = vmul.f32 %v1734, 0.03125
    %v1739 = vmul.f32 %v1735, %v1735
    %v1740 = vmul.f32 %v1736, %v1736
    %v1741 = vsub.f32 %v1737, %v1739
    %v1742 = vsub.f32 %v1738, %v1740
    %v1743 = vmax.f32 %v1741, 0.0
    %v1744 = vmax.f32 %v1742, 0.0
    %v1745 = vsub.f32 %v1715, %v1735
    %v1746 = vsub.f32 %v1716, %v1736
    %v1747 = vadd.f32 %v1743, 1e-05
    %v1748 = vadd.f32 %v1744, 1e-05
    %v1749 = vrsqrt.pop %v1747
    %v1750 = vrsqrt.pop %v1748
    %v1751 = vmul.f32 %v1745, %v1749
    %v1752 = vmul.f32 %v1746, %v1750
    %v1754 = vlaneseq
    %v1755 = vshrl.u32 %v1754, 7
    %v1756 = vsub.s32 0, %v1755
    %v1757 = vrot.slane %v1718, %v1756
    %v1759 = vmul.f32 %v1751, %v1757
    %v1760 = vmul.f32 %v1752, %v1757
    %v1762 = vlaneseq
    %v1763 = vshrl.u32 %v1762, 7
    %v1764 = vsub.s32 0, %v1763
    %v1765 = vrot.slane %v1720, %v1764
    %v1767 = vadd.f32 %v1759, %v1765
    %v1768 = vadd.f32 %v1760, %v1765
    %s1769 = scalar_lea.vmem %s7, 32
    %v1770 = vld [vmem:[%s1769] sm:$0xff]
    %v1771 = vld [vmem:[%s1769 + $0x8] sm:$0xff]
    %v1772 = vld [vmem:[%s1769 + $0x10] sm:$0xff]
    %v1773 = vld [vmem:[%s1769 + $0x18] sm:$0xff]
    %s1774 = scalar_lea.vmem %s8, 1
    %v1775 = vld [vmem:[%s1774] sm:$0x1]
    %v1777 = vlaneseq
    %v1778 = vshrl.u32 %v1777, 7
    %v1779 = vsub.s32 0, %v1778
    %v1780 = vrot.slane %v1775, %v1779
    %v1783 = vsel %vm84, %v1767, 0
    %v1786 = vsel %vm84, %v1768, 0
    %1788 = vmatprep.subr.mxu0 0.0
    %1789 = vmatpush1.msra.mxu0 %v1770
    %1790 = vmatprep.subr.mxu0 0.0
    %1791 = vmatpush1.msra.mxu0 %v1771
    %1792 = vmatprep.subr.mxu0 0.0
    %1793 = vmatpush1.msra.mxu0 %v1772
    %1794 = vmatprep.subr.mxu0 0.0
    %1795 = vmatpush1.msra.mxu0 %v1773
    %1796 = vmatprep.subr.mxu0 0.0
    %1797 = vmatpush1.msra.mxu0 0.0
    %1798 = vmatprep.subr.mxu0 0.0
    %1799 = vmatpush1.msra.mxu0 0.0
    %1800 = vmatprep.subr.mxu0 0.0
    %1801 = vmatpush1.msra.mxu0 0.0
    %1802 = vmatprep.subr.mxu0 0.0
    %1803 = vmatpush1.msra.mxu0 0.0
    %1804 = vmatprep.subr.mxu0 0.0
    %1805 = vmatpush1.msra.mxu0 0.0
    %1806 = vmatprep.subr.mxu0 0.0
    %1807 = vmatpush1.msra.mxu0 0.0
    %1808 = vmatprep.subr.mxu0 0.0
    %1809 = vmatpush1.msra.mxu0 0.0
    %1810 = vmatprep.subr.mxu0 0.0
    %1811 = vmatpush1.msra.mxu0 0.0
    %1812 = vmatprep.subr.mxu0 0.0
    %1813 = vmatpush1.msra.mxu0 0.0
    %1814 = vmatprep.subr.mxu0 0.0
    %1815 = vmatpush1.msra.mxu0 0.0
    %1816 = vmatprep.subr.mxu0 0.0
    %1817 = vmatpush1.msra.mxu0 0.0
    %1818 = vmatprep.subr.mxu0 0.0
    %1819 = vmatpush1.msra.mxu0 0.0
    %1820 = vmatprep.subr.mxu0 0.0
    %1821 = vmatpush1.msra.mxu0 0.0
    %1822 = vmatprep.subr.mxu0 0.0
    %1823 = vmatpush1.msra.mxu0 0.0
    %1824 = vmatprep.subr.mxu0 0.0
    %1825 = vmatpush1.msra.mxu0 0.0
    %1826 = vmatprep.subr.mxu0 0.0
    %1827 = vmatpush1.msra.mxu0 0.0
    %1828 = vmatprep.subr.mxu0 0.0
    %1829 = vmatpush1.msra.mxu0 0.0
    %1830 = vmatprep.subr.mxu0 0.0
    %1831 = vmatpush1.msra.mxu0 0.0
    %1832 = vmatprep.subr.mxu0 0.0
    %1833 = vmatpush1.msra.mxu0 0.0
    %1834 = vmatprep.subr.mxu0 0.0
    %1835 = vmatpush1.msra.mxu0 0.0
    %1836 = vmatprep.subr.mxu0 0.0
    %1837 = vmatpush1.msra.mxu0 0.0
    %1838 = vmatprep.subr.mxu0 0.0
    %1839 = vmatpush1.msra.mxu0 0.0
    %1840 = vmatprep.subr.mxu0 0.0
    %1841 = vmatpush1.msra.mxu0 0.0
    %1842 = vmatprep.subr.mxu0 0.0
    %1843 = vmatpush1.msra.mxu0 0.0
    %1844 = vmatprep.subr.mxu0 0.0
    %1845 = vmatpush1.msra.mxu0 0.0
    %1846 = vmatprep.subr.mxu0 0.0
    %1847 = vmatpush1.msra.mxu0 0.0
    %1848 = vmatprep.subr.mxu0 0.0
    %1849 = vmatpush1.msra.mxu0 0.0
    %1850 = vmatprep.subr.mxu0 0.0
    %1851 = vmatpush1.msra.mxu0 0.0
    %1852 = vmatprep.mubr.f32.mxu0 0.0
    %1853 = vmatmul.mubr.f32.gmra.mrb[0].mxu0 %v1783
    %v1854 = vpop.f32.mrb[0].mxu0
    %v1855 = vadd.f32 %v1780, %v1854
    %v1856 = vpop.f32.mrb[0].mxu0
    %1857 = vmatprep.mubr.f32.mxu0 0.0
    %1858 = vmatmul.mubr.f32.gmra.mrb[0].mxu0 %v1786
    %v1859 = vpop.f32.mrb[0].mxu0
    %v1860 = vadd.f32 %v1780, %v1859
    %v1861 = vpop.f32.mrb[0].mxu0
    %1862 = vdwg.mxu0
    %v1863 = vmul.f32 %v1855, 0.35355338
    %v1864 = vmul.f32 %v1860, 0.35355338
    %1867 = vrot.lane.b32.xlu0 %v1855, 96
    %v1868 = vpop.permute.xlu0 %1867
    %1869 = vrot.lane.b32.xlu0 %v1860, 96
    %v1870 = vpop.permute.xlu0 %1869
    %v1872 = vsel %vm233, %v1863, 0
    %v1875 = vsel %vm233, %v1864, 0
    %v1877 = vsel %vm233, %v1868, 0
    %v1879 = vsel %vm233, %v1870, 0
    %1881 = vmatprep.subr.mxu0 0.0
    %1882 = vmatpush1.xpose.msra.mxu0 %v1877
    %1883 = vmatprep.subr.mxu0 0.0
    %1884 = vmatpush1.xpose.msra.mxu0 %v1879
    %1885 = vmatprep.subr.mxu0 0.0
    %1886 = vmatpush1.xpose.msra.mxu0 0.0
    %1887 = vmatprep.subr.mxu0 0.0
    %1888 = vmatpush1.xpose.msra.mxu0 0.0
    %1889 = vmatprep.subr.mxu0 0.0
    %1890 = vmatpush1.xpose.msra.mxu0 0.0
    %1891 = vmatprep.subr.mxu0 0.0
    %1892 = vmatpush1.xpose.msra.mxu0 0.0
    %1893 = vmatprep.subr.mxu0 0.0
    %1894 = vmatpush1.xpose.msra.mxu0 0.0
    %1895 = vmatprep.subr.mxu0 0.0
    %1896 = vmatpush1.xpose.msra.mxu0 0.0
    %1897 = vmatprep.subr.mxu0 0.0
    %1898 = vmatpush1.xpose.msra.mxu0 0.0
    %1899 = vmatprep.subr.mxu0 0.0
    %1900 = vmatpush1.xpose.msra.mxu0 0.0
    %1901 = vmatprep.subr.mxu0 0.0
    %1902 = vmatpush1.xpose.msra.mxu0 0.0
    %1903 = vmatprep.subr.mxu0 0.0
    %1904 = vmatpush1.xpose.msra.mxu0 0.0
    %1905 = vmatprep.subr.mxu0 0.0
    %1906 = vmatpush1.xpose.msra.mxu0 0.0
    %1907 = vmatprep.subr.mxu0 0.0
    %1908 = vmatpush1.xpose.msra.mxu0 0.0
    %1909 = vmatprep.subr.mxu0 0.0
    %1910 = vmatpush1.xpose.msra.mxu0 0.0
    %1911 = vmatprep.subr.mxu0 0.0
    %1912 = vmatpush1.xpose.msra.mxu0 0.0
    %1913 = vmatprep.subr.mxu0 0.0
    %1914 = vmatpush1.xpose.msra.mxu0 0.0
    %1915 = vmatprep.subr.mxu0 0.0
    %1916 = vmatpush1.xpose.msra.mxu0 0.0
    %1917 = vmatprep.subr.mxu0 0.0
    %1918 = vmatpush1.xpose.msra.mxu0 0.0
    %1919 = vmatprep.subr.mxu0 0.0
    %1920 = vmatpush1.xpose.msra.mxu0 0.0
    %1921 = vmatprep.subr.mxu0 0.0
    %1922 = vmatpush1.xpose.msra.mxu0 0.0
    %1923 = vmatprep.subr.mxu0 0.0
    %1924 = vmatpush1.xpose.msra.mxu0 0.0
    %1925 = vmatprep.subr.mxu0 0.0
    %1926 = vmatpush1.xpose.msra.mxu0 0.0
    %1927 = vmatprep.subr.mxu0 0.0
    %1928 = vmatpush1.xpose.msra.mxu0 0.0
    %1929 = vmatprep.subr.mxu0 0.0
    %1930 = vmatpush1.xpose.msra.mxu0 0.0
    %1931 = vmatprep.subr.mxu0 0.0
    %1932 = vmatpush1.xpose.msra.mxu0 0.0
    %1933 = vmatprep.subr.mxu0 0.0
    %1934 = vmatpush1.xpose.msra.mxu0 0.0
    %1935 = vmatprep.subr.mxu0 0.0
    %1936 = vmatpush1.xpose.msra.mxu0 0.0
    %1937 = vmatprep.subr.mxu0 0.0
    %1938 = vmatpush1.xpose.msra.mxu0 0.0
    %1939 = vmatprep.subr.mxu0 0.0
    %1940 = vmatpush1.xpose.msra.mxu0 0.0
    %1941 = vmatprep.subr.mxu0 0.0
    %1942 = vmatpush1.xpose.msra.mxu0 0.0
    %1943 = vmatprep.subr.mxu0 0.0
    %1944 = vmatpush1.xpose.msra.mxu0 0.0
    %1945 = vmatprep.mubr.f32.mxu0 0.0
    %1946 = vmatmul.mubr.f32.gmra.mrb[0].mxu0 %v1872
    %v1947 = vpop.f32.mrb[0].mxu0
    %v1948 = vadd.f32 %v72, %v1947
    %v1949 = vpop.f32.mrb[0].mxu0
    %1950 = vmatprep.mubr.f32.mxu0 0.0
    %1951 = vmatmul.mubr.f32.gmra.mrb[0].mxu0 %v1875
    %v1952 = vpop.f32.mrb[0].mxu0
    %v1953 = vadd.f32 %v73, %v1952
    %v1954 = vpop.f32.mrb[0].mxu0
    %1955 = vdwg.mxu0
    %1956 = vrot.lane.b32.xlu0 %v1863, 120
    %v1957 = vpop.permute.xlu0 %1956
    %1958 = vrot.lane.b32.xlu0 %v1864, 120
    %v1959 = vpop.permute.xlu0 %1958
    %1960 = vrot.lane.b32.xlu0 %v1855, 88
    %v1961 = vpop.permute.xlu0 %1960
    %1962 = vrot.lane.b32.xlu0 %v1860, 88
    %v1963 = vpop.permute.xlu0 %1962
    %v1964 = vsel %vm233, %v1957, 0
    %v1966 = vsel %vm233, %v1959, 0
    %v1968 = vsel %vm233, %v1961, 0
    %v1970 = vsel %vm233, %v1963, 0
    %1972 = vmatprep.subr.mxu0 0.0
    %1973 = vmatpush1.xpose.msra.mxu0 %v1968
    %1974 = vmatprep.subr.mxu0 0.0
    %1975 = vmatpush1.xpose.msra.mxu0 %v1970
    %1976 = vmatprep.subr.mxu0 0.0
    %1977 = vmatpush1.xpose.msra.mxu0 0.0
    %1978 = vmatprep.subr.mxu0 0.0
    %1979 = vmatpush1.xpose.msra.mxu0 0.0
    %1980 = vmatprep.subr.mxu0 0.0
    %1981 = vmatpush1.xpose.msra.mxu0 0.0
    %1982 = vmatprep.subr.mxu0 0.0
    %1983 = vmatpush1.xpose.msra.mxu0 0.0
    %1984 = vmatprep.subr.mxu0 0.0
    %1985 = vmatpush1.xpose.msra.mxu0 0.0
    %1986 = vmatprep.subr.mxu0 0.0
    %1987 = vmatpush1.xpose.msra.mxu0 0.0
    %1988 = vmatprep.subr.mxu0 0.0
    %1989 = vmatpush1.xpose.msra.mxu0 0.0
    %1990 = vmatprep.subr.mxu0 0.0
    %1991 = vmatpush1.xpose.msra.mxu0 0.0
    %1992 = vmatprep.subr.mxu0 0.0
    %1993 = vmatpush1.xpose.msra.mxu0 0.0
    %1994 = vmatprep.subr.mxu0 0.0
    %1995 = vmatpush1.xpose.msra.mxu0 0.0
    %1996 = vmatprep.subr.mxu0 0.0
    %1997 = vmatpush1.xpose.msra.mxu0 0.0
    %1998 = vmatprep.subr.mxu0 0.0
    %1999 = vmatpush1.xpose.msra.mxu0 0.0
    %2000 = vmatprep.subr.mxu0 0.0
    %2001 = vmatpush1.xpose.msra.mxu0 0.0
    %2002 = vmatprep.subr.mxu0 0.0
    %2003 = vmatpush1.xpose.msra.mxu0 0.0
    %2004 = vmatprep.subr.mxu0 0.0
    %2005 = vmatpush1.xpose.msra.mxu0 0.0
    %2006 = vmatprep.subr.mxu0 0.0
    %2007 = vmatpush1.xpose.msra.mxu0 0.0
    %2008 = vmatprep.subr.mxu0 0.0
    %2009 = vmatpush1.xpose.msra.mxu0 0.0
    %2010 = vmatprep.subr.mxu0 0.0
    %2011 = vmatpush1.xpose.msra.mxu0 0.0
    %2012 = vmatprep.subr.mxu0 0.0
    %2013 = vmatpush1.xpose.msra.mxu0 0.0
    %2014 = vmatprep.subr.mxu0 0.0
    %2015 = vmatpush1.xpose.msra.mxu0 0.0
    %2016 = vmatprep.subr.mxu0 0.0
    %2017 = vmatpush1.xpose.msra.mxu0 0.0
    %2018 = vmatprep.subr.mxu0 0.0
    %2019 = vmatpush1.xpose.msra.mxu0 0.0
    %2020 = vmatprep.subr.mxu0 0.0
    %2021 = vmatpush1.xpose.msra.mxu0 0.0
    %2022 = vmatprep.subr.mxu0 0.0
    %2023 = vmatpush1.xpose.msra.mxu0 0.0
    %2024 = vmatprep.subr.mxu0 0.0
    %2025 = vmatpush1.xpose.msra.mxu0 0.0
    %2026 = vmatprep.subr.mxu0 0.0
    %2027 = vmatpush1.xpose.msra.mxu0 0.0
    %2028 = vmatprep.subr.mxu0 0.0
    %2029 = vmatpush1.xpose.msra.mxu0 0.0
    %2030 = vmatprep.subr.mxu0 0.0
    %2031 = vmatpush1.xpose.msra.mxu0 0.0
    %2032 = vmatprep.subr.mxu0 0.0
    %2033 = vmatpush1.xpose.msra.mxu0 0.0
    %2034 = vmatprep.subr.mxu0 0.0
    %2035 = vmatpush1.xpose.msra.mxu0 0.0
    %2036 = vmatprep.mubr.f32.mxu0 0.0
    %2037 = vmatmul.mubr.f32.gmra.mrb[0].mxu0 %v1964
    %v2038 = vpop.f32.mrb[0].mxu0
    %v2039 = vadd.f32 %v72, %v2038
    %v2040 = vpop.f32.mrb[0].mxu0
    %2041 = vmatprep.mubr.f32.mxu0 0.0
    %2042 = vmatmul.mubr.f32.gmra.mrb[0].mxu0 %v1966
    %v2043 = vpop.f32.mrb[0].mxu0
    %v2044 = vadd.f32 %v73, %v2043
    %v2045 = vpop.f32.mrb[0].mxu0
    %2046 = vdwg.mxu0
    %2047 = vrot.lane.b32.xlu0 %v1863, 112
    %v2048 = vpop.permute.xlu0 %2047
    %2049 = vrot.lane.b32.xlu0 %v1864, 112
    %v2050 = vpop.permute.xlu0 %2049
    %2051 = vrot.lane.b32.xlu0 %v1855, 80
    %v2052 = vpop.permute.xlu0 %2051
    %2053 = vrot.lane.b32.xlu0 %v1860, 80
    %v2054 = vpop.permute.xlu0 %2053
    %v2055 = vsel %vm233, %v2048, 0
    %v2057 = vsel %vm233, %v2050, 0
    %v2059 = vsel %vm233, %v2052, 0
    %v2061 = vsel %vm233, %v2054, 0
    %2063 = vmatprep.subr.mxu0 0.0
    %2064 = vmatpush1.xpose.msra.mxu0 %v2059
    %2065 = vmatprep.subr.mxu0 0.0
    %2066 = vmatpush1.xpose.msra.mxu0 %v2061
    %2067 = vmatprep.subr.mxu0 0.0
    %2068 = vmatpush1.xpose.msra.mxu0 0.0
    %2069 = vmatprep.subr.mxu0 0.0
    %2070 = vmatpush1.xpose.msra.mxu0 0.0
    %2071 = vmatprep.subr.mxu0 0.0
    %2072 = vmatpush1.xpose.msra.mxu0 0.0
    %2073 = vmatprep.subr.mxu0 0.0
    %2074 = vmatpush1.xpose.msra.mxu0 0.0
    %2075 = vmatprep.subr.mxu0 0.0
    %2076 = vmatpush1.xpose.msra.mxu0 0.0
    %2077 = vmatprep.subr.mxu0 0.0
    %2078 = vmatpush1.xpose.msra.mxu0 0.0
    %2079 = vmatprep.subr.mxu0 0.0
    %2080 = vmatpush1.xpose.msra.mxu0 0.0
    %2081 = vmatprep.subr.mxu0 0.0
    %2082 = vmatpush1.xpose.msra.mxu0 0.0
    %2083 = vmatprep.subr.mxu0 0.0
    %2084 = vmatpush1.xpose.msra.mxu0 0.0
    %2085 = vmatprep.subr.mxu0 0.0
    %2086 = vmatpush1.xpose.msra.mxu0 0.0
    %2087 = vmatprep.subr.mxu0 0.0
    %2088 = vmatpush1.xpose.msra.mxu0 0.0
    %2089 = vmatprep.subr.mxu0 0.0
    %2090 = vmatpush1.xpose.msra.mxu0 0.0
    %2091 = vmatprep.subr.mxu0 0.0
    %2092 = vmatpush1.xpose.msra.mxu0 0.0
    %2093 = vmatprep.subr.mxu0 0.0
    %2094 = vmatpush1.xpose.msra.mxu0 0.0
    %2095 = vmatprep.subr.mxu0 0.0
    %2096 = vmatpush1.xpose.msra.mxu0 0.0
    %2097 = vmatprep.subr.mxu0 0.0
    %2098 = vmatpush1.xpose.msra.mxu0 0.0
    %2099 = vmatprep.subr.mxu0 0.0
    %2100 = vmatpush1.xpose.msra.mxu0 0.0
    %2101 = vmatprep.subr.mxu0 0.0
    %2102 = vmatpush1.xpose.msra.mxu0 0.0
    %2103 = vmatprep.subr.mxu0 0.0
    %2104 = vmatpush1.xpose.msra.mxu0 0.0
    %2105 = vmatprep.subr.mxu0 0.0
    %2106 = vmatpush1.xpose.msra.mxu0 0.0
    %2107 = vmatprep.subr.mxu0 0.0
    %2108 = vmatpush1.xpose.msra.mxu0 0.0
    %2109 = vmatprep.subr.mxu0 0.0
    %2110 = vmatpush1.xpose.msra.mxu0 0.0
    %2111 = vmatprep.subr.mxu0 0.0
    %2112 = vmatpush1.xpose.msra.mxu0 0.0
    %2113 = vmatprep.subr.mxu0 0.0
    %2114 = vmatpush1.xpose.msra.mxu0 0.0
    %2115 = vmatprep.subr.mxu0 0.0
    %2116 = vmatpush1.xpose.msra.mxu0 0.0
    %2117 = vmatprep.subr.mxu0 0.0
    %2118 = vmatpush1.xpose.msra.mxu0 0.0
    %2119 = vmatprep.subr.mxu0 0.0
    %2120 = vmatpush1.xpose.msra.mxu0 0.0
    %2121 = vmatprep.subr.mxu0 0.0
    %2122 = vmatpush1.xpose.msra.mxu0 0.0
    %2123 = vmatprep.subr.mxu0 0.0
    %2124 = vmatpush1.xpose.msra.mxu0 0.0
    %2125 = vmatprep.subr.mxu0 0.0
    %2126 = vmatpush1.xpose.msra.mxu0 0.0
    %2127 = vmatprep.mubr.f32.mxu0 0.0
    %2128 = vmatmul.mubr.f32.gmra.mrb[0].mxu0 %v2055
    %v2129 = vpop.f32.mrb[0].mxu0
    %v2130 = vadd.f32 %v72, %v2129
    %v2131 = vpop.f32.mrb[0].mxu0
    %2132 = vmatprep.mubr.f32.mxu0 0.0
    %2133 = vmatmul.mubr.f32.gmra.mrb[0].mxu0 %v2057
    %v2134 = vpop.f32.mrb[0].mxu0
    %v2135 = vadd.f32 %v73, %v2134
    %v2136 = vpop.f32.mrb[0].mxu0
    %2137 = vdwg.mxu0
    %2138 = vrot.lane.b32.xlu0 %v1863, 104
    %v2139 = vpop.permute.xlu0 %2138
    %2140 = vrot.lane.b32.xlu0 %v1864, 104
    %v2141 = vpop.permute.xlu0 %2140
    %2142 = vrot.lane.b32.xlu0 %v1855, 72
    %v2143 = vpop.permute.xlu0 %2142
    %2144 = vrot.lane.b32.xlu0 %v1860, 72
    %v2145 = vpop.permute.xlu0 %2144
    %v2146 = vsel %vm233, %v2139, 0
    %v2148 = vsel %vm233, %v2141, 0
    %v2150 = vsel %vm233, %v2143, 0
    %v2152 = vsel %vm233, %v2145, 0
    %2154 = vmatprep.subr.mxu0 0.0
    %2155 = vmatpush1.xpose.msra.mxu0 %v2150
    %2156 = vmatprep.subr.mxu0 0.0
    %2157 = vmatpush1.xpose.msra.mxu0 %v2152
    %2158 = vmatprep.subr.mxu0 0.0
    %2159 = vmatpush1.xpose.msra.mxu0 0.0
    %2160 = vmatprep.subr.mxu0 0.0
    %2161 = vmatpush1.xpose.msra.mxu0 0.0
    %2162 = vmatprep.subr.mxu0 0.0
    %2163 = vmatpush1.xpose.msra.mxu0 0.0
    %2164 = vmatprep.subr.mxu0 0.0
    %2165 = vmatpush1.xpose.msra.mxu0 0.0
    %2166 = vmatprep.subr.mxu0 0.0
    %2167 = vmatpush1.xpose.msra.mxu0 0.0
    %2168 = vmatprep.subr.mxu0 0.0
    %2169 = vmatpush1.xpose.msra.mxu0 0.0
    %2170 = vmatprep.subr.mxu0 0.0
    %2171 = vmatpush1.xpose.msra.mxu0 0.0
    %2172 = vmatprep.subr.mxu0 0.0
    %2173 = vmatpush1.xpose.msra.mxu0 0.0
    %2174 = vmatprep.subr.mxu0 0.0
    %2175 = vmatpush1.xpose.msra.mxu0 0.0
    %2176 = vmatprep.subr.mxu0 0.0
    %2177 = vmatpush1.xpose.msra.mxu0 0.0
    %2178 = vmatprep.subr.mxu0 0.0
    %2179 = vmatpush1.xpose.msra.mxu0 0.0
    %2180 = vmatprep.subr.mxu0 0.0
    %2181 = vmatpush1.xpose.msra.mxu0 0.0
    %2182 = vmatprep.subr.mxu0 0.0
    %2183 = vmatpush1.xpose.msra.mxu0 0.0
    %2184 = vmatprep.subr.mxu0 0.0
    %2185 = vmatpush1.xpose.msra.mxu0 0.0
    %2186 = vmatprep.subr.mxu0 0.0
    %2187 = vmatpush1.xpose.msra.mxu0 0.0
    %2188 = vmatprep.subr.mxu0 0.0
    %2189 = vmatpush1.xpose.msra.mxu0 0.0
    %2190 = vmatprep.subr.mxu0 0.0
    %2191 = vmatpush1.xpose.msra.mxu0 0.0
    %2192 = vmatprep.subr.mxu0 0.0
    %2193 = vmatpush1.xpose.msra.mxu0 0.0
    %2194 = vmatprep.subr.mxu0 0.0
    %2195 = vmatpush1.xpose.msra.mxu0 0.0
    %2196 = vmatprep.subr.mxu0 0.0
    %2197 = vmatpush1.xpose.msra.mxu0 0.0
    %2198 = vmatprep.subr.mxu0 0.0
    %2199 = vmatpush1.xpose.msra.mxu0 0.0
    %2200 = vmatprep.subr.mxu0 0.0
    %2201 = vmatpush1.xpose.msra.mxu0 0.0
    %2202 = vmatprep.subr.mxu0 0.0
    %2203 = vmatpush1.xpose.msra.mxu0 0.0
    %2204 = vmatprep.subr.mxu0 0.0
    %2205 = vmatpush1.xpose.msra.mxu0 0.0
    %2206 = vmatprep.subr.mxu0 0.0
    %2207 = vmatpush1.xpose.msra.mxu0 0.0
    %2208 = vmatprep.subr.mxu0 0.0
    %2209 = vmatpush1.xpose.msra.mxu0 0.0
    %2210 = vmatprep.subr.mxu0 0.0
    %2211 = vmatpush1.xpose.msra.mxu0 0.0
    %2212 = vmatprep.subr.mxu0 0.0
    %2213 = vmatpush1.xpose.msra.mxu0 0.0
    %2214 = vmatprep.subr.mxu0 0.0
    %2215 = vmatpush1.xpose.msra.mxu0 0.0
    %2216 = vmatprep.subr.mxu0 0.0
    %2217 = vmatpush1.xpose.msra.mxu0 0.0
    %2218 = vmatprep.mubr.f32.mxu0 0.0
    %2219 = vmatmul.mubr.f32.gmra.mrb[0].mxu0 %v2146
    %v2220 = vpop.f32.mrb[0].mxu0
    %v2221 = vadd.f32 %v72, %v2220
    %v2222 = vpop.f32.mrb[0].mxu0
    %2223 = vmatprep.mubr.f32.mxu0 0.0
    %2224 = vmatmul.mubr.f32.gmra.mrb[0].mxu0 %v2148
    %v2225 = vpop.f32.mrb[0].mxu0
    %v2226 = vadd.f32 %v73, %v2225
    %v2227 = vpop.f32.mrb[0].mxu0
    %2228 = vdwg.mxu0
    %2231 = vrot.lane.b32.xlu0 %v2039, 16
    %v2232 = vpop.permute.xlu0 %2231
    %2233 = vrot.lane.b32.xlu0 %v2044, 16
    %v2234 = vpop.permute.xlu0 %2233
    %2239 = vrot.lane.b32.xlu0 %v2130, 32
    %v2240 = vpop.permute.xlu0 %2239
    %2241 = vrot.lane.b32.xlu0 %v2135, 32
    %v2242 = vpop.permute.xlu0 %2241
    %2247 = vrot.lane.b32.xlu0 %v2221, 48
    %v2248 = vpop.permute.xlu0 %2247
    %2249 = vrot.lane.b32.xlu0 %v2226, 48
    %v2250 = vpop.permute.xlu0 %2249
    %v2253 = vsel %vm616, %v1948, %v2232
    %v2254 = vsel %vm616, %v1953, %v2234
    %v2255 = vsel %vm84, %v2253, %v2240
    %v2256 = vsel %vm84, %v2254, %v2242
    %v2257 = vsel %vm621, %v2255, %v2248
    %v2258 = vsel %vm621, %v2256, %v2250
    %v2259 = vsel %vm624, %v2257, -inf
    %2260 = vmax.xlane.f32.xlu0 %v2259
    %v2261 = vpop.xlane.xlu0 %2260
    %v2262 = vsel %vm624, %v2258, -inf
    %2263 = vmax.xlane.f32.xlu0 %v2262
    %v2264 = vpop.xlane.xlu0 %2263
    %v2265 = vsub.f32 %v2257, %v2261
    %v2266 = vsub.f32 %v2258, %v2264
    %v2267 = vmul.f32 %v2265, 1.442695
    %v2268 = vpow.pop %v2267
    %v2269 = vmul.f32 %v2266, 1.442695
    %v2270 = vpow.pop %v2269
    %v2272 = vsel %vm624, %v2268, 0
    %v2275 = vsel %vm624, %v2270, 0
    %2277 = vmatprep.subr.mxu0 0.0
    %2278 = vmatpush1.msra.mxu0 %v74
    %2279 = vmatprep.subr.mxu0 0.0
    %2280 = vmatpush1.msra.mxu0 %v75
    %2281 = vmatprep.subr.mxu0 0.0
    %2282 = vmatpush1.msra.mxu0 %v76
    %2283 = vmatprep.subr.mxu0 0.0
    %2284 = vmatpush1.msra.mxu0 %v77
    %2285 = vmatprep.subr.mxu0 0.0
    %2286 = vmatpush1.msra.mxu0 %v78
    %2287 = vmatprep.subr.mxu0 0.0
    %2288 = vmatpush1.msra.mxu0 %v79
    %2289 = vmatprep.subr.mxu0 0.0
    %2290 = vmatpush1.msra.mxu0 %v80
    %2291 = vmatprep.subr.mxu0 0.0
    %2292 = vmatpush1.msra.mxu0 %v81
    %2293 = vmatprep.subr.mxu0 0.0
    %2294 = vmatpush1.msra.mxu0 0.0
    %2295 = vmatprep.subr.mxu0 0.0
    %2296 = vmatpush1.msra.mxu0 0.0
    %2297 = vmatprep.subr.mxu0 0.0
    %2298 = vmatpush1.msra.mxu0 0.0
    %2299 = vmatprep.subr.mxu0 0.0
    %2300 = vmatpush1.msra.mxu0 0.0
    %2301 = vmatprep.subr.mxu0 0.0
    %2302 = vmatpush1.msra.mxu0 0.0
    %2303 = vmatprep.subr.mxu0 0.0
    %2304 = vmatpush1.msra.mxu0 0.0
    %2305 = vmatprep.subr.mxu0 0.0
    %2306 = vmatpush1.msra.mxu0 0.0
    %2307 = vmatprep.subr.mxu0 0.0
    %2308 = vmatpush1.msra.mxu0 0.0
    %2309 = vmatprep.subr.mxu0 0.0
    %2310 = vmatpush1.msra.mxu0 0.0
    %2311 = vmatprep.subr.mxu0 0.0
    %2312 = vmatpush1.msra.mxu0 0.0
    %2313 = vmatprep.subr.mxu0 0.0
    %2314 = vmatpush1.msra.mxu0 0.0
    %2315 = vmatprep.subr.mxu0 0.0
    %2316 = vmatpush1.msra.mxu0 0.0
    %2317 = vmatprep.subr.mxu0 0.0
    %2318 = vmatpush1.msra.mxu0 0.0
    %2319 = vmatprep.subr.mxu0 0.0
    %2320 = vmatpush1.msra.mxu0 0.0
    %2321 = vmatprep.subr.mxu0 0.0
    %2322 = vmatpush1.msra.mxu0 0.0
    %2323 = vmatprep.subr.mxu0 0.0
    %2324 = vmatpush1.msra.mxu0 0.0
    %2325 = vmatprep.subr.mxu0 0.0
    %2326 = vmatpush1.msra.mxu0 0.0
    %2327 = vmatprep.subr.mxu0 0.0
    %2328 = vmatpush1.msra.mxu0 0.0
    %2329 = vmatprep.subr.mxu0 0.0
    %2330 = vmatpush1.msra.mxu0 0.0
    %2331 = vmatprep.subr.mxu0 0.0
    %2332 = vmatpush1.msra.mxu0 0.0
    %2333 = vmatprep.subr.mxu0 0.0
    %2334 = vmatpush1.msra.mxu0 0.0
    %2335 = vmatprep.subr.mxu0 0.0
    %2336 = vmatpush1.msra.mxu0 0.0
    %2337 = vmatprep.subr.mxu0 0.0
    %2338 = vmatpush1.msra.mxu0 0.0
    %2339 = vmatprep.subr.mxu0 0.0
    %2340 = vmatpush1.msra.mxu0 0.0
    %2341 = vmatprep.mubr.f32.mxu0 0.0
    %2342 = vmatmul.mubr.f32.gmra.mrb[0].mxu0 %v2272
    %v2343 = vpop.f32.mrb[0].mxu0
    %v2344 = vadd.f32 0.0, %v2343
    %v2345 = vpop.f32.mrb[0].mxu0
    %2346 = vmatprep.mubr.f32.mxu0 0.0
    %2347 = vmatmul.mubr.f32.gmra.mrb[0].mxu0 %v2275
    %v2348 = vpop.f32.mrb[0].mxu0
    %v2349 = vadd.f32 0.0, %v2348
    %v2350 = vpop.f32.mrb[0].mxu0
    %2351 = vdwg.mxu0
    %v2352 = vrcp.pop %v2344
    %v2353 = vrcp.pop %v2349
    %s2354 = scalar_lea.vmem %s9, 32
    %v2355 = vld [vmem:[%s2354] sm:$0xff]
    %v2356 = vld [vmem:[%s2354 + $0x8] sm:$0xff]
    %v2357 = vld [vmem:[%s2354 + $0x10] sm:$0xff]
    %v2358 = vld [vmem:[%s2354 + $0x18] sm:$0xff]
    %2359 = vrot.lane.b32.xlu0 %v1855, 64
    %v2360 = vpop.permute.xlu0 %2359
    %2361 = vrot.lane.b32.xlu0 %v1860, 64
    %v2362 = vpop.permute.xlu0 %2361
    %v2365 = vsel %vm616, %v2268, 0
    %v2367 = vsel %vm616, %v2270, 0
    %2369 = vmatprep.subr.mxu0 0.0
    %2370 = vmatpush1.msra.mxu0 %v2360
    %2371 = vmatprep.subr.mxu0 0.0
    %2372 = vmatpush1.msra.mxu0 %v2362
    %2373 = vmatprep.subr.mxu0 0.0
    %2374 = vmatpush1.msra.mxu0 0.0
    %2375 = vmatprep.subr.mxu0 0.0
    %2376 = vmatpush1.msra.mxu0 0.0
    %2377 = vmatprep.subr.mxu0 0.0
    %2378 = vmatpush1.msra.mxu0 0.0
    %2379 = vmatprep.subr.mxu0 0.0
    %2380 = vmatpush1.msra.mxu0 0.0
    %2381 = vmatprep.subr.mxu0 0.0
    %2382 = vmatpush1.msra.mxu0 0.0
    %2383 = vmatprep.subr.mxu0 0.0
    %2384 = vmatpush1.msra.mxu0 0.0
    %2385 = vmatprep.subr.mxu0 0.0
    %2386 = vmatpush1.msra.mxu0 0.0
    %2387 = vmatprep.subr.mxu0 0.0
    %2388 = vmatpush1.msra.mxu0 0.0
    %2389 = vmatprep.subr.mxu0 0.0
    %2390 = vmatpush1.msra.mxu0 0.0
    %2391 = vmatprep.subr.mxu0 0.0
    %2392 = vmatpush1.msra.mxu0 0.0
    %2393 = vmatprep.subr.mxu0 0.0
    %2394 = vmatpush1.msra.mxu0 0.0
    %2395 = vmatprep.subr.mxu0 0.0
    %2396 = vmatpush1.msra.mxu0 0.0
    %2397 = vmatprep.subr.mxu0 0.0
    %2398 = vmatpush1.msra.mxu0 0.0
    %2399 = vmatprep.subr.mxu0 0.0
    %2400 = vmatpush1.msra.mxu0 0.0
    %2401 = vmatprep.subr.mxu0 0.0
    %2402 = vmatpush1.msra.mxu0 0.0
    %2403 = vmatprep.subr.mxu0 0.0
    %2404 = vmatpush1.msra.mxu0 0.0
    %2405 = vmatprep.subr.mxu0 0.0
    %2406 = vmatpush1.msra.mxu0 0.0
    %2407 = vmatprep.subr.mxu0 0.0
    %2408 = vmatpush1.msra.mxu0 0.0
    %2409 = vmatprep.subr.mxu0 0.0
    %2410 = vmatpush1.msra.mxu0 0.0
    %2411 = vmatprep.subr.mxu0 0.0
    %2412 = vmatpush1.msra.mxu0 0.0
    %2413 = vmatprep.subr.mxu0 0.0
    %2414 = vmatpush1.msra.mxu0 0.0
    %2415 = vmatprep.subr.mxu0 0.0
    %2416 = vmatpush1.msra.mxu0 0.0
    %2417 = vmatprep.subr.mxu0 0.0
    %2418 = vmatpush1.msra.mxu0 0.0
    %2419 = vmatprep.subr.mxu0 0.0
    %2420 = vmatpush1.msra.mxu0 0.0
    %2421 = vmatprep.subr.mxu0 0.0
    %2422 = vmatpush1.msra.mxu0 0.0
    %2423 = vmatprep.subr.mxu0 0.0
    %2424 = vmatpush1.msra.mxu0 0.0
    %2425 = vmatprep.subr.mxu0 0.0
    %2426 = vmatpush1.msra.mxu0 0.0
    %2427 = vmatprep.subr.mxu0 0.0
    %2428 = vmatpush1.msra.mxu0 0.0
    %2429 = vmatprep.subr.mxu0 0.0
    %2430 = vmatpush1.msra.mxu0 0.0
    %2431 = vmatprep.subr.mxu0 0.0
    %2432 = vmatpush1.msra.mxu0 0.0
    %2433 = vmatprep.mubr.f32.mxu0 0.0
    %2434 = vmatmul.mubr.f32.gmra.mrb[0].mxu0 %v2365
    %v2435 = vpop.f32.mrb[0].mxu0
    %v2436 = vadd.f32 0.0, %v2435
    %v2437 = vpop.f32.mrb[0].mxu0
    %2438 = vmatprep.mubr.f32.mxu0 0.0
    %2439 = vmatmul.mubr.f32.gmra.mrb[0].mxu0 %v2367
    %v2440 = vpop.f32.mrb[0].mxu0
    %v2441 = vadd.f32 0.0, %v2440
    %v2442 = vpop.f32.mrb[0].mxu0
    %2443 = vdwg.mxu0
    %2445 = vset.pattern.permute.xlu0 0
    %2446 = vperm.xlu0 %2445, %v2352
    %v2447 = vpop.permute.xlu0 %2446
    %2450 = vset.pattern.permute.xlu0 0
    %2451 = vperm.xlu0 %2450, %v2353
    %v2452 = vpop.permute.xlu0 %2451
    %v2454 = vmul.f32 %v2436, %v2447
    %v2455 = vmul.f32 %v2441, %v2452
    %2456 = vrot.lane.b32.xlu0 %v2268, 112
    %v2457 = vpop.permute.xlu0 %2456
    %2458 = vrot.lane.b32.xlu0 %v2270, 112
    %v2459 = vpop.permute.xlu0 %2458
    %2460 = vrot.lane.b32.xlu0 %v1855, 56
    %v2461 = vpop.permute.xlu0 %2460
    %2462 = vrot.lane.b32.xlu0 %v1860, 56
    %v2463 = vpop.permute.xlu0 %2462
    %v2466 = vsel %vm616, %v2457, 0
    %v2468 = vsel %vm616, %v2459, 0
    %2470 = vmatprep.subr.mxu0 0.0
    %2471 = vmatpush1.msra.mxu0 %v2461
    %2472 = vmatprep.subr.mxu0 0.0
    %2473 = vmatpush1.msra.mxu0 %v2463
    %2474 = vmatprep.subr.mxu0 0.0
    %2475 = vmatpush1.msra.mxu0 0.0
    %2476 = vmatprep.subr.mxu0 0.0
    %2477 = vmatpush1.msra.mxu0 0.0
    %2478 = vmatprep.subr.mxu0 0.0
    %2479 = vmatpush1.msra.mxu0 0.0
    %2480 = vmatprep.subr.mxu0 0.0
    %2481 = vmatpush1.msra.mxu0 0.0
    %2482 = vmatprep.subr.mxu0 0.0
    %2483 = vmatpush1.msra.mxu0 0.0
    %2484 = vmatprep.subr.mxu0 0.0
    %2485 = vmatpush1.msra.mxu0 0.0
    %2486 = vmatprep.subr.mxu0 0.0
    %2487 = vmatpush1.msra.mxu0 0.0
    %2488 = vmatprep.subr.mxu0 0.0
    %2489 = vmatpush1.msra.mxu0 0.0
    %2490 = vmatprep.subr.mxu0 0.0
    %2491 = vmatpush1.msra.mxu0 0.0
    %2492 = vmatprep.subr.mxu0 0.0
    %2493 = vmatpush1.msra.mxu0 0.0
    %2494 = vmatprep.subr.mxu0 0.0
    %2495 = vmatpush1.msra.mxu0 0.0
    %2496 = vmatprep.subr.mxu0 0.0
    %2497 = vmatpush1.msra.mxu0 0.0
    %2498 = vmatprep.subr.mxu0 0.0
    %2499 = vmatpush1.msra.mxu0 0.0
    %2500 = vmatprep.subr.mxu0 0.0
    %2501 = vmatpush1.msra.mxu0 0.0
    %2502 = vmatprep.subr.mxu0 0.0
    %2503 = vmatpush1.msra.mxu0 0.0
    %2504 = vmatprep.subr.mxu0 0.0
    %2505 = vmatpush1.msra.mxu0 0.0
    %2506 = vmatprep.subr.mxu0 0.0
    %2507 = vmatpush1.msra.mxu0 0.0
    %2508 = vmatprep.subr.mxu0 0.0
    %2509 = vmatpush1.msra.mxu0 0.0
    %2510 = vmatprep.subr.mxu0 0.0
    %2511 = vmatpush1.msra.mxu0 0.0
    %2512 = vmatprep.subr.mxu0 0.0
    %2513 = vmatpush1.msra.mxu0 0.0
    %2514 = vmatprep.subr.mxu0 0.0
    %2515 = vmatpush1.msra.mxu0 0.0
    %2516 = vmatprep.subr.mxu0 0.0
    %2517 = vmatpush1.msra.mxu0 0.0
    %2518 = vmatprep.subr.mxu0 0.0
    %2519 = vmatpush1.msra.mxu0 0.0
    %2520 = vmatprep.subr.mxu0 0.0
    %2521 = vmatpush1.msra.mxu0 0.0
    %2522 = vmatprep.subr.mxu0 0.0
    %2523 = vmatpush1.msra.mxu0 0.0
    %2524 = vmatprep.subr.mxu0 0.0
    %2525 = vmatpush1.msra.mxu0 0.0
    %2526 = vmatprep.subr.mxu0 0.0
    %2527 = vmatpush1.msra.mxu0 0.0
    %2528 = vmatprep.subr.mxu0 0.0
    %2529 = vmatpush1.msra.mxu0 0.0
    %2530 = vmatprep.subr.mxu0 0.0
    %2531 = vmatpush1.msra.mxu0 0.0
    %2532 = vmatprep.subr.mxu0 0.0
    %2533 = vmatpush1.msra.mxu0 0.0
    %2534 = vmatprep.mubr.f32.mxu0 0.0
    %2535 = vmatmul.mubr.f32.gmra.mrb[0].mxu0 %v2466
    %v2536 = vpop.f32.mrb[0].mxu0
    %v2537 = vadd.f32 0.0, %v2536
    %v2538 = vpop.f32.mrb[0].mxu0
    %2539 = vmatprep.mubr.f32.mxu0 0.0
    %2540 = vmatmul.mubr.f32.gmra.mrb[0].mxu0 %v2468
    %v2541 = vpop.f32.mrb[0].mxu0
    %v2542 = vadd.f32 0.0, %v2541
    %v2543 = vpop.f32.mrb[0].mxu0
    %2544 = vdwg.mxu0
    %2545 = vset.pattern.permute.xlu0 1
    %2546 = vperm.xlu0 %2545, %v2352
    %v2547 = vpop.permute.xlu0 %2546
    %2549 = vset.pattern.permute.xlu0 1
    %2550 = vperm.xlu0 %2549, %v2353
    %v2551 = vpop.permute.xlu0 %2550
    %v2553 = vmul.f32 %v2537, %v2547
    %v2554 = vmul.f32 %v2542, %v2551
    %v2556 = vsel %vm233, %v2553, 0
    %v2559 = vsel %vm233, %v2554, 0
    %2561 = vmatprep.subr.mxu0 0.0
    %2562 = vmatpush1.msra.mxu0 %v2356
    %2563 = vmatprep.subr.mxu0 0.0
    %2564 = vmatpush1.msra.mxu0 0.0
    %2565 = vmatprep.subr.mxu0 0.0
    %2566 = vmatpush1.msra.mxu0 0.0
    %2567 = vmatprep.subr.mxu0 0.0
    %2568 = vmatpush1.msra.mxu0 0.0
    %2569 = vmatprep.subr.mxu0 0.0
    %2570 = vmatpush1.msra.mxu0 0.0
    %2571 = vmatprep.subr.mxu0 0.0
    %2572 = vmatpush1.msra.mxu0 0.0
    %2573 = vmatprep.subr.mxu0 0.0
    %2574 = vmatpush1.msra.mxu0 0.0
    %2575 = vmatprep.subr.mxu0 0.0
    %2576 = vmatpush1.msra.mxu0 0.0
    %2577 = vmatprep.subr.mxu0 0.0
    %2578 = vmatpush1.msra.mxu0 0.0
    %2579 = vmatprep.subr.mxu0 0.0
    %2580 = vmatpush1.msra.mxu0 0.0
    %2581 = vmatprep.subr.mxu0 0.0
    %2582 = vmatpush1.msra.mxu0 0.0
    %2583 = vmatprep.subr.mxu0 0.0
    %2584 = vmatpush1.msra.mxu0 0.0
    %2585 = vmatprep.subr.mxu0 0.0
    %2586 = vmatpush1.msra.mxu0 0.0
    %2587 = vmatprep.subr.mxu0 0.0
    %2588 = vmatpush1.msra.mxu0 0.0
    %2589 = vmatprep.subr.mxu0 0.0
    %2590 = vmatpush1.msra.mxu0 0.0
    %2591 = vmatprep.subr.mxu0 0.0
    %2592 = vmatpush1.msra.mxu0 0.0
    %2593 = vmatprep.subr.mxu0 0.0
    %2594 = vmatpush1.msra.mxu0 0.0
    %2595 = vmatprep.subr.mxu0 0.0
    %2596 = vmatpush1.msra.mxu0 0.0
    %2597 = vmatprep.subr.mxu0 0.0
    %2598 = vmatpush1.msra.mxu0 0.0
    %2599 = vmatprep.subr.mxu0 0.0
    %2600 = vmatpush1.msra.mxu0 0.0
    %2601 = vmatprep.subr.mxu0 0.0
    %2602 = vmatpush1.msra.mxu0 0.0
    %2603 = vmatprep.subr.mxu0 0.0
    %2604 = vmatpush1.msra.mxu0 0.0
    %2605 = vmatprep.subr.mxu0 0.0
    %2606 = vmatpush1.msra.mxu0 0.0
    %2607 = vmatprep.subr.mxu0 0.0
    %2608 = vmatpush1.msra.mxu0 0.0
    %2609 = vmatprep.subr.mxu0 0.0
    %2610 = vmatpush1.msra.mxu0 0.0
    %2611 = vmatprep.subr.mxu0 0.0
    %2612 = vmatpush1.msra.mxu0 0.0
    %2613 = vmatprep.subr.mxu0 0.0
    %2614 = vmatpush1.msra.mxu0 0.0
    %2615 = vmatprep.subr.mxu0 0.0
    %2616 = vmatpush1.msra.mxu0 0.0
    %2617 = vmatprep.subr.mxu0 0.0
    %2618 = vmatpush1.msra.mxu0 0.0
    %2619 = vmatprep.subr.mxu0 0.0
    %2620 = vmatpush1.msra.mxu0 0.0
    %2621 = vmatprep.subr.mxu0 0.0
    %2622 = vmatpush1.msra.mxu0 0.0
    %2623 = vmatprep.subr.mxu0 0.0
    %2624 = vmatpush1.msra.mxu0 0.0
    %2625 = vmatprep.mubr.f32.mxu0 0.0
    %2626 = vmatmul.mubr.f32.gmra.mrb[0].mxu0 %v2556
    %v2627 = vpop.f32.mrb[0].mxu0
    %v2628 = vadd.f32 0.0, %v2627
    %v2629 = vpop.f32.mrb[0].mxu0
    %2630 = vmatprep.mubr.f32.mxu0 0.0
    %2631 = vmatmul.mubr.f32.gmra.mrb[0].mxu0 %v2559
    %v2632 = vpop.f32.mrb[0].mxu0
    %v2633 = vadd.f32 0.0, %v2632
    %v2634 = vpop.f32.mrb[0].mxu0
    %2635 = vdwg.mxu0
    %v2637 = vsel %vm233, %v2454, 0
    %v2640 = vsel %vm233, %v2455, 0
    %2642 = vmatprep.subr.mxu0 0.0
    %2643 = vmatpush1.msra.mxu0 %v2355
    %2644 = vmatprep.subr.mxu0 0.0
    %2645 = vmatpush1.msra.mxu0 0.0
    %2646 = vmatprep.subr.mxu0 0.0
    %2647 = vmatpush1.msra.mxu0 0.0
    %2648 = vmatprep.subr.mxu0 0.0
    %2649 = vmatpush1.msra.mxu0 0.0
    %2650 = vmatprep.subr.mxu0 0.0
    %2651 = vmatpush1.msra.mxu0 0.0
    %2652 = vmatprep.subr.mxu0 0.0
    %2653 = vmatpush1.msra.mxu0 0.0
    %2654 = vmatprep.subr.mxu0 0.0
    %2655 = vmatpush1.msra.mxu0 0.0
    %2656 = vmatprep.subr.mxu0 0.0
    %2657 = vmatpush1.msra.mxu0 0.0
    %2658 = vmatprep.subr.mxu0 0.0
    %2659 = vmatpush1.msra.mxu0 0.0
    %2660 = vmatprep.subr.mxu0 0.0
    %2661 = vmatpush1.msra.mxu0 0.0
    %2662 = vmatprep.subr.mxu0 0.0
    %2663 = vmatpush1.msra.mxu0 0.0
    %2664 = vmatprep.subr.mxu0 0.0
    %2665 = vmatpush1.msra.mxu0 0.0
    %2666 = vmatprep.subr.mxu0 0.0
    %2667 = vmatpush1.msra.mxu0 0.0
    %2668 = vmatprep.subr.mxu0 0.0
    %2669 = vmatpush1.msra.mxu0 0.0
    %2670 = vmatprep.subr.mxu0 0.0
    %2671 = vmatpush1.msra.mxu0 0.0
    %2672 = vmatprep.subr.mxu0 0.0
    %2673 = vmatpush1.msra.mxu0 0.0
    %2674 = vmatprep.subr.mxu0 0.0
    %2675 = vmatpush1.msra.mxu0 0.0
    %2676 = vmatprep.subr.mxu0 0.0
    %2677 = vmatpush1.msra.mxu0 0.0
    %2678 = vmatprep.subr.mxu0 0.0
    %2679 = vmatpush1.msra.mxu0 0.0
    %2680 = vmatprep.subr.mxu0 0.0
    %2681 = vmatpush1.msra.mxu0 0.0
    %2682 = vmatprep.subr.mxu0 0.0
    %2683 = vmatpush1.msra.mxu0 0.0
    %2684 = vmatprep.subr.mxu0 0.0
    %2685 = vmatpush1.msra.mxu0 0.0
    %2686 = vmatprep.subr.mxu0 0.0
    %2687 = vmatpush1.msra.mxu0 0.0
    %2688 = vmatprep.subr.mxu0 0.0
    %2689 = vmatpush1.msra.mxu0 0.0
    %2690 = vmatprep.subr.mxu0 0.0
    %2691 = vmatpush1.msra.mxu0 0.0
    %2692 = vmatprep.subr.mxu0 0.0
    %2693 = vmatpush1.msra.mxu0 0.0
    %2694 = vmatprep.subr.mxu0 0.0
    %2695 = vmatpush1.msra.mxu0 0.0
    %2696 = vmatprep.subr.mxu0 0.0
    %2697 = vmatpush1.msra.mxu0 0.0
    %2698 = vmatprep.subr.mxu0 0.0
    %2699 = vmatpush1.msra.mxu0 0.0
    %2700 = vmatprep.subr.mxu0 0.0
    %2701 = vmatpush1.msra.mxu0 0.0
    %2702 = vmatprep.subr.mxu0 0.0
    %2703 = vmatpush1.msra.mxu0 0.0
    %2704 = vmatprep.subr.mxu0 0.0
    %2705 = vmatpush1.msra.mxu0 0.0
    %2706 = vmatprep.mubr.f32.mxu0 0.0
    %2707 = vmatmul.mubr.f32.gmra.mrb[0].mxu0 %v2637
    %v2708 = vpop.f32.mrb[0].mxu0
    %v2709 = vadd.f32 %v2628, %v2708
    %v2710 = vpop.f32.mrb[0].mxu0
    %2711 = vmatprep.mubr.f32.mxu0 0.0
    %2712 = vmatmul.mubr.f32.gmra.mrb[0].mxu0 %v2640
    %v2713 = vpop.f32.mrb[0].mxu0
    %v2714 = vadd.f32 %v2633, %v2713
    %v2715 = vpop.f32.mrb[0].mxu0
    %2716 = vdwg.mxu0
    %2717 = vrot.lane.b32.xlu0 %v2268, 96
    %v2718 = vpop.permute.xlu0 %2717
    %2719 = vrot.lane.b32.xlu0 %v2270, 96
    %v2720 = vpop.permute.xlu0 %2719
    %2721 = vrot.lane.b32.xlu0 %v1855, 48
    %v2722 = vpop.permute.xlu0 %2721
    %2723 = vrot.lane.b32.xlu0 %v1860, 48
    %v2724 = vpop.permute.xlu0 %2723
    %v2727 = vsel %vm616, %v2718, 0
    %v2729 = vsel %vm616, %v2720, 0
    %2731 = vmatprep.subr.mxu0 0.0
    %2732 = vmatpush1.msra.mxu0 %v2722
    %2733 = vmatprep.subr.mxu0 0.0
    %2734 = vmatpush1.msra.mxu0 %v2724
    %2735 = vmatprep.subr.mxu0 0.0
    %2736 = vmatpush1.msra.mxu0 0.0
    %2737 = vmatprep.subr.mxu0 0.0
    %2738 = vmatpush1.msra.mxu0 0.0
    %2739 = vmatprep.subr.mxu0 0.0
    %2740 = vmatpush1.msra.mxu0 0.0
    %2741 = vmatprep.subr.mxu0 0.0
    %2742 = vmatpush1.msra.mxu0 0.0
    %2743 = vmatprep.subr.mxu0 0.0
    %2744 = vmatpush1.msra.mxu0 0.0
    %2745 = vmatprep.subr.mxu0 0.0
    %2746 = vmatpush1.msra.mxu0 0.0
    %2747 = vmatprep.subr.mxu0 0.0
    %2748 = vmatpush1.msra.mxu0 0.0
    %2749 = vmatprep.subr.mxu0 0.0
    %2750 = vmatpush1.msra.mxu0 0.0
    %2751 = vmatprep.subr.mxu0 0.0
    %2752 = vmatpush1.msra.mxu0 0.0
    %2753 = vmatprep.subr.mxu0 0.0
    %2754 = vmatpush1.msra.mxu0 0.0
    %2755 = vmatprep.subr.mxu0 0.0
    %2756 = vmatpush1.msra.mxu0 0.0
    %2757 = vmatprep.subr.mxu0 0.0
    %2758 = vmatpush1.msra.mxu0 0.0
    %2759 = vmatprep.subr.mxu0 0.0
    %2760 = vmatpush1.msra.mxu0 0.0
    %2761 = vmatprep.subr.mxu0 0.0
    %2762 = vmatpush1.msra.mxu0 0.0
    %2763 = vmatprep.subr.mxu0 0.0
    %2764 = vmatpush1.msra.mxu0 0.0
    %2765 = vmatprep.subr.mxu0 0.0
    %2766 = vmatpush1.msra.mxu0 0.0
    %2767 = vmatprep.subr.mxu0 0.0
    %2768 = vmatpush1.msra.mxu0 0.0
    %2769 = vmatprep.subr.mxu0 0.0
    %2770 = vmatpush1.msra.mxu0 0.0
    %2771 = vmatprep.subr.mxu0 0.0
    %2772 = vmatpush1.msra.mxu0 0.0
    %2773 = vmatprep.subr.mxu0 0.0
    %2774 = vmatpush1.msra.mxu0 0.0
    %2775 = vmatprep.subr.mxu0 0.0
    %2776 = vmatpush1.msra.mxu0 0.0
    %2777 = vmatprep.subr.mxu0 0.0
    %2778 = vmatpush1.msra.mxu0 0.0
    %2779 = vmatprep.subr.mxu0 0.0
    %2780 = vmatpush1.msra.mxu0 0.0
    %2781 = vmatprep.subr.mxu0 0.0
    %2782 = vmatpush1.msra.mxu0 0.0
    %2783 = vmatprep.subr.mxu0 0.0
    %2784 = vmatpush1.msra.mxu0 0.0
    %2785 = vmatprep.subr.mxu0 0.0
    %2786 = vmatpush1.msra.mxu0 0.0
    %2787 = vmatprep.subr.mxu0 0.0
    %2788 = vmatpush1.msra.mxu0 0.0
    %2789 = vmatprep.subr.mxu0 0.0
    %2790 = vmatpush1.msra.mxu0 0.0
    %2791 = vmatprep.subr.mxu0 0.0
    %2792 = vmatpush1.msra.mxu0 0.0
    %2793 = vmatprep.subr.mxu0 0.0
    %2794 = vmatpush1.msra.mxu0 0.0
    %2795 = vmatprep.mubr.f32.mxu0 0.0
    %2796 = vmatmul.mubr.f32.gmra.mrb[0].mxu0 %v2727
    %v2797 = vpop.f32.mrb[0].mxu0
    %v2798 = vadd.f32 0.0, %v2797
    %v2799 = vpop.f32.mrb[0].mxu0
    %2800 = vmatprep.mubr.f32.mxu0 0.0
    %2801 = vmatmul.mubr.f32.gmra.mrb[0].mxu0 %v2729
    %v2802 = vpop.f32.mrb[0].mxu0
    %v2803 = vadd.f32 0.0, %v2802
    %v2804 = vpop.f32.mrb[0].mxu0
    %2805 = vdwg.mxu0
    %2806 = vset.pattern.permute.xlu0 2
    %2807 = vperm.xlu0 %2806, %v2352
    %v2808 = vpop.permute.xlu0 %2807
    %2810 = vset.pattern.permute.xlu0 2
    %2811 = vperm.xlu0 %2810, %v2353
    %v2812 = vpop.permute.xlu0 %2811
    %v2814 = vmul.f32 %v2798, %v2808
    %v2815 = vmul.f32 %v2803, %v2812
    %v2817 = vsel %vm233, %v2814, 0
    %v2820 = vsel %vm233, %v2815, 0
    %2822 = vmatprep.subr.mxu0 0.0
    %2823 = vmatpush1.msra.mxu0 %v2357
    %2824 = vmatprep.subr.mxu0 0.0
    %2825 = vmatpush1.msra.mxu0 0.0
    %2826 = vmatprep.subr.mxu0 0.0
    %2827 = vmatpush1.msra.mxu0 0.0
    %2828 = vmatprep.subr.mxu0 0.0
    %2829 = vmatpush1.msra.mxu0 0.0
    %2830 = vmatprep.subr.mxu0 0.0
    %2831 = vmatpush1.msra.mxu0 0.0
    %2832 = vmatprep.subr.mxu0 0.0
    %2833 = vmatpush1.msra.mxu0 0.0
    %2834 = vmatprep.subr.mxu0 0.0
    %2835 = vmatpush1.msra.mxu0 0.0
    %2836 = vmatprep.subr.mxu0 0.0
    %2837 = vmatpush1.msra.mxu0 0.0
    %2838 = vmatprep.subr.mxu0 0.0
    %2839 = vmatpush1.msra.mxu0 0.0
    %2840 = vmatprep.subr.mxu0 0.0
    %2841 = vmatpush1.msra.mxu0 0.0
    %2842 = vmatprep.subr.mxu0 0.0
    %2843 = vmatpush1.msra.mxu0 0.0
    %2844 = vmatprep.subr.mxu0 0.0
    %2845 = vmatpush1.msra.mxu0 0.0
    %2846 = vmatprep.subr.mxu0 0.0
    %2847 = vmatpush1.msra.mxu0 0.0
    %2848 = vmatprep.subr.mxu0 0.0
    %2849 = vmatpush1.msra.mxu0 0.0
    %2850 = vmatprep.subr.mxu0 0.0
    %2851 = vmatpush1.msra.mxu0 0.0
    %2852 = vmatprep.subr.mxu0 0.0
    %2853 = vmatpush1.msra.mxu0 0.0
    %2854 = vmatprep.subr.mxu0 0.0
    %2855 = vmatpush1.msra.mxu0 0.0
    %2856 = vmatprep.subr.mxu0 0.0
    %2857 = vmatpush1.msra.mxu0 0.0
    %2858 = vmatprep.subr.mxu0 0.0
    %2859 = vmatpush1.msra.mxu0 0.0
    %2860 = vmatprep.subr.mxu0 0.0
    %2861 = vmatpush1.msra.mxu0 0.0
    %2862 = vmatprep.subr.mxu0 0.0
    %2863 = vmatpush1.msra.mxu0 0.0
    %2864 = vmatprep.subr.mxu0 0.0
    %2865 = vmatpush1.msra.mxu0 0.0
    %2866 = vmatprep.subr.mxu0 0.0
    %2867 = vmatpush1.msra.mxu0 0.0
    %2868 = vmatprep.subr.mxu0 0.0
    %2869 = vmatpush1.msra.mxu0 0.0
    %2870 = vmatprep.subr.mxu0 0.0
    %2871 = vmatpush1.msra.mxu0 0.0
    %2872 = vmatprep.subr.mxu0 0.0
    %2873 = vmatpush1.msra.mxu0 0.0
    %2874 = vmatprep.subr.mxu0 0.0
    %2875 = vmatpush1.msra.mxu0 0.0
    %2876 = vmatprep.subr.mxu0 0.0
    %2877 = vmatpush1.msra.mxu0 0.0
    %2878 = vmatprep.subr.mxu0 0.0
    %2879 = vmatpush1.msra.mxu0 0.0
    %2880 = vmatprep.subr.mxu0 0.0
    %2881 = vmatpush1.msra.mxu0 0.0
    %2882 = vmatprep.subr.mxu0 0.0
    %2883 = vmatpush1.msra.mxu0 0.0
    %2884 = vmatprep.subr.mxu0 0.0
    %2885 = vmatpush1.msra.mxu0 0.0
    %2886 = vmatprep.mubr.f32.mxu0 0.0
    %2887 = vmatmul.mubr.f32.gmra.mrb[0].mxu0 %v2817
    %v2888 = vpop.f32.mrb[0].mxu0
    %v2889 = vadd.f32 0.0, %v2888
    %v2890 = vpop.f32.mrb[0].mxu0
    %2891 = vmatprep.mubr.f32.mxu0 0.0
    %2892 = vmatmul.mubr.f32.gmra.mrb[0].mxu0 %v2820
    %v2893 = vpop.f32.mrb[0].mxu0
    %v2894 = vadd.f32 0.0, %v2893
    %v2895 = vpop.f32.mrb[0].mxu0
    %2896 = vdwg.mxu0
    %v2897 = vadd.f32 %v2709, %v2889
    %v2898 = vadd.f32 %v2714, %v2894
    %2899 = vrot.lane.b32.xlu0 %v2268, 80
    %v2900 = vpop.permute.xlu0 %2899
    %2901 = vrot.lane.b32.xlu0 %v2270, 80
    %v2902 = vpop.permute.xlu0 %2901
    %2903 = vrot.lane.b32.xlu0 %v1855, 40
    %v2904 = vpop.permute.xlu0 %2903
    %2905 = vrot.lane.b32.xlu0 %v1860, 40
    %v2906 = vpop.permute.xlu0 %2905
    %v2909 = vsel %vm616, %v2900, 0
    %v2911 = vsel %vm616, %v2902, 0
    %2913 = vmatprep.subr.mxu0 0.0
    %2914 = vmatpush1.msra.mxu0 %v2904
    %2915 = vmatprep.subr.mxu0 0.0
    %2916 = vmatpush1.msra.mxu0 %v2906
    %2917 = vmatprep.subr.mxu0 0.0
    %2918 = vmatpush1.msra.mxu0 0.0
    %2919 = vmatprep.subr.mxu0 0.0
    %2920 = vmatpush1.msra.mxu0 0.0
    %2921 = vmatprep.subr.mxu0 0.0
    %2922 = vmatpush1.msra.mxu0 0.0
    %2923 = vmatprep.subr.mxu0 0.0
    %2924 = vmatpush1.msra.mxu0 0.0
    %2925 = vmatprep.subr.mxu0 0.0
    %2926 = vmatpush1.msra.mxu0 0.0
    %2927 = vmatprep.subr.mxu0 0.0
    %2928 = vmatpush1.msra.mxu0 0.0
    %2929 = vmatprep.subr.mxu0 0.0
    %2930 = vmatpush1.msra.mxu0 0.0
    %2931 = vmatprep.subr.mxu0 0.0
    %2932 = vmatpush1.msra.mxu0 0.0
    %2933 = vmatprep.subr.mxu0 0.0
    %2934 = vmatpush1.msra.mxu0 0.0
    %2935 = vmatprep.subr.mxu0 0.0
    %2936 = vmatpush1.msra.mxu0 0.0
    %2937 = vmatprep.subr.mxu0 0.0
    %2938 = vmatpush1.msra.mxu0 0.0
    %2939 = vmatprep.subr.mxu0 0.0
    %2940 = vmatpush1.msra.mxu0 0.0
    %2941 = vmatprep.subr.mxu0 0.0
    %2942 = vmatpush1.msra.mxu0 0.0
    %2943 = vmatprep.subr.mxu0 0.0
    %2944 = vmatpush1.msra.mxu0 0.0
    %2945 = vmatprep.subr.mxu0 0.0
    %2946 = vmatpush1.msra.mxu0 0.0
    %2947 = vmatprep.subr.mxu0 0.0
    %2948 = vmatpush1.msra.mxu0 0.0
    %2949 = vmatprep.subr.mxu0 0.0
    %2950 = vmatpush1.msra.mxu0 0.0
    %2951 = vmatprep.subr.mxu0 0.0
    %2952 = vmatpush1.msra.mxu0 0.0
    %2953 = vmatprep.subr.mxu0 0.0
    %2954 = vmatpush1.msra.mxu0 0.0
    %2955 = vmatprep.subr.mxu0 0.0
    %2956 = vmatpush1.msra.mxu0 0.0
    %2957 = vmatprep.subr.mxu0 0.0
    %2958 = vmatpush1.msra.mxu0 0.0
    %2959 = vmatprep.subr.mxu0 0.0
    %2960 = vmatpush1.msra.mxu0 0.0
    %2961 = vmatprep.subr.mxu0 0.0
    %2962 = vmatpush1.msra.mxu0 0.0
    %2963 = vmatprep.subr.mxu0 0.0
    %2964 = vmatpush1.msra.mxu0 0.0
    %2965 = vmatprep.subr.mxu0 0.0
    %2966 = vmatpush1.msra.mxu0 0.0
    %2967 = vmatprep.subr.mxu0 0.0
    %2968 = vmatpush1.msra.mxu0 0.0
    %2969 = vmatprep.subr.mxu0 0.0
    %2970 = vmatpush1.msra.mxu0 0.0
    %2971 = vmatprep.subr.mxu0 0.0
    %2972 = vmatpush1.msra.mxu0 0.0
    %2973 = vmatprep.subr.mxu0 0.0
    %2974 = vmatpush1.msra.mxu0 0.0
    %2975 = vmatprep.subr.mxu0 0.0
    %2976 = vmatpush1.msra.mxu0 0.0
    %2977 = vmatprep.mubr.f32.mxu0 0.0
    %2978 = vmatmul.mubr.f32.gmra.mrb[0].mxu0 %v2909
    %v2979 = vpop.f32.mrb[0].mxu0
    %v2980 = vadd.f32 0.0, %v2979
    %v2981 = vpop.f32.mrb[0].mxu0
    %2982 = vmatprep.mubr.f32.mxu0 0.0
    %2983 = vmatmul.mubr.f32.gmra.mrb[0].mxu0 %v2911
    %v2984 = vpop.f32.mrb[0].mxu0
    %v2985 = vadd.f32 0.0, %v2984
    %v2986 = vpop.f32.mrb[0].mxu0
    %2987 = vdwg.mxu0
    %2988 = vset.pattern.permute.xlu0 3
    %2989 = vperm.xlu0 %2988, %v2352
    %v2990 = vpop.permute.xlu0 %2989
    %2992 = vset.pattern.permute.xlu0 3
    %2993 = vperm.xlu0 %2992, %v2353
    %v2994 = vpop.permute.xlu0 %2993
    %v2996 = vmul.f32 %v2980, %v2990
    %v2997 = vmul.f32 %v2985, %v2994
    %v2999 = vsel %vm233, %v2996, 0
    %v3002 = vsel %vm233, %v2997, 0
    %3004 = vmatprep.subr.mxu0 0.0
    %3005 = vmatpush1.msra.mxu0 %v2358
    %3006 = vmatprep.subr.mxu0 0.0
    %3007 = vmatpush1.msra.mxu0 0.0
    %3008 = vmatprep.subr.mxu0 0.0
    %3009 = vmatpush1.msra.mxu0 0.0
    %3010 = vmatprep.subr.mxu0 0.0
    %3011 = vmatpush1.msra.mxu0 0.0
    %3012 = vmatprep.subr.mxu0 0.0
    %3013 = vmatpush1.msra.mxu0 0.0
    %3014 = vmatprep.subr.mxu0 0.0
    %3015 = vmatpush1.msra.mxu0 0.0
    %3016 = vmatprep.subr.mxu0 0.0
    %3017 = vmatpush1.msra.mxu0 0.0
    %3018 = vmatprep.subr.mxu0 0.0
    %3019 = vmatpush1.msra.mxu0 0.0
    %3020 = vmatprep.subr.mxu0 0.0
    %3021 = vmatpush1.msra.mxu0 0.0
    %3022 = vmatprep.subr.mxu0 0.0
    %3023 = vmatpush1.msra.mxu0 0.0
    %3024 = vmatprep.subr.mxu0 0.0
    %3025 = vmatpush1.msra.mxu0 0.0
    %3026 = vmatprep.subr.mxu0 0.0
    %3027 = vmatpush1.msra.mxu0 0.0
    %3028 = vmatprep.subr.mxu0 0.0
    %3029 = vmatpush1.msra.mxu0 0.0
    %3030 = vmatprep.subr.mxu0 0.0
    %3031 = vmatpush1.msra.mxu0 0.0
    %3032 = vmatprep.subr.mxu0 0.0
    %3033 = vmatpush1.msra.mxu0 0.0
    %3034 = vmatprep.subr.mxu0 0.0
    %3035 = vmatpush1.msra.mxu0 0.0
    %3036 = vmatprep.subr.mxu0 0.0
    %3037 = vmatpush1.msra.mxu0 0.0
    %3038 = vmatprep.subr.mxu0 0.0
    %3039 = vmatpush1.msra.mxu0 0.0
    %3040 = vmatprep.subr.mxu0 0.0
    %3041 = vmatpush1.msra.mxu0 0.0
    %3042 = vmatprep.subr.mxu0 0.0
    %3043 = vmatpush1.msra.mxu0 0.0
    %3044 = vmatprep.subr.mxu0 0.0
    %3045 = vmatpush1.msra.mxu0 0.0
    %3046 = vmatprep.subr.mxu0 0.0
    %3047 = vmatpush1.msra.mxu0 0.0
    %3048 = vmatprep.subr.mxu0 0.0
    %3049 = vmatpush1.msra.mxu0 0.0
    %3050 = vmatprep.subr.mxu0 0.0
    %3051 = vmatpush1.msra.mxu0 0.0
    %3052 = vmatprep.subr.mxu0 0.0
    %3053 = vmatpush1.msra.mxu0 0.0
    %3054 = vmatprep.subr.mxu0 0.0
    %3055 = vmatpush1.msra.mxu0 0.0
    %3056 = vmatprep.subr.mxu0 0.0
    %3057 = vmatpush1.msra.mxu0 0.0
    %3058 = vmatprep.subr.mxu0 0.0
    %3059 = vmatpush1.msra.mxu0 0.0
    %3060 = vmatprep.subr.mxu0 0.0
    %3061 = vmatpush1.msra.mxu0 0.0
    %3062 = vmatprep.subr.mxu0 0.0
    %3063 = vmatpush1.msra.mxu0 0.0
    %3064 = vmatprep.subr.mxu0 0.0
    %3065 = vmatpush1.msra.mxu0 0.0
    %3066 = vmatprep.subr.mxu0 0.0
    %3067 = vmatpush1.msra.mxu0 0.0
    %3068 = vmatprep.mubr.f32.mxu0 0.0
    %3069 = vmatmul.mubr.f32.gmra.mrb[0].mxu0 %v2999
    %v3070 = vpop.f32.mrb[0].mxu0
    %v3071 = vadd.f32 0.0, %v3070
    %v3072 = vpop.f32.mrb[0].mxu0
    %3073 = vmatprep.mubr.f32.mxu0 0.0
    %3074 = vmatmul.mubr.f32.gmra.mrb[0].mxu0 %v3002
    %v3075 = vpop.f32.mrb[0].mxu0
    %v3076 = vadd.f32 0.0, %v3075
    %v3077 = vpop.f32.mrb[0].mxu0
    %3078 = vdwg.mxu0
    %v3079 = vadd.f32 %v2897, %v3071
    %v3080 = vadd.f32 %v2898, %v3076
    %v3081 = vadd.f32 %v1715, %v3079
    %v3082 = vadd.f32 %v1716, %v3080
    %s3083 = scalar_lea.vmem %s10, 1
    %v3084 = vld [vmem:[%s3083] sm:$0x1]
    %v3086 = vlaneseq
    %v3087 = vshrl.u32 %v3086, 7
    %v3088 = vsub.s32 0, %v3087
    %v3089 = vrot.slane %v3084, %v3088
    %v3091 = vadd.f32 %v3081, %v3089
    %v3092 = vadd.f32 %v3082, %v3089
    %s3093 = scalar_lea.vmem %s11, 1
    %v3094 = vld [vmem:[%s3093] sm:$0x1]
    %s3095 = scalar_lea.vmem %s12, 1
    %v3096 = vld [vmem:[%s3095] sm:$0x1]
    %v3097 = vsel %vm84, %v3091, 0.0
    %3098 = vadd.xlane.f32.xlu0 %v3097
    %v3099 = vpop.xlane.xlu0 %3098
    %v3100 = vsel %vm84, %v3092, 0.0
    %3101 = vadd.xlane.f32.xlu0 %v3100
    %v3102 = vpop.xlane.xlu0 %3101
    %v3103 = vmul.f32 %v3091, %v3091
    %v3104 = vmul.f32 %v3092, %v3092
    %v3105 = vsel %vm84, %v3103, 0.0
    %3106 = vadd.xlane.f32.xlu0 %v3105
    %v3107 = vpop.xlane.xlu0 %3106
    %v3108 = vsel %vm84, %v3104, 0.0
    %3109 = vadd.xlane.f32.xlu0 %v3108
    %v3110 = vpop.xlane.xlu0 %3109
    %v3111 = vmul.f32 %v3099, 0.03125
    %v3112 = vmul.f32 %v3102, 0.03125
    %v3113 = vmul.f32 %v3107, 0.03125
    %v3114 = vmul.f32 %v3110, 0.03125
    %v3115 = vmul.f32 %v3111, %v3111
    %v3116 = vmul.f32 %v3112, %v3112
    %v3117 = vsub.f32 %v3113, %v3115
    %v3118 = vsub.f32 %v3114, %v3116
    %v3119 = vmax.f32 %v3117, 0.0
    %v3120 = vmax.f32 %v3118, 0.0
    %v3121 = vsub.f32 %v3091, %v3111
    %v3122 = vsub.f32 %v3092, %v3112
    %v3123 = vadd.f32 %v3119, 1e-05
    %v3124 = vadd.f32 %v3120, 1e-05
    %v3125 = vrsqrt.pop %v3123
    %v3126 = vrsqrt.pop %v3124
    %v3127 = vmul.f32 %v3121, %v3125
    %v3128 = vmul.f32 %v3122, %v3126
    %v3130 = vlaneseq
    %v3131 = vshrl.u32 %v3130, 7
    %v3132 = vsub.s32 0, %v3131
    %v3133 = vrot.slane %v3094, %v3132
    %v3135 = vmul.f32 %v3127, %v3133
    %v3136 = vmul.f32 %v3128, %v3133
    %v3138 = vlaneseq
    %v3139 = vshrl.u32 %v3138, 7
    %v3140 = vsub.s32 0, %v3139
    %v3141 = vrot.slane %v3096, %v3140
    %v3143 = vadd.f32 %v3135, %v3141
    %v3144 = vadd.f32 %v3136, %v3141
    %s3145 = scalar_lea.vmem %s13, 32
    %v3146 = vld [vmem:[%s3145] sm:$0xff]
    %v3147 = vld [vmem:[%s3145 + $0x8] sm:$0xff]
    %v3148 = vld [vmem:[%s3145 + $0x10] sm:$0xff]
    %v3149 = vld [vmem:[%s3145 + $0x18] sm:$0xff]
    %s3150 = scalar_lea.vmem %s14, 1
    %v3151 = vld [vmem:[%s3150] sm:$0x1]
    %v3153 = vlaneseq
    %v3154 = vshrl.u32 %v3153, 7
    %v3155 = vsub.s32 0, %v3154
    %v3156 = vrot.slane %v3151, %v3155
    %v3159 = vsel %vm84, %v3143, 0
    %v3162 = vsel %vm84, %v3144, 0
    %3164 = vmatprep.subr.mxu0 0.0
    %3165 = vmatpush1.msra.mxu0 %v3146
    %3166 = vmatprep.subr.mxu0 0.0
    %3167 = vmatpush1.msra.mxu0 %v3147
    %3168 = vmatprep.subr.mxu0 0.0
    %3169 = vmatpush1.msra.mxu0 %v3148
    %3170 = vmatprep.subr.mxu0 0.0
    %3171 = vmatpush1.msra.mxu0 %v3149
    %3172 = vmatprep.subr.mxu0 0.0
    %3173 = vmatpush1.msra.mxu0 0.0
    %3174 = vmatprep.subr.mxu0 0.0
    %3175 = vmatpush1.msra.mxu0 0.0
    %3176 = vmatprep.subr.mxu0 0.0
    %3177 = vmatpush1.msra.mxu0 0.0
    %3178 = vmatprep.subr.mxu0 0.0
    %3179 = vmatpush1.msra.mxu0 0.0
    %3180 = vmatprep.subr.mxu0 0.0
    %3181 = vmatpush1.msra.mxu0 0.0
    %3182 = vmatprep.subr.mxu0 0.0
    %3183 = vmatpush1.msra.mxu0 0.0
    %3184 = vmatprep.subr.mxu0 0.0
    %3185 = vmatpush1.msra.mxu0 0.0
    %3186 = vmatprep.subr.mxu0 0.0
    %3187 = vmatpush1.msra.mxu0 0.0
    %3188 = vmatprep.subr.mxu0 0.0
    %3189 = vmatpush1.msra.mxu0 0.0
    %3190 = vmatprep.subr.mxu0 0.0
    %3191 = vmatpush1.msra.mxu0 0.0
    %3192 = vmatprep.subr.mxu0 0.0
    %3193 = vmatpush1.msra.mxu0 0.0
    %3194 = vmatprep.subr.mxu0 0.0
    %3195 = vmatpush1.msra.mxu0 0.0
    %3196 = vmatprep.subr.mxu0 0.0
    %3197 = vmatpush1.msra.mxu0 0.0
    %3198 = vmatprep.subr.mxu0 0.0
    %3199 = vmatpush1.msra.mxu0 0.0
    %3200 = vmatprep.subr.mxu0 0.0
    %3201 = vmatpush1.msra.mxu0 0.0
    %3202 = vmatprep.subr.mxu0 0.0
    %3203 = vmatpush1.msra.mxu0 0.0
    %3204 = vmatprep.subr.mxu0 0.0
    %3205 = vmatpush1.msra.mxu0 0.0
    %3206 = vmatprep.subr.mxu0 0.0
    %3207 = vmatpush1.msra.mxu0 0.0
    %3208 = vmatprep.subr.mxu0 0.0
    %3209 = vmatpush1.msra.mxu0 0.0
    %3210 = vmatprep.subr.mxu0 0.0
    %3211 = vmatpush1.msra.mxu0 0.0
    %3212 = vmatprep.subr.mxu0 0.0
    %3213 = vmatpush1.msra.mxu0 0.0
    %3214 = vmatprep.subr.mxu0 0.0
    %3215 = vmatpush1.msra.mxu0 0.0
    %3216 = vmatprep.subr.mxu0 0.0
    %3217 = vmatpush1.msra.mxu0 0.0
    %3218 = vmatprep.subr.mxu0 0.0
    %3219 = vmatpush1.msra.mxu0 0.0
    %3220 = vmatprep.subr.mxu0 0.0
    %3221 = vmatpush1.msra.mxu0 0.0
    %3222 = vmatprep.subr.mxu0 0.0
    %3223 = vmatpush1.msra.mxu0 0.0
    %3224 = vmatprep.subr.mxu0 0.0
    %3225 = vmatpush1.msra.mxu0 0.0
    %3226 = vmatprep.subr.mxu0 0.0
    %3227 = vmatpush1.msra.mxu0 0.0
    %3228 = vmatprep.mubr.f32.mxu0 0.0
    %3229 = vmatmul.mubr.f32.gmra.mrb[0].mxu0 %v3159
    %v3230 = vpop.f32.mrb[0].mxu0
    %v3231 = vadd.f32 %v3156, %v3230
    %v3232 = vpop.f32.mrb[0].mxu0
    %3233 = vmatprep.mubr.f32.mxu0 0.0
    %3234 = vmatmul.mubr.f32.gmra.mrb[0].mxu0 %v3162
    %v3235 = vpop.f32.mrb[0].mxu0
    %v3236 = vadd.f32 %v3156, %v3235
    %v3237 = vpop.f32.mrb[0].mxu0
    %3238 = vdwg.mxu0
    %v3239 = vmul.f32 %v3231, 1.702
    %v3240 = vmul.f32 %v3236, 1.702
    %v3241 = vxor.u32 %v3239, 2147483648
    %v3242 = vxor.u32 %v3240, 2147483648
    %v3243 = vmul.f32 %v3241, 1.442695
    %v3244 = vpow.pop %v3243
    %v3245 = vmul.f32 %v3242, 1.442695
    %v3246 = vpow.pop %v3245
    %v3247 = vadd.f32 %v3244, 1.0
    %v3248 = vadd.f32 %v3246, 1.0
    %v3249 = vrcp.pop %v3247
    %v3250 = vmul.f32 1.0, %v3249
    %v3251 = vrcp.pop %v3248
    %v3252 = vmul.f32 1.0, %v3251
    %v3253 = vmul.f32 %v3231, %v3250
    %v3254 = vmul.f32 %v3236, %v3252
    %s3255 = scalar_lea.vmem %s15, 128
    %v3256 = vld [vmem:[%s3255] sm:$0xff]
    %v3257 = vld [vmem:[%s3255 + $0x8] sm:$0xff]
    %v3258 = vld [vmem:[%s3255 + $0x10] sm:$0xff]
    %v3259 = vld [vmem:[%s3255 + $0x18] sm:$0xff]
    %v3260 = vld [vmem:[%s3255 + $0x20] sm:$0xff]
    %v3261 = vld [vmem:[%s3255 + $0x28] sm:$0xff]
    %v3262 = vld [vmem:[%s3255 + $0x30] sm:$0xff]
    %v3263 = vld [vmem:[%s3255 + $0x38] sm:$0xff]
    %v3264 = vld [vmem:[%s3255 + $0x40] sm:$0xff]
    %v3265 = vld [vmem:[%s3255 + $0x48] sm:$0xff]
    %v3266 = vld [vmem:[%s3255 + $0x50] sm:$0xff]
    %v3267 = vld [vmem:[%s3255 + $0x58] sm:$0xff]
    %v3268 = vld [vmem:[%s3255 + $0x60] sm:$0xff]
    %v3269 = vld [vmem:[%s3255 + $0x68] sm:$0xff]
    %v3270 = vld [vmem:[%s3255 + $0x70] sm:$0xff]
    %v3271 = vld [vmem:[%s3255 + $0x78] sm:$0xff]
    %3272 = vmatprep.subr.mxu0 0.0
    %3273 = vmatpush1.msra.mxu0 %v3256
    %3274 = vmatprep.subr.mxu0 0.0
    %3275 = vmatpush1.msra.mxu0 %v3257
    %3276 = vmatprep.subr.mxu0 0.0
    %3277 = vmatpush1.msra.mxu0 %v3258
    %3278 = vmatprep.subr.mxu0 0.0
    %3279 = vmatpush1.msra.mxu0 %v3259
    %3280 = vmatprep.subr.mxu0 0.0
    %3281 = vmatpush1.msra.mxu0 %v3260
    %3282 = vmatprep.subr.mxu0 0.0
    %3283 = vmatpush1.msra.mxu0 %v3261
    %3284 = vmatprep.subr.mxu0 0.0
    %3285 = vmatpush1.msra.mxu0 %v3262
    %3286 = vmatprep.subr.mxu0 0.0
    %3287 = vmatpush1.msra.mxu0 %v3263
    %3288 = vmatprep.subr.mxu0 0.0
    %3289 = vmatpush1.msra.mxu0 %v3264
    %3290 = vmatprep.subr.mxu0 0.0
    %3291 = vmatpush1.msra.mxu0 %v3265
    %3292 = vmatprep.subr.mxu0 0.0
    %3293 = vmatpush1.msra.mxu0 %v3266
    %3294 = vmatprep.subr.mxu0 0.0
    %3295 = vmatpush1.msra.mxu0 %v3267
    %3296 = vmatprep.subr.mxu0 0.0
    %3297 = vmatpush1.msra.mxu0 %v3268
    %3298 = vmatprep.subr.mxu0 0.0
    %3299 = vmatpush1.msra.mxu0 %v3269
    %3300 = vmatprep.subr.mxu0 0.0
    %3301 = vmatpush1.msra.mxu0 %v3270
    %3302 = vmatprep.subr.mxu0 0.0
    %3303 = vmatpush1.msra.mxu0 %v3271
    %3304 = vmatprep.subr.mxu0 0.0
    %3305 = vmatpush1.msra.mxu0 0.0
    %3306 = vmatprep.subr.mxu0 0.0
    %3307 = vmatpush1.msra.mxu0 0.0
    %3308 = vmatprep.subr.mxu0 0.0
    %3309 = vmatpush1.msra.mxu0 0.0
    %3310 = vmatprep.subr.mxu0 0.0
    %3311 = vmatpush1.msra.mxu0 0.0
    %3312 = vmatprep.subr.mxu0 0.0
    %3313 = vmatpush1.msra.mxu0 0.0
    %3314 = vmatprep.subr.mxu0 0.0
    %3315 = vmatpush1.msra.mxu0 0.0
    %3316 = vmatprep.subr.mxu0 0.0
    %3317 = vmatpush1.msra.mxu0 0.0
    %3318 = vmatprep.subr.mxu0 0.0
    %3319 = vmatpush1.msra.mxu0 0.0
    %3320 = vmatprep.subr.mxu0 0.0
    %3321 = vmatpush1.msra.mxu0 0.0
    %3322 = vmatprep.subr.mxu0 0.0
    %3323 = vmatpush1.msra.mxu0 0.0
    %3324 = vmatprep.subr.mxu0 0.0
    %3325 = vmatpush1.msra.mxu0 0.0
    %3326 = vmatprep.subr.mxu0 0.0
    %3327 = vmatpush1.msra.mxu0 0.0
    %3328 = vmatprep.subr.mxu0 0.0
    %3329 = vmatpush1.msra.mxu0 0.0
    %3330 = vmatprep.subr.mxu0 0.0
    %3331 = vmatpush1.msra.mxu0 0.0
    %3332 = vmatprep.subr.mxu0 0.0
    %3333 = vmatpush1.msra.mxu0 0.0
    %3334 = vmatprep.subr.mxu0 0.0
    %3335 = vmatpush1.msra.mxu0 0.0
    %3336 = vmatprep.mubr.f32.mxu0 0.0
    %3337 = vmatmul.mubr.f32.gmra.mrb[0].mxu0 %v3253
    %v3338 = vpop.f32.mrb[0].mxu0
    %v3339 = vadd.f32 0.0, %v3338
    %v3340 = vpop.f32.mrb[0].mxu0
    %3341 = vmatprep.mubr.f32.mxu0 0.0
    %3342 = vmatmul.mubr.f32.gmra.mrb[0].mxu0 %v3254
    %v3343 = vpop.f32.mrb[0].mxu0
    %v3344 = vadd.f32 0.0, %v3343
    %v3345 = vpop.f32.mrb[0].mxu0
    %3346 = vdwg.mxu0
    %v3347 = vadd.f32 %v3091, %v3339
    %v3348 = vadd.f32 %v3092, %v3344
    %s3349 = scalar_lea.vmem %s16, 1
    %v3350 = vld [vmem:[%s3349] sm:$0x1]
    %v3352 = vlaneseq
    %v3353 = vshrl.u32 %v3352, 7
    %v3354 = vsub.s32 0, %v3353
    %v3355 = vrot.slane %v3350, %v3354
    %v3357 = vadd.f32 %v3347, %v3355
    %v3358 = vadd.f32 %v3348, %v3355
    %v3359 = vld [vmem:[%s17] sm:$0x1]
    %v3360 = vld [vmem:[%s18] sm:$0x1]
    %v3361 = vsel %vm84, %v3357, 0.0
    %3362 = vadd.xlane.f32.xlu0 %v3361
    %v3363 = vpop.xlane.xlu0 %3362
    %v3364 = vsel %vm84, %v3358, 0.0
    %3365 = vadd.xlane.f32.xlu0 %v3364
    %v3366 = vpop.xlane.xlu0 %3365
    %v3367 = vmul.f32 %v3357, %v3357
    %v3368 = vmul.f32 %v3358, %v3358
    %v3369 = vsel %vm84, %v3367, 0.0
    %3370 = vadd.xlane.f32.xlu0 %v3369
    %v3371 = vpop.xlane.xlu0 %3370
    %v3372 = vsel %vm84, %v3368, 0.0
    %3373 = vadd.xlane.f32.xlu0 %v3372
    %v3374 = vpop.xlane.xlu0 %3373
    %v3375 = vmul.f32 %v3363, 0.03125
    %v3376 = vmul.f32 %v3366, 0.03125
    %v3377 = vmul.f32 %v3371, 0.03125
    %v3378 = vmul.f32 %v3374, 0.03125
    %v3379 = vmul.f32 %v3375, %v3375
    %v3380 = vmul.f32 %v3376, %v3376
    %v3381 = vsub.f32 %v3377, %v3379
    %v3382 = vsub.f32 %v3378, %v3380
    %v3383 = vmax.f32 %v3381, 0.0
    %v3384 = vmax.f32 %v3382, 0.0
    %v3385 = vsub.f32 %v3357, %v3375
    %v3386 = vsub.f32 %v3358, %v3376
    %v3387 = vadd.f32 %v3383, 1e-05
    %v3388 = vadd.f32 %v3384, 1e-05
    %v3389 = vrsqrt.pop %v3387
    %v3390 = vrsqrt.pop %v3388
    %v3391 = vmul.f32 %v3385, %v3389
    %v3392 = vmul.f32 %v3386, %v3390
    %v3394 = vlaneseq
    %v3395 = vshrl.u32 %v3394, 7
    %v3396 = vsub.s32 0, %v3395
    %v3397 = vrot.slane %v3359, %v3396
    %v3399 = vmul.f32 %v3391, %v3397
    %v3400 = vmul.f32 %v3392, %v3397
    %v3402 = vlaneseq
    %v3403 = vshrl.u32 %v3402, 7
    %v3404 = vsub.s32 0, %v3403
    %v3405 = vrot.slane %v3360, %v3404
    %v3407 = vadd.f32 %v3399, %v3405
    %v3408 = vadd.f32 %v3400, %v3405
    %v3409 = vld [vmem:[%s3] sm:$0x3]
    %v3411 = vsel %vm616, %v3409, 0
    %3413 = vmatprep.subr.mxu0 0.0
    %3414 = vmatpush1.msra.mxu0 %v3407
    %3415 = vmatprep.subr.mxu0 0.0
    %3416 = vmatpush1.msra.mxu0 %v3408
    %3417 = vmatprep.subr.mxu0 0.0
    %3418 = vmatpush1.msra.mxu0 0.0
    %3419 = vmatprep.subr.mxu0 0.0
    %3420 = vmatpush1.msra.mxu0 0.0
    %3421 = vmatprep.subr.mxu0 0.0
    %3422 = vmatpush1.msra.mxu0 0.0
    %3423 = vmatprep.subr.mxu0 0.0
    %3424 = vmatpush1.msra.mxu0 0.0
    %3425 = vmatprep.subr.mxu0 0.0
    %3426 = vmatpush1.msra.mxu0 0.0
    %3427 = vmatprep.subr.mxu0 0.0
    %3428 = vmatpush1.msra.mxu0 0.0
    %3429 = vmatprep.subr.mxu0 0.0
    %3430 = vmatpush1.msra.mxu0 0.0
    %3431 = vmatprep.subr.mxu0 0.0
    %3432 = vmatpush1.msra.mxu0 0.0
    %3433 = vmatprep.subr.mxu0 0.0
    %3434 = vmatpush1.msra.mxu0 0.0
    %3435 = vmatprep.subr.mxu0 0.0
    %3436 = vmatpush1.msra.mxu0 0.0
    %3437 = vmatprep.subr.mxu0 0.0
    %3438 = vmatpush1.msra.mxu0 0.0
    %3439 = vmatprep.subr.mxu0 0.0
    %3440 = vmatpush1.msra.mxu0 0.0
    %3441 = vmatprep.subr.mxu0 0.0
    %3442 = vmatpush1.msra.mxu0 0.0
    %3443 = vmatprep.subr.mxu0 0.0
    %3444 = vmatpush1.msra.mxu0 0.0
    %3445 = vmatprep.subr.mxu0 0.0
    %3446 = vmatpush1.msra.mxu0 0.0
    %3447 = vmatprep.subr.mxu0 0.0
    %3448 = vmatpush1.msra.mxu0 0.0
    %3449 = vmatprep.subr.mxu0 0.0
    %3450 = vmatpush1.msra.mxu0 0.0
    %3451 = vmatprep.subr.mxu0 0.0
    %3452 = vmatpush1.msra.mxu0 0.0
    %3453 = vmatprep.subr.mxu0 0.0
    %3454 = vmatpush1.msra.mxu0 0.0
    %3455 = vmatprep.subr.mxu0 0.0
    %3456 = vmatpush1.msra.mxu0 0.0
    %3457 = vmatprep.subr.mxu0 0.0
    %3458 = vmatpush1.msra.mxu0 0.0
    %3459 = vmatprep.subr.mxu0 0.0
    %3460 = vmatpush1.msra.mxu0 0.0
    %3461 = vmatprep.subr.mxu0 0.0
    %3462 = vmatpush1.msra.mxu0 0.0
    %3463 = vmatprep.subr.mxu0 0.0
    %3464 = vmatpush1.msra.mxu0 0.0
    %3465 = vmatprep.subr.mxu0 0.0
    %3466 = vmatpush1.msra.mxu0 0.0
    %3467 = vmatprep.subr.mxu0 0.0
    %3468 = vmatpush1.msra.mxu0 0.0
    %3469 = vmatprep.subr.mxu0 0.0
    %3470 = vmatpush1.msra.mxu0 0.0
    %3471 = vmatprep.subr.mxu0 0.0
    %3472 = vmatpush1.msra.mxu0 0.0
    %3473 = vmatprep.subr.mxu0 0.0
    %3474 = vmatpush1.msra.mxu0 0.0
    %3475 = vmatprep.subr.mxu0 0.0
    %3476 = vmatpush1.msra.mxu0 0.0
    %3477 = vmatprep.mubr.f32.mxu0 0.0
    %3478 = vmatmul.mubr.f32.gmra.mrb[0].mxu0 %v3411
    %v3479 = vpop.f32.mrb[0].mxu0
    %v3480 = vadd.f32 0.0, %v3479
    %v3481 = vpop.f32.mrb[0].mxu0
    %3482 = vdwg.mxu0
    %v3483 = vld [vmem:[%s19] sm:$0xff]
    %v3484 = vld [vmem:[%s19 + $0x8] sm:$0xff]
    %v3485 = vld [vmem:[%s19 + $0x10] sm:$0xff]
    %v3486 = vld [vmem:[%s19 + $0x18] sm:$0xff]
    %v3488 = vsel %vm84, %v3480, 0
    %3490 = vmatprep.subr.mxu0 0.0
    %3491 = vmatpush1.msra.mxu0 %v3483
    %3492 = vmatprep.subr.mxu0 0.0
    %3493 = vmatpush1.msra.mxu0 %v3484
    %3494 = vmatprep.subr.mxu0 0.0
    %3495 = vmatpush1.msra.mxu0 %v3485
    %3496 = vmatprep.subr.mxu0 0.0
    %3497 = vmatpush1.msra.mxu0 %v3486
    %3498 = vmatprep.subr.mxu0 0.0
    %3499 = vmatpush1.msra.mxu0 0.0
    %3500 = vmatprep.subr.mxu0 0.0
    %3501 = vmatpush1.msra.mxu0 0.0
    %3502 = vmatprep.subr.mxu0 0.0
    %3503 = vmatpush1.msra.mxu0 0.0
    %3504 = vmatprep.subr.mxu0 0.0
    %3505 = vmatpush1.msra.mxu0 0.0
    %3506 = vmatprep.subr.mxu0 0.0
    %3507 = vmatpush1.msra.mxu0 0.0
    %3508 = vmatprep.subr.mxu0 0.0
    %3509 = vmatpush1.msra.mxu0 0.0
    %3510 = vmatprep.subr.mxu0 0.0
    %3511 = vmatpush1.msra.mxu0 0.0
    %3512 = vmatprep.subr.mxu0 0.0
    %3513 = vmatpush1.msra.mxu0 0.0
    %3514 = vmatprep.subr.mxu0 0.0
    %3515 = vmatpush1.msra.mxu0 0.0
    %3516 = vmatprep.subr.mxu0 0.0
    %3517 = vmatpush1.msra.mxu0 0.0
    %3518 = vmatprep.subr.mxu0 0.0
    %3519 = vmatpush1.msra.mxu0 0.0
    %3520 = vmatprep.subr.mxu0 0.0
    %3521 = vmatpush1.msra.mxu0 0.0
    %3522 = vmatprep.subr.mxu0 0.0
    %3523 = vmatpush1.msra.mxu0 0.0
    %3524 = vmatprep.subr.mxu0 0.0
    %3525 = vmatpush1.msra.mxu0 0.0
    %3526 = vmatprep.subr.mxu0 0.0
    %3527 = vmatpush1.msra.mxu0 0.0
    %3528 = vmatprep.subr.mxu0 0.0
    %3529 = vmatpush1.msra.mxu0 0.0
    %3530 = vmatprep.subr.mxu0 0.0
    %3531 = vmatpush1.msra.mxu0 0.0
    %3532 = vmatprep.subr.mxu0 0.0
    %3533 = vmatpush1.msra.mxu0 0.0
    %3534 = vmatprep.subr.mxu0 0.0
    %3535 = vmatpush1.msra.mxu0 0.0
    %3536 = vmatprep.subr.mxu0 0.0
    %3537 = vmatpush1.msra.mxu0 0.0
    %3538 = vmatprep.subr.mxu0 0.0
    %3539 = vmatpush1.msra.mxu0 0.0
    %3540 = vmatprep.subr.mxu0 0.0
    %3541 = vmatpush1.msra.mxu0 0.0
    %3542 = vmatprep.subr.mxu0 0.0
    %3543 = vmatpush1.msra.mxu0 0.0
    %3544 = vmatprep.subr.mxu0 0.0
    %3545 = vmatpush1.msra.mxu0 0.0
    %3546 = vmatprep.subr.mxu0 0.0
    %3547 = vmatpush1.msra.mxu0 0.0
    %3548 = vmatprep.subr.mxu0 0.0
    %3549 = vmatpush1.msra.mxu0 0.0
    %3550 = vmatprep.subr.mxu0 0.0
    %3551 = vmatpush1.msra.mxu0 0.0
    %3552 = vmatprep.subr.mxu0 0.0
    %3553 = vmatpush1.msra.mxu0 0.0
    %3554 = vmatprep.mubr.f32.mxu0 0.0
    %3555 = vmatmul.mubr.f32.gmra.mrb[0].mxu0 %v3488
    %v3556 = vpop.f32.mrb[0].mxu0
    %v3557 = vadd.f32 0.0, %v3556
    %v3558 = vpop.f32.mrb[0].mxu0
    %3559 = vdwg.mxu0
    %vm3560 = vcmask 254976
    %3561 = vst.msk [vmem:[#allocation2] sm:$0x3] %vm3560, %v3557
    // Predicated region
    $region82: #{text_encoder_forward.1} parent=1 // pred_check
      _
    $region83: #{text_encoder_forward.1} parent=1 // pred_check_branch
      %3563 = sbr.rel (0) target = $region85
    $region84: #{text_encoder_forward.1} parent=1 // pred_region
      %s3565 = ssub.s32 32, 32
      %3566 = vsyncadd [#allocation3], %s3565
      %s3568 = sshll.u32 [#allocation2], 4
      %s3569 = int_to_ptr.vmem [resolvable:$true] %s3568
      %3571 = dma.vmem_to_hbm [thread:$0]  %s3569, 32, %s20, [#allocation3]
    $region85: #{text_encoder_forward.1} parent=1 // pred_fallthru
      _
    // Predicated region
    $region86: #{text_encoder_forward.1} parent=1 // pred_check
      _
    $region87: #{text_encoder_forward.1} parent=1 // pred_check_branch
      %3573 = sbr.rel (0) target = $region89
    $region88: #{text_encoder_forward.1} parent=1 // pred_region
      %3574 = dma.done [#allocation3], 32
    $region89: #{text_encoder_forward.1} parent=1 // pred_fallthru
      _
    %3575 = vsyncpa [#allocation3], 1

</llo_original>
